<compile_context>
chip_gen: v7x
topology: tpu7x:2x2x1
jax: 0.10.0
libtpu: 0.0.40
codegen_flags: <defaults>
</compile_context>

<pallas_src>
import jax
import jax.numpy as jnp
from jax.experimental import pallas as pl
from jax.experimental.pallas import tpu as pltpu

NEG_SLOPE = 0.01  # torch.nn.functional.leaky_relu default


def _pick_nb(batch, nb_max=8):
    """Largest divisor of `batch` <= nb_max that keeps >= 2 grid steps (v7x)."""
    best = 1
    for nb in range(1, min(batch, nb_max) + 1):
        if batch % nb == 0 and (batch == 1 or batch // nb >= 2):
            best = nb
    return best
    # TODO(synk): handle non-divisor batch remainders via a padded final block.


# ---------------------------------------------------------------------------
# Fused Pallas forward
# ---------------------------------------------------------------------------
def decoder_up_forward(feats_ncl, params, *, nb_max=8):
    """feats_ncl: [B, 4d, L] (PyTorch NCL). Requires L == 4d so the final conv
    length (L + 8) matches the Linear's in_features (4d + 8)."""
    B, C0, L0 = feats_ncl.shape
    (w1, b1), (w2, b2), (w3, b3), (w4, b4) = params["convs"]
    wm, bm = params["mlp_w"], params["mlp_b"]
    H = wm.shape[0]
    C1, C2, C3, C4 = w1.shape[2], w2.shape[2], w3.shape[2], w4.shape[2]
    Lf = L0 + 8
    assert wm.shape[1] == Lf, "Linear in_features must equal L + 8"

    nb = _pick_nb(B, nb_max)
    S = ((L0 + 10 + 15) // 16) * 16      # per-element row slot (multiple of 16)
    M = nb * S - 2                       # rows produced by every conv layer

    # ---- wrapper-side input staging (tiny, one-off XLA ops) ---------------
    # NCL -> NLC, then give every element a fixed S-row slot:
    #   [2 zero rows | L0 data rows | zero rows], stacked along sublanes.
    x_nlc = jnp.transpose(feats_ncl, (0, 2, 1)).astype(jnp.float32)
    x_stack = jnp.pad(x_nlc, ((0, 0), (2, S - 2 - L0), (0, 0))).reshape(B * S, C0)

    # Per-layer row-validity masks ((r mod S) < Lout): zero the phantom rows
    # so they land as the next layer's trailing / inter-element zero padding.
    r_in_slot = jnp.arange(M, dtype=jnp.int32) % S
    masks = jnp.stack(
        [(r_in_slot < (L0 + 2 + 2 * l)).astype(jnp.float32) for l in range(3)]
    )[..., None]                                               # (3, M, 1)

    # ---- fused kernel -------------------------------------------------------
    def kernel(x_ref, m_ref,
               w1_ref, b1_ref, w2_ref, b2_ref, w3_ref, b3_ref, w4_ref, b4_ref,
               wm_ref, bm_ref, o_ref, s2_ref, s3_ref, s4_ref):

        def conv_taps(src_ref, w_ref, b_ref):
            # ConvTranspose1d(k=3, stride=1) over the stacked padded rows:
            # 3 shifted sublane slices, each one MXU matmul (bf16 in, f32 acc).
            acc = jnp.dot(src_ref[0:M, :].astype(jnp.bfloat16), w_ref[0],
                          preferred_element_type=jnp.float32)
            acc = acc + jnp.dot(src_ref[1:1 + M, :].astype(jnp.bfloat16), w_ref[1],
                                preferred_element_type=jnp.float32)
            acc = acc + jnp.dot(src_ref[2:2 + M, :].astype(jnp.bfloat16), w_ref[2],
                                preferred_element_type=jnp.float32)
            return acc + b_ref[...]                            # (M, Cout) f32

        def pass_to_next(y, layer_idx, dst_ref):
            # Mask phantom rows to zero, store shifted past the 2 leading pad
            # rows.  Rows 0:2 are re-zeroed every step so the kernel stays
            # correct when the "parallel" grid axis is sharded across cores.
            y = y * m_ref[layer_idx]
            dst_ref[0:2, :] = jnp.zeros((2, dst_ref.shape[1]), dst_ref.dtype)
            dst_ref[2:2 + M, :] = y.astype(dst_ref.dtype)

        y = conv_taps(x_ref, w1_ref, b1_ref)         # (M, 8d)
        pass_to_next(y, 0, s2_ref)
        y = conv_taps(s2_ref, w2_ref, b2_ref)        # (M, 16d)
        pass_to_next(y, 1, s3_ref)
        y = conv_taps(s3_ref, w3_ref, b3_ref)        # (M, 32d)
        pass_to_next(y, 2, s4_ref)
        y = conv_taps(s4_ref, w4_ref, b4_ref)        # (M, 64d)

        # Final Linear over the length axis, computed transposed so the 64d
        # channel axis stays lane-dense:  z[h, c] = sum_l W[h, l] * x[l, c].
        y_b = y.astype(jnp.bfloat16)
        for e in range(nb):                           # tiny per-element matmuls
            xe = y_b[e * S:e * S + Lf, :]             # (Lf, 64d), aligned slice
            z = jnp.dot(wm_ref[...], xe, preferred_element_type=jnp.float32)
            z = z + bm_ref[...]
            z = jnp.where(z > 0, z, NEG_SLOPE * z)    # leaky_relu
            o_ref[e] = z.astype(o_ref.dtype)

    def const(shape):  # weights/masks resident across all grid steps
        return pl.BlockSpec(shape, lambda b: (0,) * len(shape))

    out_hc = pl.pallas_call(
        kernel,
        out_shape=jax.ShapeDtypeStruct((B, H, C4), jnp.float32),
        grid=(B // nb,),
        in_specs=[
            pl.BlockSpec((nb * S, C0), lambda b: (b, 0)),
            const(masks.shape),
            const(w1.shape), const(b1.shape),
            const(w2.shape), const(b2.shape),
            const(w3.shape), const(b3.shape),
            const(w4.shape), const(b4.shape),
            const(wm.shape), const(bm.shape),
        ],
        out_specs=pl.BlockSpec((nb, H, C4), lambda b: (b, 0, 0)),
        scratch_shapes=[
            pltpu.VMEM((nb * S, C1), jnp.float32),   # stacked padded input, layer 2
            pltpu.VMEM((nb * S, C2), jnp.float32),   # layer 3
            pltpu.VMEM((nb * S, C3), jnp.float32),   # layer 4
        ],
        compiler_params=pltpu.CompilerParams(dimension_semantics=("parallel",)),
    )(x_stack, masks, w1, b1, w2, b2, w3, b3, w4, b4, wm, bm)

    # tiny [B, H, C] -> [B, C, H] permute to match PyTorch's [B, 64d, 2d]
    return jnp.transpose(out_hc, (0, 2, 1))


# ---------------------------------------------------------------------------
# Deterministic parameter init (PyTorch-native layouts) + kernel repacking
# ---------------------------------------------------------------------------
def init_raw_params(key, init_dim):
    d = init_dim
    chans = [4 * d, 8 * d, 16 * d, 32 * d, 64 * d]
    keys = jax.random.split(key, 10)
    ki = 0
    raw = {"convs": []}
    for i in range(4):
        cin, cout = chans[i], chans[i + 1]
        # ConvTranspose1d.weight layout: (in_channels, out_channels, K)
        w = 0.05 * jax.random.normal(keys[ki], (cin, cout, 3), jnp.float32); ki += 1
        b = 0.05 * jax.random.normal(keys[ki], (cout,), jnp.float32); ki += 1
        raw["convs"].append((w, b))
    lin_in, lin_out = 4 * d + 8, 2 * d
    raw["lin_w"] = 0.05 * jax.random.normal(keys[ki], (lin_out, lin_in), jnp.float32); ki += 1
    raw["lin_b"] = 0.05 * jax.random.normal(keys[ki], (lin_out,), jnp.float32)
    return raw


def pack_params(raw):
    packed = {"convs": []}
    for (w, b) in raw["convs"]:
        # ConvTranspose1d(stride=1) == correlation of zero-padded input with
        # flipped taps; store as (3, Cin, Cout) bf16 (MXU-native operand dtype).
        wf = jnp.transpose(w[:, :, ::-1], (2, 0, 1)).astype(jnp.bfloat16)
        packed["convs"].append((wf, b.reshape(1, -1).astype(jnp.float32)))
    packed["mlp_w"] = raw["lin_w"].astype(jnp.bfloat16)                 # (H, Lf)
    packed["mlp_b"] = raw["lin_b"].reshape(-1, 1).astype(jnp.float32)   # (H, 1)
    return packed


# ---------------------------------------------------------------------------
# Pure-JAX f32 reference built from the raw PyTorch-layout weights
# ---------------------------------------------------------------------------
def reference_forward(feats_ncl, raw):
    hp = jax.lax.Precision.HIGHEST
    x = feats_ncl.astype(jnp.float32)
    for (w, b) in raw["convs"]:
        B, Cin, L = x.shape
        Cout, K = w.shape[1], w.shape[2]
        y = jnp.zeros((B, Cout, L + K - 1), jnp.float32)
        for k in range(K):  # definition: y[:, :, i + k] += x[:, :, i] * w[:, :, k]
            y = y.at[:, :, k:k + L].add(
                jnp.einsum("bcl,co->bol", x, w[:, :, k], precision=hp))
        x = y + b[None, :, None]
    y = jnp.einsum("bcl,hl->bch", x, raw["lin_w"], precision=hp) + raw["lin_b"][None, None, :]
    return jnp.where(y > 0, y, NEG_SLOPE * y)


if __name__ == "__main__":
    init_dim = 4               # cfg.backbone.init_dim
    B = 8                      # exercises batch-blocking: 4 elems/step, 2 grid steps
    L = 4 * init_dim           # length must be 4d so L + 8 == Linear in_features

    key = jax.random.PRNGKey(0)
    pkey, xkey = jax.random.split(key)
    raw = init_raw_params(pkey, init_dim)
    params = pack_params(raw)
    feats = jax.random.normal(xkey, (B, 4 * init_dim, L), jnp.float32)   # PyTorch NCL

    fwd = jax.jit(decoder_up_forward)
    out = jax.block_until_ready(fwd(feats, params))

    ref = reference_forward(feats, raw)
    assert out.shape == (B, 64 * init_dim, 2 * init_dim), out.shape
    # bf16 MXU operands (f32 accumulate) vs. the strict-f32 reference; observed
    # error is ~1e-3 at these magnitudes, threshold leaves a wide margin.
    err = float(jnp.max(jnp.abs(out - ref)))
    assert err < 2e-2, err

    print("KERNEL_OK")
</pallas_src>

<mosaic_0001>
module attributes {stable_mosaic.version = 11 : i64} {
  func.func @kernel(%arg0: i32, %arg1: memref<128x16xf32, #tpu.memory_space<vmem>>, %arg2: memref<3x126x1xf32, #tpu.memory_space<vmem>>, %arg3: memref<3x16x32xbf16, #tpu.memory_space<vmem>>, %arg4: memref<1x32xf32, #tpu.memory_space<vmem>>, %arg5: memref<3x32x64xbf16, #tpu.memory_space<vmem>>, %arg6: memref<1x64xf32, #tpu.memory_space<vmem>>, %arg7: memref<3x64x128xbf16, #tpu.memory_space<vmem>>, %arg8: memref<1x128xf32, #tpu.memory_space<vmem>>, %arg9: memref<3x128x256xbf16, #tpu.memory_space<vmem>>, %arg10: memref<1x256xf32, #tpu.memory_space<vmem>>, %arg11: memref<8x24xbf16, #tpu.memory_space<vmem>>, %arg12: memref<8x1xf32, #tpu.memory_space<vmem>>, %arg13: memref<4x8x256xf32, #tpu.memory_space<vmem>>, %arg14: memref<128x32xf32, #tpu.memory_space<vmem>>, %arg15: memref<128x64xf32, #tpu.memory_space<vmem>>, %arg16: memref<128x128xf32, #tpu.memory_space<vmem>>) attributes {dimension_semantics = [#tpu.dimension_semantics<parallel>], iteration_bounds = array<i64: 2>, scalar_prefetch = 0 : i64, scratch_operands = 3 : i64, tpu.core_type = #tpu.core_type<tc>, window_params = [{transform_indices = @transform_0, window_bounds = array<i64: 128, 16>}, {pipeline_mode = #tpu.pipeline_mode<synchronous>, transform_indices = @transform_1, window_bounds = array<i64: 3, 126, 1>}, {pipeline_mode = #tpu.pipeline_mode<synchronous>, transform_indices = @transform_2, window_bounds = array<i64: 3, 16, 32>}, {pipeline_mode = #tpu.pipeline_mode<synchronous>, transform_indices = @transform_3, window_bounds = array<i64: 1, 32>}, {pipeline_mode = #tpu.pipeline_mode<synchronous>, transform_indices = @transform_4, window_bounds = array<i64: 3, 32, 64>}, {pipeline_mode = #tpu.pipeline_mode<synchronous>, transform_indices = @transform_5, window_bounds = array<i64: 1, 64>}, {pipeline_mode = #tpu.pipeline_mode<synchronous>, transform_indices = @transform_6, window_bounds = array<i64: 3, 64, 128>}, {pipeline_mode = #tpu.pipeline_mode<synchronous>, transform_indices = @transform_7, window_bounds = array<i64: 1, 128>}, {pipeline_mode = #tpu.pipeline_mode<synchronous>, transform_indices = @transform_8, window_bounds = array<i64: 3, 128, 256>}, {pipeline_mode = #tpu.pipeline_mode<synchronous>, transform_indices = @transform_9, window_bounds = array<i64: 1, 256>}, {pipeline_mode = #tpu.pipeline_mode<synchronous>, transform_indices = @transform_10, window_bounds = array<i64: 8, 24>}, {pipeline_mode = #tpu.pipeline_mode<synchronous>, transform_indices = @transform_11, window_bounds = array<i64: 8, 1>}, {transform_indices = @transform_12, window_bounds = array<i64: 4, 8, 256>}]} {
    %c0 = arith.constant 0 : index
    %c0_0 = arith.constant 0 : index
    %0 = vector.load %arg1[%c0, %c0_0] : memref<128x16xf32, #tpu.memory_space<vmem>>, vector<126x16xf32>
    %1 = arith.truncf %0 : vector<126x16xf32> to vector<126x16xbf16>
    %c0_1 = arith.constant 0 : index
    %c0_2 = arith.constant 0 : index
    %c0_3 = arith.constant 0 : index
    %2 = vector.load %arg3[%c0_1, %c0_2, %c0_3] : memref<3x16x32xbf16, #tpu.memory_space<vmem>>, vector<1x16x32xbf16>
    %3 = vector.shape_cast %2 : vector<1x16x32xbf16> to vector<16x32xbf16>
    %cst = arith.constant dense<0.000000e+00> : vector<126x32xf32>
    %4 = tpu.matmul %1, %3, %cst {dimension_numbers = #tpu.dot_dimension_numbers<[1], [0], [0], [1], [0, 0, 1, 1], [], []>} : vector<126x16xbf16>, vector<16x32xbf16>, vector<126x32xf32> -> vector<126x32xf32>
    %c1 = arith.constant 1 : index
    %c0_4 = arith.constant 0 : index
    %5 = vector.load %arg1[%c1, %c0_4] : memref<128x16xf32, #tpu.memory_space<vmem>>, vector<126x16xf32>
    %6 = arith.truncf %5 : vector<126x16xf32> to vector<126x16xbf16>
    %c1_5 = arith.constant 1 : index
    %c0_6 = arith.constant 0 : index
    %c0_7 = arith.constant 0 : index
    %7 = vector.load %arg3[%c1_5, %c0_6, %c0_7] : memref<3x16x32xbf16, #tpu.memory_space<vmem>>, vector<1x16x32xbf16>
    %8 = vector.shape_cast %7 : vector<1x16x32xbf16> to vector<16x32xbf16>
    %cst_8 = arith.constant dense<0.000000e+00> : vector<126x32xf32>
    %9 = tpu.matmul %6, %8, %cst_8 {dimension_numbers = #tpu.dot_dimension_numbers<[1], [0], [0], [1], [0, 0, 1, 1], [], []>} : vector<126x16xbf16>, vector<16x32xbf16>, vector<126x32xf32> -> vector<126x32xf32>
    %10 = arith.addf %4, %9 : vector<126x32xf32>
    %c2 = arith.constant 2 : index
    %c0_9 = arith.constant 0 : index
    %11 = vector.load %arg1[%c2, %c0_9] : memref<128x16xf32, #tpu.memory_space<vmem>>, vector<126x16xf32>
    %12 = arith.truncf %11 : vector<126x16xf32> to vector<126x16xbf16>
    %c2_10 = arith.constant 2 : index
    %c0_11 = arith.constant 0 : index
    %c0_12 = arith.constant 0 : index
    %13 = vector.load %arg3[%c2_10, %c0_11, %c0_12] : memref<3x16x32xbf16, #tpu.memory_space<vmem>>, vector<1x16x32xbf16>
    %14 = vector.shape_cast %13 : vector<1x16x32xbf16> to vector<16x32xbf16>
    %cst_13 = arith.constant dense<0.000000e+00> : vector<126x32xf32>
    %15 = tpu.matmul %12, %14, %cst_13 {dimension_numbers = #tpu.dot_dimension_numbers<[1], [0], [0], [1], [0, 0, 1, 1], [], []>} : vector<126x16xbf16>, vector<16x32xbf16>, vector<126x32xf32> -> vector<126x32xf32>
    %16 = arith.addf %10, %15 : vector<126x32xf32>
    %c0_14 = arith.constant 0 : index
    %c0_15 = arith.constant 0 : index
    %17 = vector.load %arg4[%c0_14, %c0_15] : memref<1x32xf32, #tpu.memory_space<vmem>>, vector<1x32xf32>
    %18 = vector.broadcast %17 : vector<1x32xf32> to vector<126x32xf32>
    %19 = arith.addf %16, %18 : vector<126x32xf32>
    %c0_16 = arith.constant 0 : index
    %c0_17 = arith.constant 0 : index
    %c0_18 = arith.constant 0 : index
    %20 = vector.load %arg2[%c0_16, %c0_17, %c0_18] : memref<3x126x1xf32, #tpu.memory_space<vmem>>, vector<1x126x1xf32>
    %21 = vector.shape_cast %20 : vector<1x126x1xf32> to vector<126x1xf32>
    %22 = vector.broadcast %21 : vector<126x1xf32> to vector<126x32xf32>
    %23 = arith.mulf %19, %22 : vector<126x32xf32>
    %cst_19 = arith.constant 0.000000e+00 : f32
    %24 = vector.broadcast %cst_19 : f32 to vector<2x32xf32>
    %c0_20 = arith.constant 0 : index
    %c0_21 = arith.constant 0 : index
    %25 = vector.load %arg14[%c0_20, %c0_21] : memref<128x32xf32, #tpu.memory_space<vmem>>, vector<2x32xf32>
    tpu.vector_store %arg14[%c0_20, %c0_21], %24 {strides = array<i32>} : memref<128x32xf32, #tpu.memory_space<vmem>>, vector<2x32xf32>,
    %c2_22 = arith.constant 2 : index
    %c0_23 = arith.constant 0 : index
    %26 = vector.load %arg14[%c2_22, %c0_23] : memref<128x32xf32, #tpu.memory_space<vmem>>, vector<126x32xf32>
    tpu.vector_store %arg14[%c2_22, %c0_23], %23 {strides = array<i32>} : memref<128x32xf32, #tpu.memory_space<vmem>>, vector<126x32xf32>,
    %c0_24 = arith.constant 0 : index
    %c0_25 = arith.constant 0 : index
    %27 = vector.load %arg14[%c0_24, %c0_25] : memref<128x32xf32, #tpu.memory_space<vmem>>, vector<126x32xf32>
    %28 = arith.truncf %27 : vector<126x32xf32> to vector<126x32xbf16>
    %c0_26 = arith.constant 0 : index
    %c0_27 = arith.constant 0 : index
    %c0_28 = arith.constant 0 : index
    %29 = vector.load %arg5[%c0_26, %c0_27, %c0_28] : memref<3x32x64xbf16, #tpu.memory_space<vmem>>, vector<1x32x64xbf16>
    %30 = vector.shape_cast %29 : vector<1x32x64xbf16> to vector<32x64xbf16>
    %cst_29 = arith.constant dense<0.000000e+00> : vector<126x64xf32>
    %31 = tpu.matmul %28, %30, %cst_29 {dimension_numbers = #tpu.dot_dimension_numbers<[1], [0], [0], [1], [0, 0, 1, 1], [], []>} : vector<126x32xbf16>, vector<32x64xbf16>, vector<126x64xf32> -> vector<126x64xf32>
    %c1_30 = arith.constant 1 : index
    %c0_31 = arith.constant 0 : index
    %32 = vector.load %arg14[%c1_30, %c0_31] : memref<128x32xf32, #tpu.memory_space<vmem>>, vector<126x32xf32>
    %33 = arith.truncf %32 : vector<126x32xf32> to vector<126x32xbf16>
    %c1_32 = arith.constant 1 : index
    %c0_33 = arith.constant 0 : index
    %c0_34 = arith.constant 0 : index
    %34 = vector.load %arg5[%c1_32, %c0_33, %c0_34] : memref<3x32x64xbf16, #tpu.memory_space<vmem>>, vector<1x32x64xbf16>
    %35 = vector.shape_cast %34 : vector<1x32x64xbf16> to vector<32x64xbf16>
    %cst_35 = arith.constant dense<0.000000e+00> : vector<126x64xf32>
    %36 = tpu.matmul %33, %35, %cst_35 {dimension_numbers = #tpu.dot_dimension_numbers<[1], [0], [0], [1], [0, 0, 1, 1], [], []>} : vector<126x32xbf16>, vector<32x64xbf16>, vector<126x64xf32> -> vector<126x64xf32>
    %37 = arith.addf %31, %36 : vector<126x64xf32>
    %c2_36 = arith.constant 2 : index
    %c0_37 = arith.constant 0 : index
    %38 = vector.load %arg14[%c2_36, %c0_37] : memref<128x32xf32, #tpu.memory_space<vmem>>, vector<126x32xf32>
    %39 = arith.truncf %38 : vector<126x32xf32> to vector<126x32xbf16>
    %c2_38 = arith.constant 2 : index
    %c0_39 = arith.constant 0 : index
    %c0_40 = arith.constant 0 : index
    %40 = vector.load %arg5[%c2_38, %c0_39, %c0_40] : memref<3x32x64xbf16, #tpu.memory_space<vmem>>, vector<1x32x64xbf16>
    %41 = vector.shape_cast %40 : vector<1x32x64xbf16> to vector<32x64xbf16>
    %cst_41 = arith.constant dense<0.000000e+00> : vector<126x64xf32>
    %42 = tpu.matmul %39, %41, %cst_41 {dimension_numbers = #tpu.dot_dimension_numbers<[1], [0], [0], [1], [0, 0, 1, 1], [], []>} : vector<126x32xbf16>, vector<32x64xbf16>, vector<126x64xf32> -> vector<126x64xf32>
    %43 = arith.addf %37, %42 : vector<126x64xf32>
    %c0_42 = arith.constant 0 : index
    %c0_43 = arith.constant 0 : index
    %44 = vector.load %arg6[%c0_42, %c0_43] : memref<1x64xf32, #tpu.memory_space<vmem>>, vector<1x64xf32>
    %45 = vector.broadcast %44 : vector<1x64xf32> to vector<126x64xf32>
    %46 = arith.addf %43, %45 : vector<126x64xf32>
    %c1_44 = arith.constant 1 : index
    %c0_45 = arith.constant 0 : index
    %c0_46 = arith.constant 0 : index
    %47 = vector.load %arg2[%c1_44, %c0_45, %c0_46] : memref<3x126x1xf32, #tpu.memory_space<vmem>>, vector<1x126x1xf32>
    %48 = vector.shape_cast %47 : vector<1x126x1xf32> to vector<126x1xf32>
    %49 = vector.broadcast %48 : vector<126x1xf32> to vector<126x64xf32>
    %50 = arith.mulf %46, %49 : vector<126x64xf32>
    %cst_47 = arith.constant 0.000000e+00 : f32
    %51 = vector.broadcast %cst_47 : f32 to vector<2x64xf32>
    %c0_48 = arith.constant 0 : index
    %c0_49 = arith.constant 0 : index
    %52 = vector.load %arg15[%c0_48, %c0_49] : memref<128x64xf32, #tpu.memory_space<vmem>>, vector<2x64xf32>
    tpu.vector_store %arg15[%c0_48, %c0_49], %51 {strides = array<i32>} : memref<128x64xf32, #tpu.memory_space<vmem>>, vector<2x64xf32>,
    %c2_50 = arith.constant 2 : index
    %c0_51 = arith.constant 0 : index
    %53 = vector.load %arg15[%c2_50, %c0_51] : memref<128x64xf32, #tpu.memory_space<vmem>>, vector<126x64xf32>
    tpu.vector_store %arg15[%c2_50, %c0_51], %50 {strides = array<i32>} : memref<128x64xf32, #tpu.memory_space<vmem>>, vector<126x64xf32>,
    %c0_52 = arith.constant 0 : index
    %c0_53 = arith.constant 0 : index
    %54 = vector.load %arg15[%c0_52, %c0_53] : memref<128x64xf32, #tpu.memory_space<vmem>>, vector<126x64xf32>
    %55 = arith.truncf %54 : vector<126x64xf32> to vector<126x64xbf16>
    %c0_54 = arith.constant 0 : index
    %c0_55 = arith.constant 0 : index
    %c0_56 = arith.constant 0 : index
    %56 = vector.load %arg7[%c0_54, %c0_55, %c0_56] : memref<3x64x128xbf16, #tpu.memory_space<vmem>>, vector<1x64x128xbf16>
    %57 = vector.shape_cast %56 : vector<1x64x128xbf16> to vector<64x128xbf16>
    %cst_57 = arith.constant dense<0.000000e+00> : vector<126x128xf32>
    %58 = tpu.matmul %55, %57, %cst_57 {dimension_numbers = #tpu.dot_dimension_numbers<[1], [0], [0], [1], [0, 0, 1, 1], [], []>} : vector<126x64xbf16>, vector<64x128xbf16>, vector<126x128xf32> -> vector<126x128xf32>
    %c1_58 = arith.constant 1 : index
    %c0_59 = arith.constant 0 : index
    %59 = vector.load %arg15[%c1_58, %c0_59] : memref<128x64xf32, #tpu.memory_space<vmem>>, vector<126x64xf32>
    %60 = arith.truncf %59 : vector<126x64xf32> to vector<126x64xbf16>
    %c1_60 = arith.constant 1 : index
    %c0_61 = arith.constant 0 : index
    %c0_62 = arith.constant 0 : index
    %61 = vector.load %arg7[%c1_60, %c0_61, %c0_62] : memref<3x64x128xbf16, #tpu.memory_space<vmem>>, vector<1x64x128xbf16>
    %62 = vector.shape_cast %61 : vector<1x64x128xbf16> to vector<64x128xbf16>
    %cst_63 = arith.constant dense<0.000000e+00> : vector<126x128xf32>
    %63 = tpu.matmul %60, %62, %cst_63 {dimension_numbers = #tpu.dot_dimension_numbers<[1], [0], [0], [1], [0, 0, 1, 1], [], []>} : vector<126x64xbf16>, vector<64x128xbf16>, vector<126x128xf32> -> vector<126x128xf32>
    %64 = arith.addf %58, %63 : vector<126x128xf32>
    %c2_64 = arith.constant 2 : index
    %c0_65 = arith.constant 0 : index
    %65 = vector.load %arg15[%c2_64, %c0_65] : memref<128x64xf32, #tpu.memory_space<vmem>>, vector<126x64xf32>
    %66 = arith.truncf %65 : vector<126x64xf32> to vector<126x64xbf16>
    %c2_66 = arith.constant 2 : index
    %c0_67 = arith.constant 0 : index
    %c0_68 = arith.constant 0 : index
    %67 = vector.load %arg7[%c2_66, %c0_67, %c0_68] : memref<3x64x128xbf16, #tpu.memory_space<vmem>>, vector<1x64x128xbf16>
    %68 = vector.shape_cast %67 : vector<1x64x128xbf16> to vector<64x128xbf16>
    %cst_69 = arith.constant dense<0.000000e+00> : vector<126x128xf32>
    %69 = tpu.matmul %66, %68, %cst_69 {dimension_numbers = #tpu.dot_dimension_numbers<[1], [0], [0], [1], [0, 0, 1, 1], [], []>} : vector<126x64xbf16>, vector<64x128xbf16>, vector<126x128xf32> -> vector<126x128xf32>
    %70 = arith.addf %64, %69 : vector<126x128xf32>
    %c0_70 = arith.constant 0 : index
    %c0_71 = arith.constant 0 : index
    %71 = vector.load %arg8[%c0_70, %c0_71] : memref<1x128xf32, #tpu.memory_space<vmem>>, vector<1x128xf32>
    %72 = vector.broadcast %71 : vector<1x128xf32> to vector<126x128xf32>
    %73 = arith.addf %70, %72 : vector<126x128xf32>
    %c2_72 = arith.constant 2 : index
    %c0_73 = arith.constant 0 : index
    %c0_74 = arith.constant 0 : index
    %74 = vector.load %arg2[%c2_72, %c0_73, %c0_74] : memref<3x126x1xf32, #tpu.memory_space<vmem>>, vector<1x126x1xf32>
    %75 = vector.shape_cast %74 : vector<1x126x1xf32> to vector<126x1xf32>
    %76 = vector.broadcast %75 : vector<126x1xf32> to vector<126x128xf32>
    %77 = arith.mulf %73, %76 : vector<126x128xf32>
    %cst_75 = arith.constant 0.000000e+00 : f32
    %78 = vector.broadcast %cst_75 : f32 to vector<2x128xf32>
    %c0_76 = arith.constant 0 : index
    %c0_77 = arith.constant 0 : index
    %79 = vector.load %arg16[%c0_76, %c0_77] : memref<128x128xf32, #tpu.memory_space<vmem>>, vector<2x128xf32>
    tpu.vector_store %arg16[%c0_76, %c0_77], %78 {strides = array<i32>} : memref<128x128xf32, #tpu.memory_space<vmem>>, vector<2x128xf32>,
    %c2_78 = arith.constant 2 : index
    %c0_79 = arith.constant 0 : index
    %80 = vector.load %arg16[%c2_78, %c0_79] : memref<128x128xf32, #tpu.memory_space<vmem>>, vector<126x128xf32>
    tpu.vector_store %arg16[%c2_78, %c0_79], %77 {strides = array<i32>} : memref<128x128xf32, #tpu.memory_space<vmem>>, vector<126x128xf32>,
    %c0_80 = arith.constant 0 : index
    %c0_81 = arith.constant 0 : index
    %81 = vector.load %arg16[%c0_80, %c0_81] : memref<128x128xf32, #tpu.memory_space<vmem>>, vector<126x128xf32>
    %82 = arith.truncf %81 : vector<126x128xf32> to vector<126x128xbf16>
    %c0_82 = arith.constant 0 : index
    %c0_83 = arith.constant 0 : index
    %c0_84 = arith.constant 0 : index
    %83 = vector.load %arg9[%c0_82, %c0_83, %c0_84] : memref<3x128x256xbf16, #tpu.memory_space<vmem>>, vector<1x128x256xbf16>
    %84 = vector.shape_cast %83 : vector<1x128x256xbf16> to vector<128x256xbf16>
    %cst_85 = arith.constant dense<0.000000e+00> : vector<126x256xf32>
    %85 = tpu.matmul %82, %84, %cst_85 {dimension_numbers = #tpu.dot_dimension_numbers<[1], [0], [0], [1], [0, 0, 1, 1], [], []>} : vector<126x128xbf16>, vector<128x256xbf16>, vector<126x256xf32> -> vector<126x256xf32>
    %c1_86 = arith.constant 1 : index
    %c0_87 = arith.constant 0 : index
    %86 = vector.load %arg16[%c1_86, %c0_87] : memref<128x128xf32, #tpu.memory_space<vmem>>, vector<126x128xf32>
    %87 = arith.truncf %86 : vector<126x128xf32> to vector<126x128xbf16>
    %c1_88 = arith.constant 1 : index
    %c0_89 = arith.constant 0 : index
    %c0_90 = arith.constant 0 : index
    %88 = vector.load %arg9[%c1_88, %c0_89, %c0_90] : memref<3x128x256xbf16, #tpu.memory_space<vmem>>, vector<1x128x256xbf16>
    %89 = vector.shape_cast %88 : vector<1x128x256xbf16> to vector<128x256xbf16>
    %cst_91 = arith.constant dense<0.000000e+00> : vector<126x256xf32>
    %90 = tpu.matmul %87, %89, %cst_91 {dimension_numbers = #tpu.dot_dimension_numbers<[1], [0], [0], [1], [0, 0, 1, 1], [], []>} : vector<126x128xbf16>, vector<128x256xbf16>, vector<126x256xf32> -> vector<126x256xf32>
    %91 = arith.addf %85, %90 : vector<126x256xf32>
    %c2_92 = arith.constant 2 : index
    %c0_93 = arith.constant 0 : index
    %92 = vector.load %arg16[%c2_92, %c0_93] : memref<128x128xf32, #tpu.memory_space<vmem>>, vector<126x128xf32>
    %93 = arith.truncf %92 : vector<126x128xf32> to vector<126x128xbf16>
    %c2_94 = arith.constant 2 : index
    %c0_95 = arith.constant 0 : index
    %c0_96 = arith.constant 0 : index
    %94 = vector.load %arg9[%c2_94, %c0_95, %c0_96] : memref<3x128x256xbf16, #tpu.memory_space<vmem>>, vector<1x128x256xbf16>
    %95 = vector.shape_cast %94 : vector<1x128x256xbf16> to vector<128x256xbf16>
    %cst_97 = arith.constant dense<0.000000e+00> : vector<126x256xf32>
    %96 = tpu.matmul %93, %95, %cst_97 {dimension_numbers = #tpu.dot_dimension_numbers<[1], [0], [0], [1], [0, 0, 1, 1], [], []>} : vector<126x128xbf16>, vector<128x256xbf16>, vector<126x256xf32> -> vector<126x256xf32>
    %97 = arith.addf %91, %96 : vector<126x256xf32>
    %c0_98 = arith.constant 0 : index
    %c0_99 = arith.constant 0 : index
    %98 = vector.load %arg10[%c0_98, %c0_99] : memref<1x256xf32, #tpu.memory_space<vmem>>, vector<1x256xf32>
    %99 = vector.broadcast %98 : vector<1x256xf32> to vector<126x256xf32>
    %100 = arith.addf %97, %99 : vector<126x256xf32>
    %101 = arith.truncf %100 : vector<126x256xf32> to vector<126x256xbf16>
    %102 = vector.extract_strided_slice %101 {offsets = [0, 0], sizes = [24, 256], strides = [1, 1]} : vector<126x256xbf16> to vector<24x256xbf16>
    %c0_100 = arith.constant 0 : index
    %c0_101 = arith.constant 0 : index
    %103 = vector.load %arg11[%c0_100, %c0_101] : memref<8x24xbf16, #tpu.memory_space<vmem>>, vector<8x24xbf16>
    %cst_102 = arith.constant dense<0.000000e+00> : vector<8x256xf32>
    %104 = tpu.matmul %103, %102, %cst_102 {dimension_numbers = #tpu.dot_dimension_numbers<[1], [0], [0], [1], [0, 0, 1, 1], [], []>} : vector<8x24xbf16>, vector<24x256xbf16>, vector<8x256xf32> -> vector<8x256xf32>
    %c0_103 = arith.constant 0 : index
    %c0_104 = arith.constant 0 : index
    %105 = vector.load %arg12[%c0_103, %c0_104] : memref<8x1xf32, #tpu.memory_space<vmem>>, vector<8x1xf32>
    %106 = vector.broadcast %105 : vector<8x1xf32> to vector<8x256xf32>
    %107 = arith.addf %104, %106 : vector<8x256xf32>
    %cst_105 = arith.constant 0.000000e+00 : f32
    %108 = vector.broadcast %cst_105 : f32 to vector<8x256xf32>
    %109 = arith.cmpf ogt, %107, %108 : vector<8x256xf32>
    %cst_106 = arith.constant 0.00999999977 : f32
    %110 = vector.broadcast %cst_106 : f32 to vector<8x256xf32>
    %111 = arith.mulf %110, %107 : vector<8x256xf32>
    %112 = arith.select %109, %107, %111 : vector<8x256xi1>, vector<8x256xf32>
    %c0_107 = arith.constant 0 : index
    %c0_108 = arith.constant 0 : index
    %c0_109 = arith.constant 0 : index
    %113 = vector.load %arg13[%c0_107, %c0_108, %c0_109] : memref<4x8x256xf32, #tpu.memory_space<vmem>>, vector<1x8x256xf32>
    %114 = vector.shape_cast %113 : vector<1x8x256xf32> to vector<8x256xf32>
    %115 = vector.shape_cast %112 : vector<8x256xf32> to vector<1x8x256xf32>
    tpu.vector_store %arg13[%c0_107, %c0_108, %c0_109], %115 {strides = array<i32>} : memref<4x8x256xf32, #tpu.memory_space<vmem>>, vector<1x8x256xf32>,
    %116 = vector.extract_strided_slice %101 {offsets = [32, 0], sizes = [24, 256], strides = [1, 1]} : vector<126x256xbf16> to vector<24x256xbf16>
    %c0_110 = arith.constant 0 : index
    %c0_111 = arith.constant 0 : index
    %117 = vector.load %arg11[%c0_110, %c0_111] : memref<8x24xbf16, #tpu.memory_space<vmem>>, vector<8x24xbf16>
    %cst_112 = arith.constant dense<0.000000e+00> : vector<8x256xf32>
    %118 = tpu.matmul %117, %116, %cst_112 {dimension_numbers = #tpu.dot_dimension_numbers<[1], [0], [0], [1], [0, 0, 1, 1], [], []>} : vector<8x24xbf16>, vector<24x256xbf16>, vector<8x256xf32> -> vector<8x256xf32>
    %c0_113 = arith.constant 0 : index
    %c0_114 = arith.constant 0 : index
    %119 = vector.load %arg12[%c0_113, %c0_114] : memref<8x1xf32, #tpu.memory_space<vmem>>, vector<8x1xf32>
    %120 = vector.broadcast %119 : vector<8x1xf32> to vector<8x256xf32>
    %121 = arith.addf %118, %120 : vector<8x256xf32>
    %cst_115 = arith.constant 0.000000e+00 : f32
    %122 = vector.broadcast %cst_115 : f32 to vector<8x256xf32>
    %123 = arith.cmpf ogt, %121, %122 : vector<8x256xf32>
    %cst_116 = arith.constant 0.00999999977 : f32
    %124 = vector.broadcast %cst_116 : f32 to vector<8x256xf32>
    %125 = arith.mulf %124, %121 : vector<8x256xf32>
    %126 = arith.select %123, %121, %125 : vector<8x256xi1>, vector<8x256xf32>
    %c1_117 = arith.constant 1 : index
    %c0_118 = arith.constant 0 : index
    %c0_119 = arith.constant 0 : index
    %127 = vector.load %arg13[%c1_117, %c0_118, %c0_119] : memref<4x8x256xf32, #tpu.memory_space<vmem>>, vector<1x8x256xf32>
    %128 = vector.shape_cast %127 : vector<1x8x256xf32> to vector<8x256xf32>
    %129 = vector.shape_cast %126 : vector<8x256xf32> to vector<1x8x256xf32>
    tpu.vector_store %arg13[%c1_117, %c0_118, %c0_119], %129 {strides = array<i32>} : memref<4x8x256xf32, #tpu.memory_space<vmem>>, vector<1x8x256xf32>,
    %130 = vector.extract_strided_slice %101 {offsets = [64, 0], sizes = [24, 256], strides = [1, 1]} : vector<126x256xbf16> to vector<24x256xbf16>
    %c0_120 = arith.constant 0 : index
    %c0_121 = arith.constant 0 : index
    %131 = vector.load %arg11[%c0_120, %c0_121] : memref<8x24xbf16, #tpu.memory_space<vmem>>, vector<8x24xbf16>
    %cst_122 = arith.constant dense<0.000000e+00> : vector<8x256xf32>
    %132 = tpu.matmul %131, %130, %cst_122 {dimension_numbers = #tpu.dot_dimension_numbers<[1], [0], [0], [1], [0, 0, 1, 1], [], []>} : vector<8x24xbf16>, vector<24x256xbf16>, vector<8x256xf32> -> vector<8x256xf32>
    %c0_123 = arith.constant 0 : index
    %c0_124 = arith.constant 0 : index
    %133 = vector.load %arg12[%c0_123, %c0_124] : memref<8x1xf32, #tpu.memory_space<vmem>>, vector<8x1xf32>
    %134 = vector.broadcast %133 : vector<8x1xf32> to vector<8x256xf32>
    %135 = arith.addf %132, %134 : vector<8x256xf32>
    %cst_125 = arith.constant 0.000000e+00 : f32
    %136 = vector.broadcast %cst_125 : f32 to vector<8x256xf32>
    %137 = arith.cmpf ogt, %135, %136 : vector<8x256xf32>
    %cst_126 = arith.constant 0.00999999977 : f32
    %138 = vector.broadcast %cst_126 : f32 to vector<8x256xf32>
    %139 = arith.mulf %138, %135 : vector<8x256xf32>
    %140 = arith.select %137, %135, %139 : vector<8x256xi1>, vector<8x256xf32>
    %c2_127 = arith.constant 2 : index
    %c0_128 = arith.constant 0 : index
    %c0_129 = arith.constant 0 : index
    %141 = vector.load %arg13[%c2_127, %c0_128, %c0_129] : memref<4x8x256xf32, #tpu.memory_space<vmem>>, vector<1x8x256xf32>
    %142 = vector.shape_cast %141 : vector<1x8x256xf32> to vector<8x256xf32>
    %143 = vector.shape_cast %140 : vector<8x256xf32> to vector<1x8x256xf32>
    tpu.vector_store %arg13[%c2_127, %c0_128, %c0_129], %143 {strides = array<i32>} : memref<4x8x256xf32, #tpu.memory_space<vmem>>, vector<1x8x256xf32>,
    %144 = vector.extract_strided_slice %101 {offsets = [96, 0], sizes = [24, 256], strides = [1, 1]} : vector<126x256xbf16> to vector<24x256xbf16>
    %c0_130 = arith.constant 0 : index
    %c0_131 = arith.constant 0 : index
    %145 = vector.load %arg11[%c0_130, %c0_131] : memref<8x24xbf16, #tpu.memory_space<vmem>>, vector<8x24xbf16>
    %cst_132 = arith.constant dense<0.000000e+00> : vector<8x256xf32>
    %146 = tpu.matmul %145, %144, %cst_132 {dimension_numbers = #tpu.dot_dimension_numbers<[1], [0], [0], [1], [0, 0, 1, 1], [], []>} : vector<8x24xbf16>, vector<24x256xbf16>, vector<8x256xf32> -> vector<8x256xf32>
    %c0_133 = arith.constant 0 : index
    %c0_134 = arith.constant 0 : index
    %147 = vector.load %arg12[%c0_133, %c0_134] : memref<8x1xf32, #tpu.memory_space<vmem>>, vector<8x1xf32>
    %148 = vector.broadcast %147 : vector<8x1xf32> to vector<8x256xf32>
    %149 = arith.addf %146, %148 : vector<8x256xf32>
    %cst_135 = arith.constant 0.000000e+00 : f32
    %150 = vector.broadcast %cst_135 : f32 to vector<8x256xf32>
    %151 = arith.cmpf ogt, %149, %150 : vector<8x256xf32>
    %cst_136 = arith.constant 0.00999999977 : f32
    %152 = vector.broadcast %cst_136 : f32 to vector<8x256xf32>
    %153 = arith.mulf %152, %149 : vector<8x256xf32>
    %154 = arith.select %151, %149, %153 : vector<8x256xi1>, vector<8x256xf32>
    %c3 = arith.constant 3 : index
    %c0_137 = arith.constant 0 : index
    %c0_138 = arith.constant 0 : index
    %155 = vector.load %arg13[%c3, %c0_137, %c0_138] : memref<4x8x256xf32, #tpu.memory_space<vmem>>, vector<1x8x256xf32>
    %156 = vector.shape_cast %155 : vector<1x8x256xf32> to vector<8x256xf32>
    %157 = vector.shape_cast %154 : vector<8x256xf32> to vector<1x8x256xf32>
    tpu.vector_store %arg13[%c3, %c0_137, %c0_138], %157 {strides = array<i32>} : memref<4x8x256xf32, #tpu.memory_space<vmem>>, vector<1x8x256xf32>,
    return
  }
  func.func @transform_0(%arg0: i32) -> (i32, i32) {
    %c0_i32 = arith.constant 0 : i32
    %c0_i32_0 = arith.constant 0 : i32
    return %arg0, %c0_i32 : i32, i32
  }
  func.func @transform_1(%arg0: i32) -> (i32, i32, i32) {
    %c0_i32 = arith.constant 0 : i32
    %c0_i32_0 = arith.constant 0 : i32
    %c0_i32_1 = arith.constant 0 : i32
    %c0_i32_2 = arith.constant 0 : i32
    return %c0_i32, %c0_i32_0, %c0_i32_1 : i32, i32, i32
  }
  func.func @transform_2(%arg0: i32) -> (i32, i32, i32) {
    %c0_i32 = arith.constant 0 : i32
    %c0_i32_0 = arith.constant 0 : i32
    %c0_i32_1 = arith.constant 0 : i32
    %c0_i32_2 = arith.constant 0 : i32
    return %c0_i32, %c0_i32_0, %c0_i32_1 : i32, i32, i32
  }
  func.func @transform_3(%arg0: i32) -> (i32, i32) {
    %c0_i32 = arith.constant 0 : i32
    %c0_i32_0 = arith.constant 0 : i32
    %c0_i32_1 = arith.constant 0 : i32
    return %c0_i32, %c0_i32_0 : i32, i32
  }
  func.func @transform_4(%arg0: i32) -> (i32, i32, i32) {
    %c0_i32 = arith.constant 0 : i32
    %c0_i32_0 = arith.constant 0 : i32
    %c0_i32_1 = arith.constant 0 : i32
    %c0_i32_2 = arith.constant 0 : i32
    return %c0_i32, %c0_i32_0, %c0_i32_1 : i32, i32, i32
  }
  func.func @transform_5(%arg0: i32) -> (i32, i32) {
    %c0_i32 = arith.constant 0 : i32
    %c0_i32_0 = arith.constant 0 : i32
    %c0_i32_1 = arith.constant 0 : i32
    return %c0_i32, %c0_i32_0 : i32, i32
  }
  func.func @transform_6(%arg0: i32) -> (i32, i32, i32) {
    %c0_i32 = arith.constant 0 : i32
    %c0_i32_0 = arith.constant 0 : i32
    %c0_i32_1 = arith.constant 0 : i32
    %c0_i32_2 = arith.constant 0 : i32
    return %c0_i32, %c0_i32_0, %c0_i32_1 : i32, i32, i32
  }
  func.func @transform_7(%arg0: i32) -> (i32, i32) {
    %c0_i32 = arith.constant 0 : i32
    %c0_i32_0 = arith.constant 0 : i32
    %c0_i32_1 = arith.constant 0 : i32
    return %c0_i32, %c0_i32_0 : i32, i32
  }
  func.func @transform_8(%arg0: i32) -> (i32, i32, i32) {
    %c0_i32 = arith.constant 0 : i32
    %c0_i32_0 = arith.constant 0 : i32
    %c0_i32_1 = arith.constant 0 : i32
    %c0_i32_2 = arith.constant 0 : i32
    return %c0_i32, %c0_i32_0, %c0_i32_1 : i32, i32, i32
  }
  func.func @transform_9(%arg0: i32) -> (i32, i32) {
    %c0_i32 = arith.constant 0 : i32
    %c0_i32_0 = arith.constant 0 : i32
    %c0_i32_1 = arith.constant 0 : i32
    return %c0_i32, %c0_i32_0 : i32, i32
  }
  func.func @transform_10(%arg0: i32) -> (i32, i32) {
    %c0_i32 = arith.constant 0 : i32
    %c0_i32_0 = arith.constant 0 : i32
    %c0_i32_1 = arith.constant 0 : i32
    return %c0_i32, %c0_i32_0 : i32, i32
  }
  func.func @transform_11(%arg0: i32) -> (i32, i32) {
    %c0_i32 = arith.constant 0 : i32
    %c0_i32_0 = arith.constant 0 : i32
    %c0_i32_1 = arith.constant 0 : i32
    return %c0_i32, %c0_i32_0 : i32, i32
  }
  func.func @transform_12(%arg0: i32) -> (i32, i32, i32) {
    %c0_i32 = arith.constant 0 : i32
    %c0_i32_0 = arith.constant 0 : i32
    %c0_i32_1 = arith.constant 0 : i32
    return %arg0, %c0_i32, %c0_i32_0 : i32, i32, i32
  }
}

</mosaic_0001>

<llo_original>
// kernel: decoder_up_forward.1
$region0: #{decoder_up_forward.1}
  #allocation0 [shape = 'u32[]', space=smem, size = 0x4, offset = 0x4, fixed_abs, tag = 'smem constant byte address 0x4 - core index']
  #allocation1 [shape = 'u32[144,128]{1,0:T(1,128)}', space=vmem, size = 0x12000, scoped, tag = 'internal scratch']
  #allocation2 [shape = 'f32[128,32]{1,0:T(8,128)}', space=vmem, size = 0x10000, scoped, tag = 'scratch operand']
  #allocation3 [shape = 'f32[128,64]{1,0:T(8,128)}', space=vmem, size = 0x10000, scoped, tag = 'scratch operand']
  #allocation4 [shape = 'f32[128,128]{1,0:T(8,128)}', space=vmem, size = 0x10000, scoped, tag = 'scratch operand']
  %s0 = inlined_call_operand.vmem [shape: f32[256,16], index: 0, kind: input, shape index: {}]
  %s1 = inlined_call_operand.vmem [shape: f32[3,126,1], index: 1, kind: input, shape index: {}]
  %s2 = inlined_call_operand.vmem [shape: bf16[3,16,32], index: 2, kind: input, shape index: {}]
  %s3 = inlined_call_operand.vmem [shape: f32[1,32], index: 3, kind: input, shape index: {}]
  %s4 = inlined_call_operand.vmem [shape: bf16[3,32,64], index: 4, kind: input, shape index: {}]
  %s5 = inlined_call_operand.vmem [shape: f32[1,64], index: 5, kind: input, shape index: {}]
  %s6 = inlined_call_operand.vmem [shape: bf16[3,64,128], index: 6, kind: input, shape index: {}]
  %s7 = inlined_call_operand.vmem [shape: f32[1,128], index: 7, kind: input, shape index: {}]
  %s8 = inlined_call_operand.vmem [shape: bf16[3,128,256], index: 8, kind: input, shape index: {}]
  %s9 = inlined_call_operand.vmem [shape: f32[1,256], index: 9, kind: input, shape index: {}]
  %s10 = inlined_call_operand.vmem [shape: bf16[8,24], index: 10, kind: input, shape index: {}]
  %s11 = inlined_call_operand.vmem [shape: f32[8,1], index: 11, kind: input, shape index: {}]
  %s12 = inlined_call_operand.hbm [shape: f32[8,8,256], index: 12, kind: output, shape index: {}]
  %s13 = sld [smem:[#allocation0]]
  $region81: #{decoder_up_forward.1} parent=0
    _
  %s15 = ssub.s32 1, %s13
  %s16 = scalar_select 0, %s15, %s13
  $region1: #{decoder_up_forward.1} parent=0
    #allocation5 [shape = 'u8[65536]{0}', space=vmem, size = 0x10000, scoped, tag = 'output window, operand 0']
    #allocation6 [shape = 's32[2]{0}', space=sflag, size = 0x8, scoped, tag = 'scoped memory for decoder_up_forward.1']
    %17 = vsyncpa [#allocation6], 0
    %s18 = scalar_lea.sflag [#allocation6], 1
    %19 = vsyncpa %s18, 0
    loop: start=0, step=1, limit=4
    $region2: #{decoder_up_forward.1} parent=1 // loop_pre_header
      _
    $region3: #{decoder_up_forward.1} parent=1 // loop_header
      %s21 = sphi 0, %s25
      %p22 = scmp.ge.s32.totalorder %s21, 4
      %s31 = sphi 0, %s33
      %s34 = sphi 0, %s31
      %s35 = sphi 0, %s34
      %s51 = sphi 0, %s35
      %s55 = sphi 0, %s55
      %s57 = sphi 0, %s55
      %s58 = sphi 0, %s57
      %s72 = sphi 0, %s58
      %s76 = sphi 0, %s76
      %s78 = sphi 0, %s76
      %s79 = sphi 0, %s78
      %s93 = sphi 0, %s79
      %s97 = sphi 0, %s97
      %s99 = sphi 0, %s97
      %s100 = sphi 0, %s99
      %s114 = sphi 0, %s100
      %s118 = sphi 0, %s118
      %s120 = sphi 0, %s118
      %s121 = sphi 0, %s120
      %s135 = sphi 0, %s121
      %s139 = sphi 0, %s139
      %s141 = sphi 0, %s139
      %s142 = sphi 0, %s141
      %s156 = sphi 0, %s142
      %s160 = sphi 0, %s160
      %s162 = sphi 0, %s160
      %s163 = sphi 0, %s162
      %s177 = sphi 0, %s163
      %s181 = sphi 0, %s181
      %s183 = sphi 0, %s181
      %s184 = sphi 0, %s183
      %s198 = sphi 0, %s184
      %s202 = sphi 0, %s202
      %s204 = sphi 0, %s202
      %s205 = sphi 0, %s204
      %s219 = sphi 0, %s205
      %s223 = sphi 0, %s223
      %s225 = sphi 0, %s223
      %s226 = sphi 0, %s225
      %s240 = sphi 0, %s226
      %s244 = sphi 0, %s244
      %s246 = sphi 0, %s244
      %s247 = sphi 0, %s246
      %s261 = sphi 0, %s247
      %s265 = sphi 0, %s265
      %s267 = sphi 0, %s265
      %s268 = sphi 0, %s267
      %s282 = sphi 0, %s268
      %s288 = sphi 0, %s290
      %s291 = sphi 0, %s288
      %s292 = sphi 0, %s291
      %s308 = sphi 0, %s292
    $region4: #{decoder_up_forward.1} parent=1 // loop_header_branch
      %24 = sbr.rel (%p22) target = $region8
    $region5: #{decoder_up_forward.1} parent=1 // loop_body
      %s26 = ssub.s32 %s21, 1
      %s27 = ssub.s32 %s21, 2
      %s28 = sadd.s32 %s21, 1
      %s29 = ssub.s32 %s21, %s28
      %p30 = scmp.eq.s32.totalorder %s29, 0
      %s32 = sadd.s32 %s31, 1
      %s33 = scalar_select %p30, %s31, %s32
      %p36 = pneg %p30
      %p37 = scmp.eq.s32.totalorder %s21, 1
      %p38 = por %p36, %p37
      %p39 = scmp.ne.s32.totalorder %s31, %s34
      %p40 = scmp.eq.s32.totalorder %s21, 0
      %p41 = por %p39, %p40
      %p42 = scmp.ne.s32.totalorder %s31, %s34
      %p43 = scmp.eq.s32.totalorder %s26, 1
      %p44 = por %p42, %p43
      %p45 = scmp.ne.s32.totalorder %s34, %s35
      %p46 = scmp.eq.s32.totalorder %s26, 0
      %p47 = por %p45, %p46
      %p48 = scmp.ne.s32.totalorder %s34, %s35
      %p49 = scmp.eq.s32.totalorder %s27, 1
      %p50 = por %p48, %p49
      %p52 = scmp.ne.s32.totalorder %s35, %s51
      %p53 = scmp.eq.s32.totalorder %s27, 0
      %p54 = por %p52, %p53
      %s56 = sadd.s32 %s55, 1
      %p59 = scmp.eq.s32.totalorder %s21, 1
      %p60 = scmp.ne.s32.totalorder %s55, %s57
      %p61 = scmp.eq.s32.totalorder %s21, 0
      %p62 = por %p60, %p61
      %p63 = scmp.ne.s32.totalorder %s55, %s57
      %p64 = scmp.eq.s32.totalorder %s26, 1
      %p65 = por %p63, %p64
      %p66 = scmp.ne.s32.totalorder %s57, %s58
      %p67 = scmp.eq.s32.totalorder %s26, 0
      %p68 = por %p66, %p67
      %p69 = scmp.ne.s32.totalorder %s57, %s58
      %p70 = scmp.eq.s32.totalorder %s27, 1
      %p71 = por %p69, %p70
      %p73 = scmp.ne.s32.totalorder %s58, %s72
      %p74 = scmp.eq.s32.totalorder %s27, 0
      %p75 = por %p73, %p74
      %s77 = sadd.s32 %s76, 1
      %p80 = scmp.eq.s32.totalorder %s21, 1
      %p81 = scmp.ne.s32.totalorder %s76, %s78
      %p82 = scmp.eq.s32.totalorder %s21, 0
      %p83 = por %p81, %p82
      %p84 = scmp.ne.s32.totalorder %s76, %s78
      %p85 = scmp.eq.s32.totalorder %s26, 1
      %p86 = por %p84, %p85
      %p87 = scmp.ne.s32.totalorder %s78, %s79
      %p88 = scmp.eq.s32.totalorder %s26, 0
      %p89 = por %p87, %p88
      %p90 = scmp.ne.s32.totalorder %s78, %s79
      %p91 = scmp.eq.s32.totalorder %s27, 1
      %p92 = por %p90, %p91
      %p94 = scmp.ne.s32.totalorder %s79, %s93
      %p95 = scmp.eq.s32.totalorder %s27, 0
      %p96 = por %p94, %p95
      %s98 = sadd.s32 %s97, 1
      %p101 = scmp.eq.s32.totalorder %s21, 1
      %p102 = scmp.ne.s32.totalorder %s97, %s99
      %p103 = scmp.eq.s32.totalorder %s21, 0
      %p104 = por %p102, %p103
      %p105 = scmp.ne.s32.totalorder %s97, %s99
      %p106 = scmp.eq.s32.totalorder %s26, 1
      %p107 = por %p105, %p106
      %p108 = scmp.ne.s32.totalorder %s99, %s100
      %p109 = scmp.eq.s32.totalorder %s26, 0
      %p110 = por %p108, %p109
      %p111 = scmp.ne.s32.totalorder %s99, %s100
      %p112 = scmp.eq.s32.totalorder %s27, 1
      %p113 = por %p111, %p112
      %p115 = scmp.ne.s32.totalorder %s100, %s114
      %p116 = scmp.eq.s32.totalorder %s27, 0
      %p117 = por %p115, %p116
      %s119 = sadd.s32 %s118, 1
      %p122 = scmp.eq.s32.totalorder %s21, 1
      %p123 = scmp.ne.s32.totalorder %s118, %s120
      %p124 = scmp.eq.s32.totalorder %s21, 0
      %p125 = por %p123, %p124
      %p126 = scmp.ne.s32.totalorder %s118, %s120
      %p127 = scmp.eq.s32.totalorder %s26, 1
      %p128 = por %p126, %p127
      %p129 = scmp.ne.s32.totalorder %s120, %s121
      %p130 = scmp.eq.s32.totalorder %s26, 0
      %p131 = por %p129, %p130
      %p132 = scmp.ne.s32.totalorder %s120, %s121
      %p133 = scmp.eq.s32.totalorder %s27, 1
      %p134 = por %p132, %p133
      %p136 = scmp.ne.s32.totalorder %s121, %s135
      %p137 = scmp.eq.s32.totalorder %s27, 0
      %p138 = por %p136, %p137
      %s140 = sadd.s32 %s139, 1
      %p143 = scmp.eq.s32.totalorder %s21, 1
      %p144 = scmp.ne.s32.totalorder %s139, %s141
      %p145 = scmp.eq.s32.totalorder %s21, 0
      %p146 = por %p144, %p145
      %p147 = scmp.ne.s32.totalorder %s139, %s141
      %p148 = scmp.eq.s32.totalorder %s26, 1
      %p149 = por %p147, %p148
      %p150 = scmp.ne.s32.totalorder %s141, %s142
      %p151 = scmp.eq.s32.totalorder %s26, 0
      %p152 = por %p150, %p151
      %p153 = scmp.ne.s32.totalorder %s141, %s142
      %p154 = scmp.eq.s32.totalorder %s27, 1
      %p155 = por %p153, %p154
      %p157 = scmp.ne.s32.totalorder %s142, %s156
      %p158 = scmp.eq.s32.totalorder %s27, 0
      %p159 = por %p157, %p158
      %s161 = sadd.s32 %s160, 1
      %p164 = scmp.eq.s32.totalorder %s21, 1
      %p165 = scmp.ne.s32.totalorder %s160, %s162
      %p166 = scmp.eq.s32.totalorder %s21, 0
      %p167 = por %p165, %p166
      %p168 = scmp.ne.s32.totalorder %s160, %s162
      %p169 = scmp.eq.s32.totalorder %s26, 1
      %p170 = por %p168, %p169
      %p171 = scmp.ne.s32.totalorder %s162, %s163
      %p172 = scmp.eq.s32.totalorder %s26, 0
      %p173 = por %p171, %p172
      %p174 = scmp.ne.s32.totalorder %s162, %s163
      %p175 = scmp.eq.s32.totalorder %s27, 1
      %p176 = por %p174, %p175
      %p178 = scmp.ne.s32.totalorder %s163, %s177
      %p179 = scmp.eq.s32.totalorder %s27, 0
      %p180 = por %p178, %p179
      %s182 = sadd.s32 %s181, 1
      %p185 = scmp.eq.s32.totalorder %s21, 1
      %p186 = scmp.ne.s32.totalorder %s181, %s183
      %p187 = scmp.eq.s32.totalorder %s21, 0
      %p188 = por %p186, %p187
      %p189 = scmp.ne.s32.totalorder %s181, %s183
      %p190 = scmp.eq.s32.totalorder %s26, 1
      %p191 = por %p189, %p190
      %p192 = scmp.ne.s32.totalorder %s183, %s184
      %p193 = scmp.eq.s32.totalorder %s26, 0
      %p194 = por %p192, %p193
      %p195 = scmp.ne.s32.totalorder %s183, %s184
      %p196 = scmp.eq.s32.totalorder %s27, 1
      %p197 = por %p195, %p196
      %p199 = scmp.ne.s32.totalorder %s184, %s198
      %p200 = scmp.eq.s32.totalorder %s27, 0
      %p201 = por %p199, %p200
      %s203 = sadd.s32 %s202, 1
      %p206 = scmp.eq.s32.totalorder %s21, 1
      %p207 = scmp.ne.s32.totalorder %s202, %s204
      %p208 = scmp.eq.s32.totalorder %s21, 0
      %p209 = por %p207, %p208
      %p210 = scmp.ne.s32.totalorder %s202, %s204
      %p211 = scmp.eq.s32.totalorder %s26, 1
      %p212 = por %p210, %p211
      %p213 = scmp.ne.s32.totalorder %s204, %s205
      %p214 = scmp.eq.s32.totalorder %s26, 0
      %p215 = por %p213, %p214
      %p216 = scmp.ne.s32.totalorder %s204, %s205
      %p217 = scmp.eq.s32.totalorder %s27, 1
      %p218 = por %p216, %p217
      %p220 = scmp.ne.s32.totalorder %s205, %s219
      %p221 = scmp.eq.s32.totalorder %s27, 0
      %p222 = por %p220, %p221
      %s224 = sadd.s32 %s223, 1
      %p227 = scmp.eq.s32.totalorder %s21, 1
      %p228 = scmp.ne.s32.totalorder %s223, %s225
      %p229 = scmp.eq.s32.totalorder %s21, 0
      %p230 = por %p228, %p229
      %p231 = scmp.ne.s32.totalorder %s223, %s225
      %p232 = scmp.eq.s32.totalorder %s26, 1
      %p233 = por %p231, %p232
      %p234 = scmp.ne.s32.totalorder %s225, %s226
      %p235 = scmp.eq.s32.totalorder %s26, 0
      %p236 = por %p234, %p235
      %p237 = scmp.ne.s32.totalorder %s225, %s226
      %p238 = scmp.eq.s32.totalorder %s27, 1
      %p239 = por %p237, %p238
      %p241 = scmp.ne.s32.totalorder %s226, %s240
      %p242 = scmp.eq.s32.totalorder %s27, 0
      %p243 = por %p241, %p242
      %s245 = sadd.s32 %s244, 1
      %p248 = scmp.eq.s32.totalorder %s21, 1
      %p249 = scmp.ne.s32.totalorder %s244, %s246
      %p250 = scmp.eq.s32.totalorder %s21, 0
      %p251 = por %p249, %p250
      %p252 = scmp.ne.s32.totalorder %s244, %s246
      %p253 = scmp.eq.s32.totalorder %s26, 1
      %p254 = por %p252, %p253
      %p255 = scmp.ne.s32.totalorder %s246, %s247
      %p256 = scmp.eq.s32.totalorder %s26, 0
      %p257 = por %p255, %p256
      %p258 = scmp.ne.s32.totalorder %s246, %s247
      %p259 = scmp.eq.s32.totalorder %s27, 1
      %p260 = por %p258, %p259
      %p262 = scmp.ne.s32.totalorder %s247, %s261
      %p263 = scmp.eq.s32.totalorder %s27, 0
      %p264 = por %p262, %p263
      %s266 = sadd.s32 %s265, 1
      %p269 = scmp.eq.s32.totalorder %s21, 1
      %p270 = scmp.ne.s32.totalorder %s265, %s267
      %p271 = scmp.eq.s32.totalorder %s21, 0
      %p272 = por %p270, %p271
      %p273 = scmp.ne.s32.totalorder %s265, %s267
      %p274 = scmp.eq.s32.totalorder %s26, 1
      %p275 = por %p273, %p274
      %p276 = scmp.ne.s32.totalorder %s267, %s268
      %p277 = scmp.eq.s32.totalorder %s26, 0
      %p278 = por %p276, %p277
      %p279 = scmp.ne.s32.totalorder %s267, %s268
      %p280 = scmp.eq.s32.totalorder %s27, 1
      %p281 = por %p279, %p280
      %p283 = scmp.ne.s32.totalorder %s268, %s282
      %p284 = scmp.eq.s32.totalorder %s27, 0
      %p285 = por %p283, %p284
      %s286 = ssub.s32 %s21, %s28
      %p287 = scmp.eq.s32.totalorder %s286, 0
      %s289 = sadd.s32 %s288, 1
      %s290 = scalar_select %p287, %s288, %s289
      %p293 = pneg %p287
      %p294 = scmp.eq.s32.totalorder %s21, 1
      %p295 = por %p293, %p294
      %p296 = scmp.ne.s32.totalorder %s288, %s291
      %p297 = scmp.eq.s32.totalorder %s21, 0
      %p298 = por %p296, %p297
      %p299 = scmp.ne.s32.totalorder %s288, %s291
      %p300 = scmp.eq.s32.totalorder %s26, 1
      %p301 = por %p299, %p300
      %p302 = scmp.ne.s32.totalorder %s291, %s292
      %p303 = scmp.eq.s32.totalorder %s26, 0
      %p304 = por %p302, %p303
      %p305 = scmp.ne.s32.totalorder %s291, %s292
      %p306 = scmp.eq.s32.totalorder %s27, 1
      %p307 = por %p305, %p306
      %p309 = scmp.ne.s32.totalorder %s292, %s308
      %p310 = scmp.eq.s32.totalorder %s27, 0
      %p311 = por %p309, %p310
      %p312 = scmp.le.s32.totalorder 1, %s21
      %p313 = scmp.lt.s32.totalorder %s21, 3
      %p314 = pnand %p312, %p313
      %p315 = pneg %p314
      // Predicated region
      $region9: #{decoder_up_forward.1} parent=5 // pred_check
        _
      $region10: #{decoder_up_forward.1} parent=5 // pred_check_branch
        %317 = sbr.rel (%p314) target = $region12
      $region11: #{decoder_up_forward.1} parent=5 // pred_region
        %s318 = ssub.s32 %s21, 1
        // Predicated region
        $region13: #{decoder_up_forward.1} parent=11 // pred_check
          %p319 = pneg %p68
        $region14: #{decoder_up_forward.1} parent=11 // pred_check_branch
          %321 = sbr.rel (%p319) target = $region16
        $region15: #{decoder_up_forward.1} parent=11 // pred_region
          _
        $region16: #{decoder_up_forward.1} parent=11 // pred_fallthru
          _
        // Predicated region
        $region17: #{decoder_up_forward.1} parent=11 // pred_check
          %p322 = pneg %p89
        $region18: #{decoder_up_forward.1} parent=11 // pred_check_branch
          %324 = sbr.rel (%p322) target = $region20
        $region19: #{decoder_up_forward.1} parent=11 // pred_region
          _
        $region20: #{decoder_up_forward.1} parent=11 // pred_fallthru
          _
        // Predicated region
        $region21: #{decoder_up_forward.1} parent=11 // pred_check
          %p325 = pneg %p110
        $region22: #{decoder_up_forward.1} parent=11 // pred_check_branch
          %327 = sbr.rel (%p325) target = $region24
        $region23: #{decoder_up_forward.1} parent=11 // pred_region
          _
        $region24: #{decoder_up_forward.1} parent=11 // pred_fallthru
          _
        // Predicated region
        $region25: #{decoder_up_forward.1} parent=11 // pred_check
          %p328 = pneg %p131
        $region26: #{decoder_up_forward.1} parent=11 // pred_check_branch
          %330 = sbr.rel (%p328) target = $region28
        $region27: #{decoder_up_forward.1} parent=11 // pred_region
          _
        $region28: #{decoder_up_forward.1} parent=11 // pred_fallthru
          _
        // Predicated region
        $region29: #{decoder_up_forward.1} parent=11 // pred_check
          %p331 = pneg %p152
        $region30: #{decoder_up_forward.1} parent=11 // pred_check_branch
          %333 = sbr.rel (%p331) target = $region32
        $region31: #{decoder_up_forward.1} parent=11 // pred_region
          _
        $region32: #{decoder_up_forward.1} parent=11 // pred_fallthru
          _
        // Predicated region
        $region33: #{decoder_up_forward.1} parent=11 // pred_check
          %p334 = pneg %p173
        $region34: #{decoder_up_forward.1} parent=11 // pred_check_branch
          %336 = sbr.rel (%p334) target = $region36
        $region35: #{decoder_up_forward.1} parent=11 // pred_region
          _
        $region36: #{decoder_up_forward.1} parent=11 // pred_fallthru
          _
        // Predicated region
        $region37: #{decoder_up_forward.1} parent=11 // pred_check
          %p337 = pneg %p194
        $region38: #{decoder_up_forward.1} parent=11 // pred_check_branch
          %339 = sbr.rel (%p337) target = $region40
        $region39: #{decoder_up_forward.1} parent=11 // pred_region
          _
        $region40: #{decoder_up_forward.1} parent=11 // pred_fallthru
          _
        // Predicated region
        $region41: #{decoder_up_forward.1} parent=11 // pred_check
          %p340 = pneg %p215
        $region42: #{decoder_up_forward.1} parent=11 // pred_check_branch
          %342 = sbr.rel (%p340) target = $region44
        $region43: #{decoder_up_forward.1} parent=11 // pred_region
          _
        $region44: #{decoder_up_forward.1} parent=11 // pred_fallthru
          _
        // Predicated region
        $region45: #{decoder_up_forward.1} parent=11 // pred_check
          %p343 = pneg %p236
        $region46: #{decoder_up_forward.1} parent=11 // pred_check_branch
          %345 = sbr.rel (%p343) target = $region48
        $region47: #{decoder_up_forward.1} parent=11 // pred_region
          _
        $region48: #{decoder_up_forward.1} parent=11 // pred_fallthru
          _
        // Predicated region
        $region49: #{decoder_up_forward.1} parent=11 // pred_check
          %p346 = pneg %p257
        $region50: #{decoder_up_forward.1} parent=11 // pred_check_branch
          %348 = sbr.rel (%p346) target = $region52
        $region51: #{decoder_up_forward.1} parent=11 // pred_region
          _
        $region52: #{decoder_up_forward.1} parent=11 // pred_fallthru
          _
        // Predicated region
        $region53: #{decoder_up_forward.1} parent=11 // pred_check
          %p349 = pneg %p278
        $region54: #{decoder_up_forward.1} parent=11 // pred_check_branch
          %351 = sbr.rel (%p349) target = $region56
        $region55: #{decoder_up_forward.1} parent=11 // pred_region
          _
        $region56: #{decoder_up_forward.1} parent=11 // pred_fallthru
          _
      $region12: #{decoder_up_forward.1} parent=5 // pred_fallthru
        _
      %p352 = scmp.lt.s32.totalorder %s21, 2
      // Predicated region
      $region57: #{decoder_up_forward.1} parent=5 // pred_check
        %p353 = pneg %p352
      $region58: #{decoder_up_forward.1} parent=5 // pred_check_branch
        %355 = sbr.rel (%p353) target = $region60
      $region59: #{decoder_up_forward.1} parent=5 // pred_region
        // Predicated region
        $region61: #{decoder_up_forward.1} parent=59 // pred_check
          %p356 = pneg %p41
        $region62: #{decoder_up_forward.1} parent=59 // pred_check_branch
          %358 = sbr.rel (%p356) target = $region64
        $region63: #{decoder_up_forward.1} parent=59 // pred_region
          %s359 = smul.u32 16, %s21
          %p360 = scmp.lt.s32.totalorder %s359, 31
          %s361 = scalar_select %p360, %s359, 31
          %s362 = smul.addr %s361, 8
          %s363 = scalar_lea.vmem %s0, %s362
          %s364 = smul.u32 16, %s21
        $region64: #{decoder_up_forward.1} parent=59 // pred_fallthru
          _
      $region60: #{decoder_up_forward.1} parent=5 // pred_fallthru
        _
      %p365 = scmp.le.s32.totalorder 1, %s21
      %p366 = scmp.lt.s32.totalorder %s21, 3
      %p367 = pnand %p365, %p366
      %p368 = pneg %p367
      // Predicated region
      $region65: #{decoder_up_forward.1} parent=5 // pred_check
        _
      $region66: #{decoder_up_forward.1} parent=5 // pred_check_branch
        %370 = sbr.rel (%p367) target = $region68
      $region67: #{decoder_up_forward.1} parent=5 // pred_region
        %s371 = ssub.s32 %s21, 1
        %s372 = smul.u32 16, %s26
        %p373 = scmp.lt.s32.totalorder %s372, 31
        %s374 = scalar_select %p373, %s372, 31
        %s375 = smul.addr %s374, 8
        %s376 = scalar_lea.vmem %s0, %s375
        %p377 = pneg %p47
        %p378 = pneg %p44
        %p379 = pneg %p68
        %p380 = pneg %p65
        %p381 = pneg %p89
        %p382 = pneg %p86
        %p383 = pneg %p110
        %p384 = pneg %p107
        %p385 = pneg %p131
        %p386 = pneg %p128
        %p387 = pneg %p152
        %p388 = pneg %p149
        %p389 = pneg %p173
        %p390 = pneg %p170
        %p391 = pneg %p194
        %p392 = pneg %p191
        %p393 = pneg %p215
        %p394 = pneg %p212
        %p395 = pneg %p236
        %p396 = pneg %p233
        %p397 = pneg %p257
        %p398 = pneg %p254
        %p399 = pneg %p278
        %p400 = pneg %p275
        %p401 = pneg %p304
        %p402 = pneg %p301
        %s403 = sand.u32 %s291, 1
        %s404 = scalar_lea.sflag [#allocation6], %s403
        %s405 = sand.u32 %s291, 1
        %s406 = smul.addr %s405, 64
        %s407 = scalar_lea.vmem [#allocation5], %s406
        %s408 = smul.u32 16, %s26
        %p409 = scmp.lt.s32.totalorder %s408, 31
        %s410 = scalar_select %p409, %s408, 31
        %s411 = smul.addr %s410, 8
        %s412 = scalar_lea.vmem %s0, %s411
        %s413 = smul.u32 16, %s26
        %s414 = smul.u32 4, %s26
        %v416 = vld [vmem:[%s412] sm:$0xff]
        %v417 = vld [vmem:[%s412 + $0x8] sm:$0xff]
        %v418 = vld [vmem:[%s412 + $0x10] sm:$0xff]
        %v419 = vld [vmem:[%s412 + $0x18] sm:$0xff]
        %v420 = vld [vmem:[%s412 + $0x20] sm:$0xff]
        %v421 = vld [vmem:[%s412 + $0x28] sm:$0xff]
        %v422 = vld [vmem:[%s412 + $0x30] sm:$0xff]
        %v423 = vld [vmem:[%s412 + $0x38] sm:$0xff]
        %v424 = vld [vmem:[%s412 + $0x40] sm:$0xff]
        %v425 = vld [vmem:[%s412 + $0x48] sm:$0xff]
        %v426 = vld [vmem:[%s412 + $0x50] sm:$0xff]
        %v427 = vld [vmem:[%s412 + $0x58] sm:$0xff]
        %v428 = vld [vmem:[%s412 + $0x60] sm:$0xff]
        %v429 = vld [vmem:[%s412 + $0x68] sm:$0xff]
        %v430 = vld [vmem:[%s412 + $0x70] sm:$0xff]
        %v431 = vld [vmem:[%s412 + $0x78] sm:$0x3f]
        %v432 = vpack.c.bf16 %v417, %v416
        %v433 = vpack.c.bf16 %v419, %v418
        %v434 = vpack.c.bf16 %v421, %v420
        %v435 = vpack.c.bf16 %v423, %v422
        %v436 = vpack.c.bf16 %v425, %v424
        %v437 = vpack.c.bf16 %v427, %v426
        %v438 = vpack.c.bf16 %v429, %v428
        %v439 = vpack.c.bf16 %v431, %v430
        %v440 = vld [vmem:[%s2] sm:$0xf]
        %v441 = vld [vmem:[%s2 + $0x4] sm:$0xf]
        %v442 = vld [vmem:[%s412 + $0x1] sm:$0xff]
        %v443 = vld [vmem:[%s412 + $0x9] sm:$0xff]
        %v444 = vld [vmem:[%s412 + $0x11] sm:$0xff]
        %v445 = vld [vmem:[%s412 + $0x19] sm:$0xff]
        %v446 = vld [vmem:[%s412 + $0x21] sm:$0xff]
        %v447 = vld [vmem:[%s412 + $0x29] sm:$0xff]
        %v448 = vld [vmem:[%s412 + $0x31] sm:$0xff]
        %v449 = vld [vmem:[%s412 + $0x39] sm:$0xff]
        %v450 = vld [vmem:[%s412 + $0x41] sm:$0xff]
        %v451 = vld [vmem:[%s412 + $0x49] sm:$0xff]
        %v452 = vld [vmem:[%s412 + $0x51] sm:$0xff]
        %v453 = vld [vmem:[%s412 + $0x59] sm:$0xff]
        %v454 = vld [vmem:[%s412 + $0x61] sm:$0xff]
        %v455 = vld [vmem:[%s412 + $0x69] sm:$0xff]
        %v456 = vld [vmem:[%s412 + $0x71] sm:$0xff]
        %v457 = vld [vmem:[%s412 + $0x79] sm:$0x3f]
        %v458 = vpack.c.bf16 %v443, %v442
        %v459 = vpack.c.bf16 %v445, %v444
        %v460 = vpack.c.bf16 %v447, %v446
        %v461 = vpack.c.bf16 %v449, %v448
        %v462 = vpack.c.bf16 %v451, %v450
        %v463 = vpack.c.bf16 %v453, %v452
        %v464 = vpack.c.bf16 %v455, %v454
        %v465 = vpack.c.bf16 %v457, %v456
        %s466 = scalar_lea.vmem %s2, 8
        %v467 = vld [vmem:[%s466] sm:$0xf]
        %v468 = vld [vmem:[%s466 + $0x4] sm:$0xf]
        %v471 = vunpack.c.l.b16 %v467
        %v472 = vunpack.c.l.b16 %v468
        %v473 = vpack.c.b16 %v472, %v471
        %vm475 = vcmask 130048
        %v477 = vsel %vm475, %v458, 0
        %v480 = vsel %vm475, %v459, 0
        %v483 = vsel %vm475, %v460, 0
        %v486 = vsel %vm475, %v461, 0
        %v489 = vsel %vm475, %v462, 0
        %v492 = vsel %vm475, %v463, 0
        %v495 = vsel %vm475, %v464, 0
        %v498 = vsel %vm475, %v465, 0
        %500 = vmatprep.subr.bf16.mxu0 0
        %501 = vmatpush1.bf16.msra.mxu0 %v473
        %502 = vmatprep.subr.bf16.mxu0 0
        %503 = vmatpush1.bf16.msra.mxu0 0
        %504 = vmatprep.subr.bf16.mxu0 0
        %505 = vmatpush1.bf16.msra.mxu0 0
        %506 = vmatprep.subr.bf16.mxu0 0
        %507 = vmatpush1.bf16.msra.mxu0 0
        %508 = vmatprep.subr.bf16.mxu0 0
        %509 = vmatpush1.bf16.msra.mxu0 0
        %510 = vmatprep.subr.bf16.mxu0 0
        %511 = vmatpush1.bf16.msra.mxu0 0
        %512 = vmatprep.subr.bf16.mxu0 0
        %513 = vmatpush1.bf16.msra.mxu0 0
        %514 = vmatprep.subr.bf16.mxu0 0
        %515 = vmatpush1.bf16.msra.mxu0 0
        %516 = vmatprep.subr.bf16.mxu0 0
        %517 = vmatpush1.bf16.msra.mxu0 0
        %518 = vmatprep.subr.bf16.mxu0 0
        %519 = vmatpush1.bf16.msra.mxu0 0
        %520 = vmatprep.subr.bf16.mxu0 0
        %521 = vmatpush1.bf16.msra.mxu0 0
        %522 = vmatprep.subr.bf16.mxu0 0
        %523 = vmatpush1.bf16.msra.mxu0 0
        %524 = vmatprep.subr.bf16.mxu0 0
        %525 = vmatpush1.bf16.msra.mxu0 0
        %526 = vmatprep.subr.bf16.mxu0 0
        %527 = vmatpush1.bf16.msra.mxu0 0
        %528 = vmatprep.subr.bf16.mxu0 0
        %529 = vmatpush1.bf16.msra.mxu0 0
        %530 = vmatprep.subr.bf16.mxu0 0
        %531 = vmatpush1.bf16.msra.mxu0 0
        %532 = vmatprep.mubr.bf16.mxu0 0
        %533 = vmatmul.mubr.bf16.gmra.mrb[0].mxu0 %v477
        %v534 = vpop.f32.mrb[0].mxu0
        %v535 = vadd.f32 0.0, %v534
        %v536 = vpop.f32.mrb[0].mxu0
        %v537 = vpop.f32.mrb[0].mxu0
        %v538 = vadd.f32 0.0, %v537
        %v539 = vpop.f32.mrb[0].mxu0
        %540 = vmatprep.mubr.bf16.mxu0 0
        %541 = vmatmul.mubr.bf16.gmra.mrb[0].mxu0 %v480
        %v542 = vpop.f32.mrb[0].mxu0
        %v543 = vadd.f32 0.0, %v542
        %v544 = vpop.f32.mrb[0].mxu0
        %v545 = vpop.f32.mrb[0].mxu0
        %v546 = vadd.f32 0.0, %v545
        %v547 = vpop.f32.mrb[0].mxu0
        %548 = vmatprep.mubr.bf16.mxu0 0
        %549 = vmatmul.mubr.bf16.gmra.mrb[0].mxu0 %v483
        %v550 = vpop.f32.mrb[0].mxu0
        %v551 = vadd.f32 0.0, %v550
        %v552 = vpop.f32.mrb[0].mxu0
        %v553 = vpop.f32.mrb[0].mxu0
        %v554 = vadd.f32 0.0, %v553
        %v555 = vpop.f32.mrb[0].mxu0
        %556 = vmatprep.mubr.bf16.mxu0 0
        %557 = vmatmul.mubr.bf16.gmra.mrb[0].mxu0 %v486
        %v558 = vpop.f32.mrb[0].mxu0
        %v559 = vadd.f32 0.0, %v558
        %v560 = vpop.f32.mrb[0].mxu0
        %v561 = vpop.f32.mrb[0].mxu0
        %v562 = vadd.f32 0.0, %v561
        %v563 = vpop.f32.mrb[0].mxu0
        %564 = vmatprep.mubr.bf16.mxu0 0
        %565 = vmatmul.mubr.bf16.gmra.mrb[0].mxu0 %v489
        %v566 = vpop.f32.mrb[0].mxu0
        %v567 = vadd.f32 0.0, %v566
        %v568 = vpop.f32.mrb[0].mxu0
        %v569 = vpop.f32.mrb[0].mxu0
        %v570 = vadd.f32 0.0, %v569
        %v571 = vpop.f32.mrb[0].mxu0
        %572 = vmatprep.mubr.bf16.mxu0 0
        %573 = vmatmul.mubr.bf16.gmra.mrb[0].mxu0 %v492
        %v574 = vpop.f32.mrb[0].mxu0
        %v575 = vadd.f32 0.0, %v574
        %v576 = vpop.f32.mrb[0].mxu0
        %v577 = vpop.f32.mrb[0].mxu0
        %v578 = vadd.f32 0.0, %v577
        %v579 = vpop.f32.mrb[0].mxu0
        %580 = vmatprep.mubr.bf16.mxu0 0
        %581 = vmatmul.mubr.bf16.gmra.mrb[0].mxu0 %v495
        %v582 = vpop.f32.mrb[0].mxu0
        %v583 = vadd.f32 0.0, %v582
        %v584 = vpop.f32.mrb[0].mxu0
        %v585 = vpop.f32.mrb[0].mxu0
        %v586 = vadd.f32 0.0, %v585
        %v587 = vpop.f32.mrb[0].mxu0
        %588 = vmatprep.mubr.bf16.mxu0 0
        %589 = vmatmul.mubr.bf16.gmra.mrb[0].mxu0 %v498
        %v590 = vpop.f32.mrb[0].mxu0
        %v591 = vadd.f32 0.0, %v590
        %v592 = vpop.f32.mrb[0].mxu0
        %v593 = vpop.f32.mrb[0].mxu0
        %v594 = vadd.f32 0.0, %v593
        %v595 = vpop.f32.mrb[0].mxu0
        %596 = vdwg.mxu0
        %v599 = vunpack.c.l.b16 %v440
        %v600 = vunpack.c.l.b16 %v441
        %v601 = vpack.c.b16 %v600, %v599
        %v604 = vsel %vm475, %v432, 0
        %v607 = vsel %vm475, %v433, 0
        %v610 = vsel %vm475, %v434, 0
        %v613 = vsel %vm475, %v435, 0
        %v616 = vsel %vm475, %v436, 0
        %v619 = vsel %vm475, %v437, 0
        %v622 = vsel %vm475, %v438, 0
        %v625 = vsel %vm475, %v439, 0
        %627 = vmatprep.subr.bf16.mxu0 0
        %628 = vmatpush1.bf16.msra.mxu0 %v601
        %629 = vmatprep.subr.bf16.mxu0 0
        %630 = vmatpush1.bf16.msra.mxu0 0
        %631 = vmatprep.subr.bf16.mxu0 0
        %632 = vmatpush1.bf16.msra.mxu0 0
        %633 = vmatprep.subr.bf16.mxu0 0
        %634 = vmatpush1.bf16.msra.mxu0 0
        %635 = vmatprep.subr.bf16.mxu0 0
        %636 = vmatpush1.bf16.msra.mxu0 0
        %637 = vmatprep.subr.bf16.mxu0 0
        %638 = vmatpush1.bf16.msra.mxu0 0
        %639 = vmatprep.subr.bf16.mxu0 0
        %640 = vmatpush1.bf16.msra.mxu0 0
        %641 = vmatprep.subr.bf16.mxu0 0
        %642 = vmatpush1.bf16.msra.mxu0 0
        %643 = vmatprep.subr.bf16.mxu0 0
        %644 = vmatpush1.bf16.msra.mxu0 0
        %645 = vmatprep.subr.bf16.mxu0 0
        %646 = vmatpush1.bf16.msra.mxu0 0
        %647 = vmatprep.subr.bf16.mxu0 0
        %648 = vmatpush1.bf16.msra.mxu0 0
        %649 = vmatprep.subr.bf16.mxu0 0
        %650 = vmatpush1.bf16.msra.mxu0 0
        %651 = vmatprep.subr.bf16.mxu0 0
        %652 = vmatpush1.bf16.msra.mxu0 0
        %653 = vmatprep.subr.bf16.mxu0 0
        %654 = vmatpush1.bf16.msra.mxu0 0
        %655 = vmatprep.subr.bf16.mxu0 0
        %656 = vmatpush1.bf16.msra.mxu0 0
        %657 = vmatprep.subr.bf16.mxu0 0
        %658 = vmatpush1.bf16.msra.mxu0 0
        %659 = vmatprep.mubr.bf16.mxu0 0
        %660 = vmatmul.mubr.bf16.gmra.mrb[0].mxu0 %v604
        %v661 = vpop.f32.mrb[0].mxu0
        %v662 = vadd.f32 %v535, %v661
        %v663 = vpop.f32.mrb[0].mxu0
        %v664 = vpop.f32.mrb[0].mxu0
        %v665 = vadd.f32 %v538, %v664
        %v666 = vpop.f32.mrb[0].mxu0
        %667 = vmatprep.mubr.bf16.mxu0 0
        %668 = vmatmul.mubr.bf16.gmra.mrb[0].mxu0 %v607
        %v669 = vpop.f32.mrb[0].mxu0
        %v670 = vadd.f32 %v543, %v669
        %v671 = vpop.f32.mrb[0].mxu0
        %v672 = vpop.f32.mrb[0].mxu0
        %v673 = vadd.f32 %v546, %v672
        %v674 = vpop.f32.mrb[0].mxu0
        %675 = vmatprep.mubr.bf16.mxu0 0
        %676 = vmatmul.mubr.bf16.gmra.mrb[0].mxu0 %v610
        %v677 = vpop.f32.mrb[0].mxu0
        %v678 = vadd.f32 %v551, %v677
        %v679 = vpop.f32.mrb[0].mxu0
        %v680 = vpop.f32.mrb[0].mxu0
        %v681 = vadd.f32 %v554, %v680
        %v682 = vpop.f32.mrb[0].mxu0
        %683 = vmatprep.mubr.bf16.mxu0 0
        %684 = vmatmul.mubr.bf16.gmra.mrb[0].mxu0 %v613
        %v685 = vpop.f32.mrb[0].mxu0
        %v686 = vadd.f32 %v559, %v685
        %v687 = vpop.f32.mrb[0].mxu0
        %v688 = vpop.f32.mrb[0].mxu0
        %v689 = vadd.f32 %v562, %v688
        %v690 = vpop.f32.mrb[0].mxu0
        %691 = vmatprep.mubr.bf16.mxu0 0
        %692 = vmatmul.mubr.bf16.gmra.mrb[0].mxu0 %v616
        %v693 = vpop.f32.mrb[0].mxu0
        %v694 = vadd.f32 %v567, %v693
        %v695 = vpop.f32.mrb[0].mxu0
        %v696 = vpop.f32.mrb[0].mxu0
        %v697 = vadd.f32 %v570, %v696
        %v698 = vpop.f32.mrb[0].mxu0
        %699 = vmatprep.mubr.bf16.mxu0 0
        %700 = vmatmul.mubr.bf16.gmra.mrb[0].mxu0 %v619
        %v701 = vpop.f32.mrb[0].mxu0
        %v702 = vadd.f32 %v575, %v701
        %v703 = vpop.f32.mrb[0].mxu0
        %v704 = vpop.f32.mrb[0].mxu0
        %v705 = vadd.f32 %v578, %v704
        %v706 = vpop.f32.mrb[0].mxu0
        %707 = vmatprep.mubr.bf16.mxu0 0
        %708 = vmatmul.mubr.bf16.gmra.mrb[0].mxu0 %v622
        %v709 = vpop.f32.mrb[0].mxu0
        %v710 = vadd.f32 %v583, %v709
        %v711 = vpop.f32.mrb[0].mxu0
        %v712 = vpop.f32.mrb[0].mxu0
        %v713 = vadd.f32 %v586, %v712
        %v714 = vpop.f32.mrb[0].mxu0
        %715 = vmatprep.mubr.bf16.mxu0 0
        %716 = vmatmul.mubr.bf16.gmra.mrb[0].mxu0 %v625
        %v717 = vpop.f32.mrb[0].mxu0
        %v718 = vadd.f32 %v591, %v717
        %v719 = vpop.f32.mrb[0].mxu0
        %v720 = vpop.f32.mrb[0].mxu0
        %v721 = vadd.f32 %v594, %v720
        %v722 = vpop.f32.mrb[0].mxu0
        %723 = vdwg.mxu0
        %v724 = vld [vmem:[%s412 + $0x2] sm:$0xff]
        %v725 = vld [vmem:[%s412 + $0xa] sm:$0xff]
        %v726 = vld [vmem:[%s412 + $0x12] sm:$0xff]
        %v727 = vld [vmem:[%s412 + $0x1a] sm:$0xff]
        %v728 = vld [vmem:[%s412 + $0x22] sm:$0xff]
        %v729 = vld [vmem:[%s412 + $0x2a] sm:$0xff]
        %v730 = vld [vmem:[%s412 + $0x32] sm:$0xff]
        %v731 = vld [vmem:[%s412 + $0x3a] sm:$0xff]
        %v732 = vld [vmem:[%s412 + $0x42] sm:$0xff]
        %v733 = vld [vmem:[%s412 + $0x4a] sm:$0xff]
        %v734 = vld [vmem:[%s412 + $0x52] sm:$0xff]
        %v735 = vld [vmem:[%s412 + $0x5a] sm:$0xff]
        %v736 = vld [vmem:[%s412 + $0x62] sm:$0xff]
        %v737 = vld [vmem:[%s412 + $0x6a] sm:$0xff]
        %v738 = vld [vmem:[%s412 + $0x72] sm:$0xff]
        %v739 = vld [vmem:[%s412 + $0x7a] sm:$0x3f]
        %v740 = vpack.c.bf16 %v725, %v724
        %v741 = vpack.c.bf16 %v727, %v726
        %v742 = vpack.c.bf16 %v729, %v728
        %v743 = vpack.c.bf16 %v731, %v730
        %v744 = vpack.c.bf16 %v733, %v732
        %v745 = vpack.c.bf16 %v735, %v734
        %v746 = vpack.c.bf16 %v737, %v736
        %v747 = vpack.c.bf16 %v739, %v738
        %s748 = scalar_lea.vmem %s2, 16
        %v749 = vld [vmem:[%s748] sm:$0xf]
        %v750 = vld [vmem:[%s748 + $0x4] sm:$0xf]
        %v753 = vunpack.c.l.b16 %v749
        %v754 = vunpack.c.l.b16 %v750
        %v755 = vpack.c.b16 %v754, %v753
        %v758 = vsel %vm475, %v740, 0
        %v761 = vsel %vm475, %v741, 0
        %v764 = vsel %vm475, %v742, 0
        %v767 = vsel %vm475, %v743, 0
        %v770 = vsel %vm475, %v744, 0
        %v773 = vsel %vm475, %v745, 0
        %v776 = vsel %vm475, %v746, 0
        %v779 = vsel %vm475, %v747, 0
        %781 = vmatprep.subr.bf16.mxu0 0
        %782 = vmatpush1.bf16.msra.mxu0 %v755
        %783 = vmatprep.subr.bf16.mxu0 0
        %784 = vmatpush1.bf16.msra.mxu0 0
        %785 = vmatprep.subr.bf16.mxu0 0
        %786 = vmatpush1.bf16.msra.mxu0 0
        %787 = vmatprep.subr.bf16.mxu0 0
        %788 = vmatpush1.bf16.msra.mxu0 0
        %789 = vmatprep.subr.bf16.mxu0 0
        %790 = vmatpush1.bf16.msra.mxu0 0
        %791 = vmatprep.subr.bf16.mxu0 0
        %792 = vmatpush1.bf16.msra.mxu0 0
        %793 = vmatprep.subr.bf16.mxu0 0
        %794 = vmatpush1.bf16.msra.mxu0 0
        %795 = vmatprep.subr.bf16.mxu0 0
        %796 = vmatpush1.bf16.msra.mxu0 0
        %797 = vmatprep.subr.bf16.mxu0 0
        %798 = vmatpush1.bf16.msra.mxu0 0
        %799 = vmatprep.subr.bf16.mxu0 0
        %800 = vmatpush1.bf16.msra.mxu0 0
        %801 = vmatprep.subr.bf16.mxu0 0
        %802 = vmatpush1.bf16.msra.mxu0 0
        %803 = vmatprep.subr.bf16.mxu0 0
        %804 = vmatpush1.bf16.msra.mxu0 0
        %805 = vmatprep.subr.bf16.mxu0 0
        %806 = vmatpush1.bf16.msra.mxu0 0
        %807 = vmatprep.subr.bf16.mxu0 0
        %808 = vmatpush1.bf16.msra.mxu0 0
        %809 = vmatprep.subr.bf16.mxu0 0
        %810 = vmatpush1.bf16.msra.mxu0 0
        %811 = vmatprep.subr.bf16.mxu0 0
        %812 = vmatpush1.bf16.msra.mxu0 0
        %813 = vmatprep.mubr.bf16.mxu0 0
        %814 = vmatmul.mubr.bf16.gmra.mrb[0].mxu0 %v758
        %v815 = vpop.f32.mrb[0].mxu0
        %v816 = vadd.f32 0.0, %v815
        %v817 = vpop.f32.mrb[0].mxu0
        %v818 = vpop.f32.mrb[0].mxu0
        %v819 = vadd.f32 0.0, %v818
        %v820 = vpop.f32.mrb[0].mxu0
        %821 = vmatprep.mubr.bf16.mxu0 0
        %822 = vmatmul.mubr.bf16.gmra.mrb[0].mxu0 %v761
        %v823 = vpop.f32.mrb[0].mxu0
        %v824 = vadd.f32 0.0, %v823
        %v825 = vpop.f32.mrb[0].mxu0
        %v826 = vpop.f32.mrb[0].mxu0
        %v827 = vadd.f32 0.0, %v826
        %v828 = vpop.f32.mrb[0].mxu0
        %829 = vmatprep.mubr.bf16.mxu0 0
        %830 = vmatmul.mubr.bf16.gmra.mrb[0].mxu0 %v764
        %v831 = vpop.f32.mrb[0].mxu0
        %v832 = vadd.f32 0.0, %v831
        %v833 = vpop.f32.mrb[0].mxu0
        %v834 = vpop.f32.mrb[0].mxu0
        %v835 = vadd.f32 0.0, %v834
        %v836 = vpop.f32.mrb[0].mxu0
        %837 = vmatprep.mubr.bf16.mxu0 0
        %838 = vmatmul.mubr.bf16.gmra.mrb[0].mxu0 %v767
        %v839 = vpop.f32.mrb[0].mxu0
        %v840 = vadd.f32 0.0, %v839
        %v841 = vpop.f32.mrb[0].mxu0
        %v842 = vpop.f32.mrb[0].mxu0
        %v843 = vadd.f32 0.0, %v842
        %v844 = vpop.f32.mrb[0].mxu0
        %845 = vmatprep.mubr.bf16.mxu0 0
        %846 = vmatmul.mubr.bf16.gmra.mrb[0].mxu0 %v770
        %v847 = vpop.f32.mrb[0].mxu0
        %v848 = vadd.f32 0.0, %v847
        %v849 = vpop.f32.mrb[0].mxu0
        %v850 = vpop.f32.mrb[0].mxu0
        %v851 = vadd.f32 0.0, %v850
        %v852 = vpop.f32.mrb[0].mxu0
        %853 = vmatprep.mubr.bf16.mxu0 0
        %854 = vmatmul.mubr.bf16.gmra.mrb[0].mxu0 %v773
        %v855 = vpop.f32.mrb[0].mxu0
        %v856 = vadd.f32 0.0, %v855
        %v857 = vpop.f32.mrb[0].mxu0
        %v858 = vpop.f32.mrb[0].mxu0
        %v859 = vadd.f32 0.0, %v858
        %v860 = vpop.f32.mrb[0].mxu0
        %861 = vmatprep.mubr.bf16.mxu0 0
        %862 = vmatmul.mubr.bf16.gmra.mrb[0].mxu0 %v776
        %v863 = vpop.f32.mrb[0].mxu0
        %v864 = vadd.f32 0.0, %v863
        %v865 = vpop.f32.mrb[0].mxu0
        %v866 = vpop.f32.mrb[0].mxu0
        %v867 = vadd.f32 0.0, %v866
        %v868 = vpop.f32.mrb[0].mxu0
        %869 = vmatprep.mubr.bf16.mxu0 0
        %870 = vmatmul.mubr.bf16.gmra.mrb[0].mxu0 %v779
        %v871 = vpop.f32.mrb[0].mxu0
        %v872 = vadd.f32 0.0, %v871
        %v873 = vpop.f32.mrb[0].mxu0
        %v874 = vpop.f32.mrb[0].mxu0
        %v875 = vadd.f32 0.0, %v874
        %v876 = vpop.f32.mrb[0].mxu0
        %877 = vdwg.mxu0
        %v878 = vadd.f32 %v662, %v816
        %v879 = vadd.f32 %v665, %v819
        %v880 = vadd.f32 %v670, %v824
        %v881 = vadd.f32 %v673, %v827
        %v882 = vadd.f32 %v678, %v832
        %v883 = vadd.f32 %v681, %v835
        %v884 = vadd.f32 %v686, %v840
        %v885 = vadd.f32 %v689, %v843
        %v886 = vadd.f32 %v694, %v848
        %v887 = vadd.f32 %v697, %v851
        %v888 = vadd.f32 %v702, %v856
        %v889 = vadd.f32 %v705, %v859
        %v890 = vadd.f32 %v710, %v864
        %v891 = vadd.f32 %v713, %v867
        %v892 = vadd.f32 %v718, %v872
        %v893 = vadd.f32 %v721, %v875
        %v894 = vld [vmem:[%s3] sm:$0x1]
        %v896 = vlaneseq
        %v897 = vshrl.u32 %v896, 7
        %v898 = vsub.s32 0, %v897
        %v899 = vrot.slane %v894, %v898
        %v901 = vadd.f32 %v878, %v899
        %v902 = vadd.f32 %v879, %v899
        %v903 = vadd.f32 %v880, %v899
        %v904 = vadd.f32 %v881, %v899
        %v905 = vadd.f32 %v882, %v899
        %v906 = vadd.f32 %v883, %v899
        %v907 = vadd.f32 %v884, %v899
        %v908 = vadd.f32 %v885, %v899
        %v909 = vadd.f32 %v886, %v899
        %v910 = vadd.f32 %v887, %v899
        %v911 = vadd.f32 %v888, %v899
        %v912 = vadd.f32 %v889, %v899
        %v913 = vadd.f32 %v890, %v899
        %v914 = vadd.f32 %v891, %v899
        %v915 = vadd.f32 %v892, %v899
        %v916 = vadd.f32 %v893, %v899
        %v917 = vld [vmem:[%s1] sm:$0xff]
        %v918 = vld [vmem:[%s1 + $0x8] sm:$0xff]
        %v919 = vld [vmem:[%s1 + $0x10] sm:$0xff]
        %v920 = vld [vmem:[%s1 + $0x18] sm:$0xff]
        %v921 = vld [vmem:[%s1 + $0x20] sm:$0xff]
        %v922 = vld [vmem:[%s1 + $0x28] sm:$0xff]
        %v923 = vld [vmem:[%s1 + $0x30] sm:$0xff]
        %v924 = vld [vmem:[%s1 + $0x38] sm:$0xff]
        %v925 = vld [vmem:[%s1 + $0x40] sm:$0xff]
        %v926 = vld [vmem:[%s1 + $0x48] sm:$0xff]
        %v927 = vld [vmem:[%s1 + $0x50] sm:$0xff]
        %v928 = vld [vmem:[%s1 + $0x58] sm:$0xff]
        %v929 = vld [vmem:[%s1 + $0x60] sm:$0xff]
        %v930 = vld [vmem:[%s1 + $0x68] sm:$0xff]
        %v931 = vld [vmem:[%s1 + $0x70] sm:$0xff]
        %v932 = vld [vmem:[%s1 + $0x78] sm:$0x3f]
        %934 = vset.pattern.permute.xlu0 0
        %935 = vperm.xlu0 %934, %v917
        %v936 = vpop.permute.xlu0 %935
        %939 = vset.pattern.permute.xlu0 0
        %940 = vperm.xlu0 %939, %v918
        %v941 = vpop.permute.xlu0 %940
        %944 = vset.pattern.permute.xlu0 0
        %945 = vperm.xlu0 %944, %v919
        %v946 = vpop.permute.xlu0 %945
        %949 = vset.pattern.permute.xlu0 0
        %950 = vperm.xlu0 %949, %v920
        %v951 = vpop.permute.xlu0 %950
        %954 = vset.pattern.permute.xlu0 0
        %955 = vperm.xlu0 %954, %v921
        %v956 = vpop.permute.xlu0 %955
        %959 = vset.pattern.permute.xlu0 0
        %960 = vperm.xlu0 %959, %v922
        %v961 = vpop.permute.xlu0 %960
        %964 = vset.pattern.permute.xlu0 0
        %965 = vperm.xlu0 %964, %v923
        %v966 = vpop.permute.xlu0 %965
        %969 = vset.pattern.permute.xlu0 0
        %970 = vperm.xlu0 %969, %v924
        %v971 = vpop.permute.xlu0 %970
        %974 = vset.pattern.permute.xlu0 0
        %975 = vperm.xlu0 %974, %v925
        %v976 = vpop.permute.xlu0 %975
        %979 = vset.pattern.permute.xlu0 0
        %980 = vperm.xlu0 %979, %v926
        %v981 = vpop.permute.xlu0 %980
        %984 = vset.pattern.permute.xlu0 0
        %985 = vperm.xlu0 %984, %v927
        %v986 = vpop.permute.xlu0 %985
        %989 = vset.pattern.permute.xlu0 0
        %990 = vperm.xlu0 %989, %v928
        %v991 = vpop.permute.xlu0 %990
        %994 = vset.pattern.permute.xlu0 0
        %995 = vperm.xlu0 %994, %v929
        %v996 = vpop.permute.xlu0 %995
        %999 = vset.pattern.permute.xlu0 0
        %1000 = vperm.xlu0 %999, %v930
        %v1001 = vpop.permute.xlu0 %1000
        %1004 = vset.pattern.permute.xlu0 0
        %1005 = vperm.xlu0 %1004, %v931
        %v1006 = vpop.permute.xlu0 %1005
        %1009 = vset.pattern.permute.xlu0 0
        %1010 = vperm.xlu0 %1009, %v932
        %v1011 = vpop.permute.xlu0 %1010
        %v1013 = vmul.f32 %v901, %v936
        %v1014 = vmul.f32 %v902, %v941
        %v1015 = vmul.f32 %v903, %v946
        %v1016 = vmul.f32 %v904, %v951
        %v1017 = vmul.f32 %v905, %v956
        %v1018 = vmul.f32 %v906, %v961
        %v1019 = vmul.f32 %v907, %v966
        %v1020 = vmul.f32 %v908, %v971
        %v1021 = vmul.f32 %v909, %v976
        %v1022 = vmul.f32 %v910, %v981
        %v1023 = vmul.f32 %v911, %v986
        %v1024 = vmul.f32 %v912, %v991
        %v1025 = vmul.f32 %v913, %v996
        %v1026 = vmul.f32 %v914, %v1001
        %v1027 = vmul.f32 %v915, %v1006
        %v1028 = vmul.f32 %v916, %v1011
        %vm1029 = vcmask 254976
        %1030 = vst.msk [vmem:[#allocation2] sm:$0x3] %vm1029, 0.0
        %vm1031 = vcmask 261120
        %1032 = vst.msk [vmem:[#allocation2 + $0x2] sm:$0xff] %vm1031, %v1013
        %1033 = vst.msk [vmem:[#allocation2 + $0xa] sm:$0xff] %vm1031, %v1014
        %1034 = vst.msk [vmem:[#allocation2 + $0x12] sm:$0xff] %vm1031, %v1015
        %1035 = vst.msk [vmem:[#allocation2 + $0x1a] sm:$0xff] %vm1031, %v1016
        %1036 = vst.msk [vmem:[#allocation2 + $0x22] sm:$0xff] %vm1031, %v1017
        %1037 = vst.msk [vmem:[#allocation2 + $0x2a] sm:$0xff] %vm1031, %v1018
        %1038 = vst.msk [vmem:[#allocation2 + $0x32] sm:$0xff] %vm1031, %v1019
        %1039 = vst.msk [vmem:[#allocation2 + $0x3a] sm:$0xff] %vm1031, %v1020
        %1040 = vst.msk [vmem:[#allocation2 + $0x42] sm:$0xff] %vm1031, %v1021
        %1041 = vst.msk [vmem:[#allocation2 + $0x4a] sm:$0xff] %vm1031, %v1022
        %1042 = vst.msk [vmem:[#allocation2 + $0x52] sm:$0xff] %vm1031, %v1023
        %1043 = vst.msk [vmem:[#allocation2 + $0x5a] sm:$0xff] %vm1031, %v1024
        %1044 = vst.msk [vmem:[#allocation2 + $0x62] sm:$0xff] %vm1031, %v1025
        %1045 = vst.msk [vmem:[#allocation2 + $0x6a] sm:$0xff] %vm1031, %v1026
        %1046 = vst.msk [vmem:[#allocation2 + $0x72] sm:$0xff] %vm1031, %v1027
        %vm1047 = vcmask 259072
        %1048 = vst.msk [vmem:[#allocation2 + $0x7a] sm:$0x3f] %vm1047, %v1028
        %v1049 = vld [vmem:[#allocation2] sm:$0xff]
        %v1050 = vld [vmem:[#allocation2 + $0x8] sm:$0xff]
        %v1051 = vld [vmem:[#allocation2 + $0x10] sm:$0xff]
        %v1052 = vld [vmem:[#allocation2 + $0x18] sm:$0xff]
        %v1053 = vld [vmem:[#allocation2 + $0x20] sm:$0xff]
        %v1054 = vld [vmem:[#allocation2 + $0x28] sm:$0xff]
        %v1055 = vld [vmem:[#allocation2 + $0x30] sm:$0xff]
        %v1056 = vld [vmem:[#allocation2 + $0x38] sm:$0xff]
        %v1057 = vld [vmem:[#allocation2 + $0x40] sm:$0xff]
        %v1058 = vld [vmem:[#allocation2 + $0x48] sm:$0xff]
        %v1059 = vld [vmem:[#allocation2 + $0x50] sm:$0xff]
        %v1060 = vld [vmem:[#allocation2 + $0x58] sm:$0xff]
        %v1061 = vld [vmem:[#allocation2 + $0x60] sm:$0xff]
        %v1062 = vld [vmem:[#allocation2 + $0x68] sm:$0xff]
        %v1063 = vld [vmem:[#allocation2 + $0x70] sm:$0xff]
        %v1064 = vld [vmem:[#allocation2 + $0x78] sm:$0x3f]
        %v1065 = vpack.c.bf16 %v1050, %v1049
        %v1066 = vpack.c.bf16 %v1052, %v1051
        %v1067 = vpack.c.bf16 %v1054, %v1053
        %v1068 = vpack.c.bf16 %v1056, %v1055
        %v1069 = vpack.c.bf16 %v1058, %v1057
        %v1070 = vpack.c.bf16 %v1060, %v1059
        %v1071 = vpack.c.bf16 %v1062, %v1061
        %v1072 = vpack.c.bf16 %v1064, %v1063
        %v1073 = vld [vmem:[%s4] sm:$0xf]
        %v1074 = vld [vmem:[%s4 + $0x4] sm:$0xf]
        %v1075 = vld [vmem:[%s4 + $0x8] sm:$0xf]
        %v1076 = vld [vmem:[%s4 + $0xc] sm:$0xf]
        %v1077 = vld [vmem:[#allocation2 + $0x1] sm:$0xff]
        %v1078 = vld [vmem:[#allocation2 + $0x9] sm:$0xff]
        %v1079 = vld [vmem:[#allocation2 + $0x11] sm:$0xff]
        %v1080 = vld [vmem:[#allocation2 + $0x19] sm:$0xff]
        %v1081 = vld [vmem:[#allocation2 + $0x21] sm:$0xff]
        %v1082 = vld [vmem:[#allocation2 + $0x29] sm:$0xff]
        %v1083 = vld [vmem:[#allocation2 + $0x31] sm:$0xff]
        %v1084 = vld [vmem:[#allocation2 + $0x39] sm:$0xff]
        %v1085 = vld [vmem:[#allocation2 + $0x41] sm:$0xff]
        %v1086 = vld [vmem:[#allocation2 + $0x49] sm:$0xff]
        %v1087 = vld [vmem:[#allocation2 + $0x51] sm:$0xff]
        %v1088 = vld [vmem:[#allocation2 + $0x59] sm:$0xff]
        %v1089 = vld [vmem:[#allocation2 + $0x61] sm:$0xff]
        %v1090 = vld [vmem:[#allocation2 + $0x69] sm:$0xff]
        %v1091 = vld [vmem:[#allocation2 + $0x71] sm:$0xff]
        %v1092 = vld [vmem:[#allocation2 + $0x79] sm:$0x3f]
        %v1093 = vpack.c.bf16 %v1078, %v1077
        %v1094 = vpack.c.bf16 %v1080, %v1079
        %v1095 = vpack.c.bf16 %v1082, %v1081
        %v1096 = vpack.c.bf16 %v1084, %v1083
        %v1097 = vpack.c.bf16 %v1086, %v1085
        %v1098 = vpack.c.bf16 %v1088, %v1087
        %v1099 = vpack.c.bf16 %v1090, %v1089
        %v1100 = vpack.c.bf16 %v1092, %v1091
        %s1101 = scalar_lea.vmem %s4, 16
        %v1102 = vld [vmem:[%s1101] sm:$0xf]
        %v1103 = vld [vmem:[%s1101 + $0x4] sm:$0xf]
        %v1104 = vld [vmem:[%s1101 + $0x8] sm:$0xf]
        %v1105 = vld [vmem:[%s1101 + $0xc] sm:$0xf]
        %v1110 = vunpack.c.l.b16 %v1102
        %v1111 = vunpack.c.l.b16 %v1103
        %v1112 = vunpack.c.l.b16 %v1104
        %v1113 = vunpack.c.l.b16 %v1105
        %v1114 = vpack.c.b16 %v1111, %v1110
        %v1115 = vpack.c.b16 %v1113, %v1112
        %v1119 = vsel %vm1031, %v1093, 0
        %v1122 = vsel %vm1031, %v1094, 0
        %v1125 = vsel %vm1031, %v1095, 0
        %v1128 = vsel %vm1031, %v1096, 0
        %v1131 = vsel %vm1031, %v1097, 0
        %v1134 = vsel %vm1031, %v1098, 0
        %v1137 = vsel %vm1031, %v1099, 0
        %v1140 = vsel %vm1031, %v1100, 0
        %1142 = vmatprep.subr.bf16.mxu0 0
        %1143 = vmatpush1.bf16.msra.mxu0 %v1114
        %1144 = vmatprep.subr.bf16.mxu0 0
        %1145 = vmatpush1.bf16.msra.mxu0 %v1115
        %1146 = vmatprep.subr.bf16.mxu0 0
        %1147 = vmatpush1.bf16.msra.mxu0 0
        %1148 = vmatprep.subr.bf16.mxu0 0
        %1149 = vmatpush1.bf16.msra.mxu0 0
        %1150 = vmatprep.subr.bf16.mxu0 0
        %1151 = vmatpush1.bf16.msra.mxu0 0
        %1152 = vmatprep.subr.bf16.mxu0 0
        %1153 = vmatpush1.bf16.msra.mxu0 0
        %1154 = vmatprep.subr.bf16.mxu0 0
        %1155 = vmatpush1.bf16.msra.mxu0 0
        %1156 = vmatprep.subr.bf16.mxu0 0
        %1157 = vmatpush1.bf16.msra.mxu0 0
        %1158 = vmatprep.subr.bf16.mxu0 0
        %1159 = vmatpush1.bf16.msra.mxu0 0
        %1160 = vmatprep.subr.bf16.mxu0 0
        %1161 = vmatpush1.bf16.msra.mxu0 0
        %1162 = vmatprep.subr.bf16.mxu0 0
        %1163 = vmatpush1.bf16.msra.mxu0 0
        %1164 = vmatprep.subr.bf16.mxu0 0
        %1165 = vmatpush1.bf16.msra.mxu0 0
        %1166 = vmatprep.subr.bf16.mxu0 0
        %1167 = vmatpush1.bf16.msra.mxu0 0
        %1168 = vmatprep.subr.bf16.mxu0 0
        %1169 = vmatpush1.bf16.msra.mxu0 0
        %1170 = vmatprep.subr.bf16.mxu0 0
        %1171 = vmatpush1.bf16.msra.mxu0 0
        %1172 = vmatprep.subr.bf16.mxu0 0
        %1173 = vmatpush1.bf16.msra.mxu0 0
        %1174 = vmatprep.mubr.bf16.mxu0 0
        %1175 = vmatmul.mubr.bf16.gmra.mrb[0].mxu0 %v1119
        %v1176 = vpop.f32.mrb[0].mxu0
        %v1177 = vadd.f32 0.0, %v1176
        %v1178 = vpop.f32.mrb[0].mxu0
        %v1179 = vpop.f32.mrb[0].mxu0
        %v1180 = vadd.f32 0.0, %v1179
        %v1181 = vpop.f32.mrb[0].mxu0
        %1182 = vmatprep.mubr.bf16.mxu0 0
        %1183 = vmatmul.mubr.bf16.gmra.mrb[0].mxu0 %v1122
        %v1184 = vpop.f32.mrb[0].mxu0
        %v1185 = vadd.f32 0.0, %v1184
        %v1186 = vpop.f32.mrb[0].mxu0
        %v1187 = vpop.f32.mrb[0].mxu0
        %v1188 = vadd.f32 0.0, %v1187
        %v1189 = vpop.f32.mrb[0].mxu0
        %1190 = vmatprep.mubr.bf16.mxu0 0
        %1191 = vmatmul.mubr.bf16.gmra.mrb[0].mxu0 %v1125
        %v1192 = vpop.f32.mrb[0].mxu0
        %v1193 = vadd.f32 0.0, %v1192
        %v1194 = vpop.f32.mrb[0].mxu0
        %v1195 = vpop.f32.mrb[0].mxu0
        %v1196 = vadd.f32 0.0, %v1195
        %v1197 = vpop.f32.mrb[0].mxu0
        %1198 = vmatprep.mubr.bf16.mxu0 0
        %1199 = vmatmul.mubr.bf16.gmra.mrb[0].mxu0 %v1128
        %v1200 = vpop.f32.mrb[0].mxu0
        %v1201 = vadd.f32 0.0, %v1200
        %v1202 = vpop.f32.mrb[0].mxu0
        %v1203 = vpop.f32.mrb[0].mxu0
        %v1204 = vadd.f32 0.0, %v1203
        %v1205 = vpop.f32.mrb[0].mxu0
        %1206 = vmatprep.mubr.bf16.mxu0 0
        %1207 = vmatmul.mubr.bf16.gmra.mrb[0].mxu0 %v1131
        %v1208 = vpop.f32.mrb[0].mxu0
        %v1209 = vadd.f32 0.0, %v1208
        %v1210 = vpop.f32.mrb[0].mxu0
        %v1211 = vpop.f32.mrb[0].mxu0
        %v1212 = vadd.f32 0.0, %v1211
        %v1213 = vpop.f32.mrb[0].mxu0
        %1214 = vmatprep.mubr.bf16.mxu0 0
        %1215 = vmatmul.mubr.bf16.gmra.mrb[0].mxu0 %v1134
        %v1216 = vpop.f32.mrb[0].mxu0
        %v1217 = vadd.f32 0.0, %v1216
        %v1218 = vpop.f32.mrb[0].mxu0
        %v1219 = vpop.f32.mrb[0].mxu0
        %v1220 = vadd.f32 0.0, %v1219
        %v1221 = vpop.f32.mrb[0].mxu0
        %1222 = vmatprep.mubr.bf16.mxu0 0
        %1223 = vmatmul.mubr.bf16.gmra.mrb[0].mxu0 %v1137
        %v1224 = vpop.f32.mrb[0].mxu0
        %v1225 = vadd.f32 0.0, %v1224
        %v1226 = vpop.f32.mrb[0].mxu0
        %v1227 = vpop.f32.mrb[0].mxu0
        %v1228 = vadd.f32 0.0, %v1227
        %v1229 = vpop.f32.mrb[0].mxu0
        %1230 = vmatprep.mubr.bf16.mxu0 0
        %1231 = vmatmul.mubr.bf16.gmra.mrb[0].mxu0 %v1140
        %v1232 = vpop.f32.mrb[0].mxu0
        %v1233 = vadd.f32 0.0, %v1232
        %v1234 = vpop.f32.mrb[0].mxu0
        %v1235 = vpop.f32.mrb[0].mxu0
        %v1236 = vadd.f32 0.0, %v1235
        %v1237 = vpop.f32.mrb[0].mxu0
        %1238 = vdwg.mxu0
        %v1243 = vunpack.c.l.b16 %v1073
        %v1244 = vunpack.c.l.b16 %v1074
        %v1245 = vunpack.c.l.b16 %v1075
        %v1246 = vunpack.c.l.b16 %v1076
        %v1247 = vpack.c.b16 %v1244, %v1243
        %v1248 = vpack.c.b16 %v1246, %v1245
        %v1252 = vsel %vm1031, %v1065, 0
        %v1255 = vsel %vm1031, %v1066, 0
        %v1258 = vsel %vm1031, %v1067, 0
        %v1261 = vsel %vm1031, %v1068, 0
        %v1264 = vsel %vm1031, %v1069, 0
        %v1267 = vsel %vm1031, %v1070, 0
        %v1270 = vsel %vm1031, %v1071, 0
        %v1273 = vsel %vm1031, %v1072, 0
        %1275 = vmatprep.subr.bf16.mxu0 0
        %1276 = vmatpush1.bf16.msra.mxu0 %v1247
        %1277 = vmatprep.subr.bf16.mxu0 0
        %1278 = vmatpush1.bf16.msra.mxu0 %v1248
        %1279 = vmatprep.subr.bf16.mxu0 0
        %1280 = vmatpush1.bf16.msra.mxu0 0
        %1281 = vmatprep.subr.bf16.mxu0 0
        %1282 = vmatpush1.bf16.msra.mxu0 0
        %1283 = vmatprep.subr.bf16.mxu0 0
        %1284 = vmatpush1.bf16.msra.mxu0 0
        %1285 = vmatprep.subr.bf16.mxu0 0
        %1286 = vmatpush1.bf16.msra.mxu0 0
        %1287 = vmatprep.subr.bf16.mxu0 0
        %1288 = vmatpush1.bf16.msra.mxu0 0
        %1289 = vmatprep.subr.bf16.mxu0 0
        %1290 = vmatpush1.bf16.msra.mxu0 0
        %1291 = vmatprep.subr.bf16.mxu0 0
        %1292 = vmatpush1.bf16.msra.mxu0 0
        %1293 = vmatprep.subr.bf16.mxu0 0
        %1294 = vmatpush1.bf16.msra.mxu0 0
        %1295 = vmatprep.subr.bf16.mxu0 0
        %1296 = vmatpush1.bf16.msra.mxu0 0
        %1297 = vmatprep.subr.bf16.mxu0 0
        %1298 = vmatpush1.bf16.msra.mxu0 0
        %1299 = vmatprep.subr.bf16.mxu0 0
        %1300 = vmatpush1.bf16.msra.mxu0 0
        %1301 = vmatprep.subr.bf16.mxu0 0
        %1302 = vmatpush1.bf16.msra.mxu0 0
        %1303 = vmatprep.subr.bf16.mxu0 0
        %1304 = vmatpush1.bf16.msra.mxu0 0
        %1305 = vmatprep.subr.bf16.mxu0 0
        %1306 = vmatpush1.bf16.msra.mxu0 0
        %1307 = vmatprep.mubr.bf16.mxu0 0
        %1308 = vmatmul.mubr.bf16.gmra.mrb[0].mxu0 %v1252
        %v1309 = vpop.f32.mrb[0].mxu0
        %v1310 = vadd.f32 %v1177, %v1309
        %v1311 = vpop.f32.mrb[0].mxu0
        %v1312 = vpop.f32.mrb[0].mxu0
        %v1313 = vadd.f32 %v1180, %v1312
        %v1314 = vpop.f32.mrb[0].mxu0
        %1315 = vmatprep.mubr.bf16.mxu0 0
        %1316 = vmatmul.mubr.bf16.gmra.mrb[0].mxu0 %v1255
        %v1317 = vpop.f32.mrb[0].mxu0
        %v1318 = vadd.f32 %v1185, %v1317
        %v1319 = vpop.f32.mrb[0].mxu0
        %v1320 = vpop.f32.mrb[0].mxu0
        %v1321 = vadd.f32 %v1188, %v1320
        %v1322 = vpop.f32.mrb[0].mxu0
        %1323 = vmatprep.mubr.bf16.mxu0 0
        %1324 = vmatmul.mubr.bf16.gmra.mrb[0].mxu0 %v1258
        %v1325 = vpop.f32.mrb[0].mxu0
        %v1326 = vadd.f32 %v1193, %v1325
        %v1327 = vpop.f32.mrb[0].mxu0
        %v1328 = vpop.f32.mrb[0].mxu0
        %v1329 = vadd.f32 %v1196, %v1328
        %v1330 = vpop.f32.mrb[0].mxu0
        %1331 = vmatprep.mubr.bf16.mxu0 0
        %1332 = vmatmul.mubr.bf16.gmra.mrb[0].mxu0 %v1261
        %v1333 = vpop.f32.mrb[0].mxu0
        %v1334 = vadd.f32 %v1201, %v1333
        %v1335 = vpop.f32.mrb[0].mxu0
        %v1336 = vpop.f32.mrb[0].mxu0
        %v1337 = vadd.f32 %v1204, %v1336
        %v1338 = vpop.f32.mrb[0].mxu0
        %1339 = vmatprep.mubr.bf16.mxu0 0
        %1340 = vmatmul.mubr.bf16.gmra.mrb[0].mxu0 %v1264
        %v1341 = vpop.f32.mrb[0].mxu0
        %v1342 = vadd.f32 %v1209, %v1341
        %v1343 = vpop.f32.mrb[0].mxu0
        %v1344 = vpop.f32.mrb[0].mxu0
        %v1345 = vadd.f32 %v1212, %v1344
        %v1346 = vpop.f32.mrb[0].mxu0
        %1347 = vmatprep.mubr.bf16.mxu0 0
        %1348 = vmatmul.mubr.bf16.gmra.mrb[0].mxu0 %v1267
        %v1349 = vpop.f32.mrb[0].mxu0
        %v1350 = vadd.f32 %v1217, %v1349
        %v1351 = vpop.f32.mrb[0].mxu0
        %v1352 = vpop.f32.mrb[0].mxu0
        %v1353 = vadd.f32 %v1220, %v1352
        %v1354 = vpop.f32.mrb[0].mxu0
        %1355 = vmatprep.mubr.bf16.mxu0 0
        %1356 = vmatmul.mubr.bf16.gmra.mrb[0].mxu0 %v1270
        %v1357 = vpop.f32.mrb[0].mxu0
        %v1358 = vadd.f32 %v1225, %v1357
        %v1359 = vpop.f32.mrb[0].mxu0
        %v1360 = vpop.f32.mrb[0].mxu0
        %v1361 = vadd.f32 %v1228, %v1360
        %v1362 = vpop.f32.mrb[0].mxu0
        %1363 = vmatprep.mubr.bf16.mxu0 0
        %1364 = vmatmul.mubr.bf16.gmra.mrb[0].mxu0 %v1273
        %v1365 = vpop.f32.mrb[0].mxu0
        %v1366 = vadd.f32 %v1233, %v1365
        %v1367 = vpop.f32.mrb[0].mxu0
        %v1368 = vpop.f32.mrb[0].mxu0
        %v1369 = vadd.f32 %v1236, %v1368
        %v1370 = vpop.f32.mrb[0].mxu0
        %1371 = vdwg.mxu0
        %v1372 = vld [vmem:[#allocation2 + $0x2] sm:$0xff]
        %v1373 = vld [vmem:[#allocation2 + $0xa] sm:$0xff]
        %v1374 = vld [vmem:[#allocation2 + $0x12] sm:$0xff]
        %v1375 = vld [vmem:[#allocation2 + $0x1a] sm:$0xff]
        %v1376 = vld [vmem:[#allocation2 + $0x22] sm:$0xff]
        %v1377 = vld [vmem:[#allocation2 + $0x2a] sm:$0xff]
        %v1378 = vld [vmem:[#allocation2 + $0x32] sm:$0xff]
        %v1379 = vld [vmem:[#allocation2 + $0x3a] sm:$0xff]
        %v1380 = vld [vmem:[#allocation2 + $0x42] sm:$0xff]
        %v1381 = vld [vmem:[#allocation2 + $0x4a] sm:$0xff]
        %v1382 = vld [vmem:[#allocation2 + $0x52] sm:$0xff]
        %v1383 = vld [vmem:[#allocation2 + $0x5a] sm:$0xff]
        %v1384 = vld [vmem:[#allocation2 + $0x62] sm:$0xff]
        %v1385 = vld [vmem:[#allocation2 + $0x6a] sm:$0xff]
        %v1386 = vld [vmem:[#allocation2 + $0x72] sm:$0xff]
        %v1387 = vld [vmem:[#allocation2 + $0x7a] sm:$0x3f]
        %v1388 = vpack.c.bf16 %v1373, %v1372
        %v1389 = vpack.c.bf16 %v1375, %v1374
        %v1390 = vpack.c.bf16 %v1377, %v1376
        %v1391 = vpack.c.bf16 %v1379, %v1378
        %v1392 = vpack.c.bf16 %v1381, %v1380
        %v1393 = vpack.c.bf16 %v1383, %v1382
        %v1394 = vpack.c.bf16 %v1385, %v1384
        %v1395 = vpack.c.bf16 %v1387, %v1386
        %s1396 = scalar_lea.vmem %s4, 32
        %v1397 = vld [vmem:[%s1396] sm:$0xf]
        %v1398 = vld [vmem:[%s1396 + $0x4] sm:$0xf]
        %v1399 = vld [vmem:[%s1396 + $0x8] sm:$0xf]
        %v1400 = vld [vmem:[%s1396 + $0xc] sm:$0xf]
        %v1405 = vunpack.c.l.b16 %v1397
        %v1406 = vunpack.c.l.b16 %v1398
        %v1407 = vunpack.c.l.b16 %v1399
        %v1408 = vunpack.c.l.b16 %v1400
        %v1409 = vpack.c.b16 %v1406, %v1405
        %v1410 = vpack.c.b16 %v1408, %v1407
        %v1414 = vsel %vm1031, %v1388, 0
        %v1417 = vsel %vm1031, %v1389, 0
        %v1420 = vsel %vm1031, %v1390, 0
        %v1423 = vsel %vm1031, %v1391, 0
        %v1426 = vsel %vm1031, %v1392, 0
        %v1429 = vsel %vm1031, %v1393, 0
        %v1432 = vsel %vm1031, %v1394, 0
        %v1435 = vsel %vm1031, %v1395, 0
        %1437 = vmatprep.subr.bf16.mxu0 0
        %1438 = vmatpush1.bf16.msra.mxu0 %v1409
        %1439 = vmatprep.subr.bf16.mxu0 0
        %1440 = vmatpush1.bf16.msra.mxu0 %v1410
        %1441 = vmatprep.subr.bf16.mxu0 0
        %1442 = vmatpush1.bf16.msra.mxu0 0
        %1443 = vmatprep.subr.bf16.mxu0 0
        %1444 = vmatpush1.bf16.msra.mxu0 0
        %1445 = vmatprep.subr.bf16.mxu0 0
        %1446 = vmatpush1.bf16.msra.mxu0 0
        %1447 = vmatprep.subr.bf16.mxu0 0
        %1448 = vmatpush1.bf16.msra.mxu0 0
        %1449 = vmatprep.subr.bf16.mxu0 0
        %1450 = vmatpush1.bf16.msra.mxu0 0
        %1451 = vmatprep.subr.bf16.mxu0 0
        %1452 = vmatpush1.bf16.msra.mxu0 0
        %1453 = vmatprep.subr.bf16.mxu0 0
        %1454 = vmatpush1.bf16.msra.mxu0 0
        %1455 = vmatprep.subr.bf16.mxu0 0
        %1456 = vmatpush1.bf16.msra.mxu0 0
        %1457 = vmatprep.subr.bf16.mxu0 0
        %1458 = vmatpush1.bf16.msra.mxu0 0
        %1459 = vmatprep.subr.bf16.mxu0 0
        %1460 = vmatpush1.bf16.msra.mxu0 0
        %1461 = vmatprep.subr.bf16.mxu0 0
        %1462 = vmatpush1.bf16.msra.mxu0 0
        %1463 = vmatprep.subr.bf16.mxu0 0
        %1464 = vmatpush1.bf16.msra.mxu0 0
        %1465 = vmatprep.subr.bf16.mxu0 0
        %1466 = vmatpush1.bf16.msra.mxu0 0
        %1467 = vmatprep.subr.bf16.mxu0 0
        %1468 = vmatpush1.bf16.msra.mxu0 0
        %1469 = vmatprep.mubr.bf16.mxu0 0
        %1470 = vmatmul.mubr.bf16.gmra.mrb[0].mxu0 %v1414
        %v1471 = vpop.f32.mrb[0].mxu0
        %v1472 = vadd.f32 0.0, %v1471
        %v1473 = vpop.f32.mrb[0].mxu0
        %v1474 = vpop.f32.mrb[0].mxu0
        %v1475 = vadd.f32 0.0, %v1474
        %v1476 = vpop.f32.mrb[0].mxu0
        %1477 = vmatprep.mubr.bf16.mxu0 0
        %1478 = vmatmul.mubr.bf16.gmra.mrb[0].mxu0 %v1417
        %v1479 = vpop.f32.mrb[0].mxu0
        %v1480 = vadd.f32 0.0, %v1479
        %v1481 = vpop.f32.mrb[0].mxu0
        %v1482 = vpop.f32.mrb[0].mxu0
        %v1483 = vadd.f32 0.0, %v1482
        %v1484 = vpop.f32.mrb[0].mxu0
        %1485 = vmatprep.mubr.bf16.mxu0 0
        %1486 = vmatmul.mubr.bf16.gmra.mrb[0].mxu0 %v1420
        %v1487 = vpop.f32.mrb[0].mxu0
        %v1488 = vadd.f32 0.0, %v1487
        %v1489 = vpop.f32.mrb[0].mxu0
        %v1490 = vpop.f32.mrb[0].mxu0
        %v1491 = vadd.f32 0.0, %v1490
        %v1492 = vpop.f32.mrb[0].mxu0
        %1493 = vmatprep.mubr.bf16.mxu0 0
        %1494 = vmatmul.mubr.bf16.gmra.mrb[0].mxu0 %v1423
        %v1495 = vpop.f32.mrb[0].mxu0
        %v1496 = vadd.f32 0.0, %v1495
        %v1497 = vpop.f32.mrb[0].mxu0
        %v1498 = vpop.f32.mrb[0].mxu0
        %v1499 = vadd.f32 0.0, %v1498
        %v1500 = vpop.f32.mrb[0].mxu0
        %1501 = vmatprep.mubr.bf16.mxu0 0
        %1502 = vmatmul.mubr.bf16.gmra.mrb[0].mxu0 %v1426
        %v1503 = vpop.f32.mrb[0].mxu0
        %v1504 = vadd.f32 0.0, %v1503
        %v1505 = vpop.f32.mrb[0].mxu0
        %v1506 = vpop.f32.mrb[0].mxu0
        %v1507 = vadd.f32 0.0, %v1506
        %v1508 = vpop.f32.mrb[0].mxu0
        %1509 = vmatprep.mubr.bf16.mxu0 0
        %1510 = vmatmul.mubr.bf16.gmra.mrb[0].mxu0 %v1429
        %v1511 = vpop.f32.mrb[0].mxu0
        %v1512 = vadd.f32 0.0, %v1511
        %v1513 = vpop.f32.mrb[0].mxu0
        %v1514 = vpop.f32.mrb[0].mxu0
        %v1515 = vadd.f32 0.0, %v1514
        %v1516 = vpop.f32.mrb[0].mxu0
        %1517 = vmatprep.mubr.bf16.mxu0 0
        %1518 = vmatmul.mubr.bf16.gmra.mrb[0].mxu0 %v1432
        %v1519 = vpop.f32.mrb[0].mxu0
        %v1520 = vadd.f32 0.0, %v1519
        %v1521 = vpop.f32.mrb[0].mxu0
        %v1522 = vpop.f32.mrb[0].mxu0
        %v1523 = vadd.f32 0.0, %v1522
        %v1524 = vpop.f32.mrb[0].mxu0
        %1525 = vmatprep.mubr.bf16.mxu0 0
        %1526 = vmatmul.mubr.bf16.gmra.mrb[0].mxu0 %v1435
        %v1527 = vpop.f32.mrb[0].mxu0
        %v1528 = vadd.f32 0.0, %v1527
        %v1529 = vpop.f32.mrb[0].mxu0
        %v1530 = vpop.f32.mrb[0].mxu0
        %v1531 = vadd.f32 0.0, %v1530
        %v1532 = vpop.f32.mrb[0].mxu0
        %1533 = vdwg.mxu0
        %v1534 = vadd.f32 %v1310, %v1472
        %v1535 = vadd.f32 %v1313, %v1475
        %v1536 = vadd.f32 %v1318, %v1480
        %v1537 = vadd.f32 %v1321, %v1483
        %v1538 = vadd.f32 %v1326, %v1488
        %v1539 = vadd.f32 %v1329, %v1491
        %v1540 = vadd.f32 %v1334, %v1496
        %v1541 = vadd.f32 %v1337, %v1499
        %v1542 = vadd.f32 %v1342, %v1504
        %v1543 = vadd.f32 %v1345, %v1507
        %v1544 = vadd.f32 %v1350, %v1512
        %v1545 = vadd.f32 %v1353, %v1515
        %v1546 = vadd.f32 %v1358, %v1520
        %v1547 = vadd.f32 %v1361, %v1523
        %v1548 = vadd.f32 %v1366, %v1528
        %v1549 = vadd.f32 %v1369, %v1531
        %v1550 = vld [vmem:[%s5] sm:$0x1]
        %v1552 = vlaneseq
        %v1553 = vshrl.u32 %v1552, 7
        %v1554 = vsub.s32 0, %v1553
        %v1555 = vrot.slane %v1550, %v1554
        %v1557 = vadd.f32 %v1534, %v1555
        %v1558 = vadd.f32 %v1535, %v1555
        %v1559 = vadd.f32 %v1536, %v1555
        %v1560 = vadd.f32 %v1537, %v1555
        %v1561 = vadd.f32 %v1538, %v1555
        %v1562 = vadd.f32 %v1539, %v1555
        %v1563 = vadd.f32 %v1540, %v1555
        %v1564 = vadd.f32 %v1541, %v1555
        %v1565 = vadd.f32 %v1542, %v1555
        %v1566 = vadd.f32 %v1543, %v1555
        %v1567 = vadd.f32 %v1544, %v1555
        %v1568 = vadd.f32 %v1545, %v1555
        %v1569 = vadd.f32 %v1546, %v1555
        %v1570 = vadd.f32 %v1547, %v1555
        %v1571 = vadd.f32 %v1548, %v1555
        %v1572 = vadd.f32 %v1549, %v1555
        %s1573 = scalar_lea.vmem %s1, 128
        %v1574 = vld [vmem:[%s1573] sm:$0xff]
        %v1575 = vld [vmem:[%s1573 + $0x8] sm:$0xff]
        %v1576 = vld [vmem:[%s1573 + $0x10] sm:$0xff]
        %v1577 = vld [vmem:[%s1573 + $0x18] sm:$0xff]
        %v1578 = vld [vmem:[%s1573 + $0x20] sm:$0xff]
        %v1579 = vld [vmem:[%s1573 + $0x28] sm:$0xff]
        %v1580 = vld [vmem:[%s1573 + $0x30] sm:$0xff]
        %v1581 = vld [vmem:[%s1573 + $0x38] sm:$0xff]
        %v1582 = vld [vmem:[%s1573 + $0x40] sm:$0xff]
        %v1583 = vld [vmem:[%s1573 + $0x48] sm:$0xff]
        %v1584 = vld [vmem:[%s1573 + $0x50] sm:$0xff]
        %v1585 = vld [vmem:[%s1573 + $0x58] sm:$0xff]
        %v1586 = vld [vmem:[%s1573 + $0x60] sm:$0xff]
        %v1587 = vld [vmem:[%s1573 + $0x68] sm:$0xff]
        %v1588 = vld [vmem:[%s1573 + $0x70] sm:$0xff]
        %v1589 = vld [vmem:[%s1573 + $0x78] sm:$0x3f]
        %1591 = vset.pattern.permute.xlu0 0
        %1592 = vperm.xlu0 %1591, %v1574
        %v1593 = vpop.permute.xlu0 %1592
        %1596 = vset.pattern.permute.xlu0 0
        %1597 = vperm.xlu0 %1596, %v1575
        %v1598 = vpop.permute.xlu0 %1597
        %1601 = vset.pattern.permute.xlu0 0
        %1602 = vperm.xlu0 %1601, %v1576
        %v1603 = vpop.permute.xlu0 %1602
        %1606 = vset.pattern.permute.xlu0 0
        %1607 = vperm.xlu0 %1606, %v1577
        %v1608 = vpop.permute.xlu0 %1607
        %1611 = vset.pattern.permute.xlu0 0
        %1612 = vperm.xlu0 %1611, %v1578
        %v1613 = vpop.permute.xlu0 %1612
        %1616 = vset.pattern.permute.xlu0 0
        %1617 = vperm.xlu0 %1616, %v1579
        %v1618 = vpop.permute.xlu0 %1617
        %1621 = vset.pattern.permute.xlu0 0
        %1622 = vperm.xlu0 %1621, %v1580
        %v1623 = vpop.permute.xlu0 %1622
        %1626 = vset.pattern.permute.xlu0 0
        %1627 = vperm.xlu0 %1626, %v1581
        %v1628 = vpop.permute.xlu0 %1627
        %1631 = vset.pattern.permute.xlu0 0
        %1632 = vperm.xlu0 %1631, %v1582
        %v1633 = vpop.permute.xlu0 %1632
        %1636 = vset.pattern.permute.xlu0 0
        %1637 = vperm.xlu0 %1636, %v1583
        %v1638 = vpop.permute.xlu0 %1637
        %1641 = vset.pattern.permute.xlu0 0
        %1642 = vperm.xlu0 %1641, %v1584
        %v1643 = vpop.permute.xlu0 %1642
        %1646 = vset.pattern.permute.xlu0 0
        %1647 = vperm.xlu0 %1646, %v1585
        %v1648 = vpop.permute.xlu0 %1647
        %1651 = vset.pattern.permute.xlu0 0
        %1652 = vperm.xlu0 %1651, %v1586
        %v1653 = vpop.permute.xlu0 %1652
        %1656 = vset.pattern.permute.xlu0 0
        %1657 = vperm.xlu0 %1656, %v1587
        %v1658 = vpop.permute.xlu0 %1657
        %1661 = vset.pattern.permute.xlu0 0
        %1662 = vperm.xlu0 %1661, %v1588
        %v1663 = vpop.permute.xlu0 %1662
        %1666 = vset.pattern.permute.xlu0 0
        %1667 = vperm.xlu0 %1666, %v1589
        %v1668 = vpop.permute.xlu0 %1667
        %v1670 = vmul.f32 %v1557, %v1593
        %v1671 = vmul.f32 %v1558, %v1598
        %v1672 = vmul.f32 %v1559, %v1603
        %v1673 = vmul.f32 %v1560, %v1608
        %v1674 = vmul.f32 %v1561, %v1613
        %v1675 = vmul.f32 %v1562, %v1618
        %v1676 = vmul.f32 %v1563, %v1623
        %v1677 = vmul.f32 %v1564, %v1628
        %v1678 = vmul.f32 %v1565, %v1633
        %v1679 = vmul.f32 %v1566, %v1638
        %v1680 = vmul.f32 %v1567, %v1643
        %v1681 = vmul.f32 %v1568, %v1648
        %v1682 = vmul.f32 %v1569, %v1653
        %v1683 = vmul.f32 %v1570, %v1658
        %v1684 = vmul.f32 %v1571, %v1663
        %v1685 = vmul.f32 %v1572, %v1668
        %vm1686 = vcmask 517120
        %1687 = vst.msk [vmem:[#allocation3] sm:$0x3] %vm1686, 0.0
        %vm1688 = vcmask 523264
        %1689 = vst.msk [vmem:[#allocation3 + $0x2] sm:$0xff] %vm1688, %v1670
        %1690 = vst.msk [vmem:[#allocation3 + $0xa] sm:$0xff] %vm1688, %v1671
        %1691 = vst.msk [vmem:[#allocation3 + $0x12] sm:$0xff] %vm1688, %v1672
        %1692 = vst.msk [vmem:[#allocation3 + $0x1a] sm:$0xff] %vm1688, %v1673
        %1693 = vst.msk [vmem:[#allocation3 + $0x22] sm:$0xff] %vm1688, %v1674
        %1694 = vst.msk [vmem:[#allocation3 + $0x2a] sm:$0xff] %vm1688, %v1675
        %1695 = vst.msk [vmem:[#allocation3 + $0x32] sm:$0xff] %vm1688, %v1676
        %1696 = vst.msk [vmem:[#allocation3 + $0x3a] sm:$0xff] %vm1688, %v1677
        %1697 = vst.msk [vmem:[#allocation3 + $0x42] sm:$0xff] %vm1688, %v1678
        %1698 = vst.msk [vmem:[#allocation3 + $0x4a] sm:$0xff] %vm1688, %v1679
        %1699 = vst.msk [vmem:[#allocation3 + $0x52] sm:$0xff] %vm1688, %v1680
        %1700 = vst.msk [vmem:[#allocation3 + $0x5a] sm:$0xff] %vm1688, %v1681
        %1701 = vst.msk [vmem:[#allocation3 + $0x62] sm:$0xff] %vm1688, %v1682
        %1702 = vst.msk [vmem:[#allocation3 + $0x6a] sm:$0xff] %vm1688, %v1683
        %1703 = vst.msk [vmem:[#allocation3 + $0x72] sm:$0xff] %vm1688, %v1684
        %vm1704 = vcmask 521216
        %1705 = vst.msk [vmem:[#allocation3 + $0x7a] sm:$0x3f] %vm1704, %v1685
        %v1706 = vld [vmem:[#allocation3] sm:$0xff]
        %v1707 = vld [vmem:[#allocation3 + $0x8] sm:$0xff]
        %v1708 = vld [vmem:[#allocation3 + $0x10] sm:$0xff]
        %v1709 = vld [vmem:[#allocation3 + $0x18] sm:$0xff]
        %v1710 = vld [vmem:[#allocation3 + $0x20] sm:$0xff]
        %v1711 = vld [vmem:[#allocation3 + $0x28] sm:$0xff]
        %v1712 = vld [vmem:[#allocation3 + $0x30] sm:$0xff]
        %v1713 = vld [vmem:[#allocation3 + $0x38] sm:$0xff]
        %v1714 = vld [vmem:[#allocation3 + $0x40] sm:$0xff]
        %v1715 = vld [vmem:[#allocation3 + $0x48] sm:$0xff]
        %v1716 = vld [vmem:[#allocation3 + $0x50] sm:$0xff]
        %v1717 = vld [vmem:[#allocation3 + $0x58] sm:$0xff]
        %v1718 = vld [vmem:[#allocation3 + $0x60] sm:$0xff]
        %v1719 = vld [vmem:[#allocation3 + $0x68] sm:$0xff]
        %v1720 = vld [vmem:[#allocation3 + $0x70] sm:$0xff]
        %v1721 = vld [vmem:[#allocation3 + $0x78] sm:$0x3f]
        %v1722 = vpack.c.bf16 %v1707, %v1706
        %v1723 = vpack.c.bf16 %v1709, %v1708
        %v1724 = vpack.c.bf16 %v1711, %v1710
        %v1725 = vpack.c.bf16 %v1713, %v1712
        %v1726 = vpack.c.bf16 %v1715, %v1714
        %v1727 = vpack.c.bf16 %v1717, %v1716
        %v1728 = vpack.c.bf16 %v1719, %v1718
        %v1729 = vpack.c.bf16 %v1721, %v1720
        %v1730 = vld [vmem:[%s6] sm:$0xf]
        %v1731 = vld [vmem:[%s6 + $0x4] sm:$0xf]
        %v1732 = vld [vmem:[%s6 + $0x8] sm:$0xf]
        %v1733 = vld [vmem:[%s6 + $0xc] sm:$0xf]
        %v1734 = vld [vmem:[%s6 + $0x10] sm:$0xf]
        %v1735 = vld [vmem:[%s6 + $0x14] sm:$0xf]
        %v1736 = vld [vmem:[%s6 + $0x18] sm:$0xf]
        %v1737 = vld [vmem:[%s6 + $0x1c] sm:$0xf]
        %v1738 = vld [vmem:[#allocation3 + $0x1] sm:$0xff]
        %v1739 = vld [vmem:[#allocation3 + $0x9] sm:$0xff]
        %v1740 = vld [vmem:[#allocation3 + $0x11] sm:$0xff]
        %v1741 = vld [vmem:[#allocation3 + $0x19] sm:$0xff]
        %v1742 = vld [vmem:[#allocation3 + $0x21] sm:$0xff]
        %v1743 = vld [vmem:[#allocation3 + $0x29] sm:$0xff]
        %v1744 = vld [vmem:[#allocation3 + $0x31] sm:$0xff]
        %v1745 = vld [vmem:[#allocation3 + $0x39] sm:$0xff]
        %v1746 = vld [vmem:[#allocation3 + $0x41] sm:$0xff]
        %v1747 = vld [vmem:[#allocation3 + $0x49] sm:$0xff]
        %v1748 = vld [vmem:[#allocation3 + $0x51] sm:$0xff]
        %v1749 = vld [vmem:[#allocation3 + $0x59] sm:$0xff]
        %v1750 = vld [vmem:[#allocation3 + $0x61] sm:$0xff]
        %v1751 = vld [vmem:[#allocation3 + $0x69] sm:$0xff]
        %v1752 = vld [vmem:[#allocation3 + $0x71] sm:$0xff]
        %v1753 = vld [vmem:[#allocation3 + $0x79] sm:$0x3f]
        %v1754 = vpack.c.bf16 %v1739, %v1738
        %v1755 = vpack.c.bf16 %v1741, %v1740
        %v1756 = vpack.c.bf16 %v1743, %v1742
        %v1757 = vpack.c.bf16 %v1745, %v1744
        %v1758 = vpack.c.bf16 %v1747, %v1746
        %v1759 = vpack.c.bf16 %v1749, %v1748
        %v1760 = vpack.c.bf16 %v1751, %v1750
        %v1761 = vpack.c.bf16 %v1753, %v1752
        %s1762 = scalar_lea.vmem %s6, 32
        %v1763 = vld [vmem:[%s1762] sm:$0xf]
        %v1764 = vld [vmem:[%s1762 + $0x4] sm:$0xf]
        %v1765 = vld [vmem:[%s1762 + $0x8] sm:$0xf]
        %v1766 = vld [vmem:[%s1762 + $0xc] sm:$0xf]
        %v1767 = vld [vmem:[%s1762 + $0x10] sm:$0xf]
        %v1768 = vld [vmem:[%s1762 + $0x14] sm:$0xf]
        %v1769 = vld [vmem:[%s1762 + $0x18] sm:$0xf]
        %v1770 = vld [vmem:[%s1762 + $0x1c] sm:$0xf]
        %v1779 = vunpack.c.l.b16 %v1763
        %v1780 = vunpack.c.l.b16 %v1764
        %v1781 = vunpack.c.l.b16 %v1765
        %v1782 = vunpack.c.l.b16 %v1766
        %v1783 = vunpack.c.l.b16 %v1767
        %v1784 = vunpack.c.l.b16 %v1768
        %v1785 = vunpack.c.l.b16 %v1769
        %v1786 = vunpack.c.l.b16 %v1770
        %v1787 = vpack.c.b16 %v1780, %v1779
        %v1788 = vpack.c.b16 %v1782, %v1781
        %v1789 = vpack.c.b16 %v1784, %v1783
        %v1790 = vpack.c.b16 %v1786, %v1785
        %v1796 = vsel %vm1688, %v1754, 0
        %v1799 = vsel %vm1688, %v1755, 0
        %v1802 = vsel %vm1688, %v1756, 0
        %v1805 = vsel %vm1688, %v1757, 0
        %v1808 = vsel %vm1688, %v1758, 0
        %v1811 = vsel %vm1688, %v1759, 0
        %v1814 = vsel %vm1688, %v1760, 0
        %v1817 = vsel %vm1688, %v1761, 0
        %1819 = vmatprep.subr.bf16.mxu0 0
        %1820 = vmatpush1.bf16.msra.mxu0 %v1787
        %1821 = vmatprep.subr.bf16.mxu0 0
        %1822 = vmatpush1.bf16.msra.mxu0 %v1788
        %1823 = vmatprep.subr.bf16.mxu0 0
        %1824 = vmatpush1.bf16.msra.mxu0 %v1789
        %1825 = vmatprep.subr.bf16.mxu0 0
        %1826 = vmatpush1.bf16.msra.mxu0 %v1790
        %1827 = vmatprep.subr.bf16.mxu0 0
        %1828 = vmatpush1.bf16.msra.mxu0 0
        %1829 = vmatprep.subr.bf16.mxu0 0
        %1830 = vmatpush1.bf16.msra.mxu0 0
        %1831 = vmatprep.subr.bf16.mxu0 0
        %1832 = vmatpush1.bf16.msra.mxu0 0
        %1833 = vmatprep.subr.bf16.mxu0 0
        %1834 = vmatpush1.bf16.msra.mxu0 0
        %1835 = vmatprep.subr.bf16.mxu0 0
        %1836 = vmatpush1.bf16.msra.mxu0 0
        %1837 = vmatprep.subr.bf16.mxu0 0
        %1838 = vmatpush1.bf16.msra.mxu0 0
        %1839 = vmatprep.subr.bf16.mxu0 0
        %1840 = vmatpush1.bf16.msra.mxu0 0
        %1841 = vmatprep.subr.bf16.mxu0 0
        %1842 = vmatpush1.bf16.msra.mxu0 0
        %1843 = vmatprep.subr.bf16.mxu0 0
        %1844 = vmatpush1.bf16.msra.mxu0 0
        %1845 = vmatprep.subr.bf16.mxu0 0
        %1846 = vmatpush1.bf16.msra.mxu0 0
        %1847 = vmatprep.subr.bf16.mxu0 0
        %1848 = vmatpush1.bf16.msra.mxu0 0
        %1849 = vmatprep.subr.bf16.mxu0 0
        %1850 = vmatpush1.bf16.msra.mxu0 0
        %1851 = vmatprep.mubr.bf16.mxu0 0
        %1852 = vmatmul.mubr.bf16.gmra.mrb[0].mxu0 %v1796
        %v1853 = vpop.f32.mrb[0].mxu0
        %v1854 = vadd.f32 0.0, %v1853
        %v1855 = vpop.f32.mrb[0].mxu0
        %v1856 = vpop.f32.mrb[0].mxu0
        %v1857 = vadd.f32 0.0, %v1856
        %v1858 = vpop.f32.mrb[0].mxu0
        %1859 = vmatprep.mubr.bf16.mxu0 0
        %1860 = vmatmul.mubr.bf16.gmra.mrb[0].mxu0 %v1799
        %v1861 = vpop.f32.mrb[0].mxu0
        %v1862 = vadd.f32 0.0, %v1861
        %v1863 = vpop.f32.mrb[0].mxu0
        %v1864 = vpop.f32.mrb[0].mxu0
        %v1865 = vadd.f32 0.0, %v1864
        %v1866 = vpop.f32.mrb[0].mxu0
        %1867 = vmatprep.mubr.bf16.mxu0 0
        %1868 = vmatmul.mubr.bf16.gmra.mrb[0].mxu0 %v1802
        %v1869 = vpop.f32.mrb[0].mxu0
        %v1870 = vadd.f32 0.0, %v1869
        %v1871 = vpop.f32.mrb[0].mxu0
        %v1872 = vpop.f32.mrb[0].mxu0
        %v1873 = vadd.f32 0.0, %v1872
        %v1874 = vpop.f32.mrb[0].mxu0
        %1875 = vmatprep.mubr.bf16.mxu0 0
        %1876 = vmatmul.mubr.bf16.gmra.mrb[0].mxu0 %v1805
        %v1877 = vpop.f32.mrb[0].mxu0
        %v1878 = vadd.f32 0.0, %v1877
        %v1879 = vpop.f32.mrb[0].mxu0
        %v1880 = vpop.f32.mrb[0].mxu0
        %v1881 = vadd.f32 0.0, %v1880
        %v1882 = vpop.f32.mrb[0].mxu0
        %1883 = vmatprep.mubr.bf16.mxu0 0
        %1884 = vmatmul.mubr.bf16.gmra.mrb[0].mxu0 %v1808
        %v1885 = vpop.f32.mrb[0].mxu0
        %v1886 = vadd.f32 0.0, %v1885
        %v1887 = vpop.f32.mrb[0].mxu0
        %v1888 = vpop.f32.mrb[0].mxu0
        %v1889 = vadd.f32 0.0, %v1888
        %v1890 = vpop.f32.mrb[0].mxu0
        %1891 = vmatprep.mubr.bf16.mxu0 0
        %1892 = vmatmul.mubr.bf16.gmra.mrb[0].mxu0 %v1811
        %v1893 = vpop.f32.mrb[0].mxu0
        %v1894 = vadd.f32 0.0, %v1893
        %v1895 = vpop.f32.mrb[0].mxu0
        %v1896 = vpop.f32.mrb[0].mxu0
        %v1897 = vadd.f32 0.0, %v1896
        %v1898 = vpop.f32.mrb[0].mxu0
        %1899 = vmatprep.mubr.bf16.mxu0 0
        %1900 = vmatmul.mubr.bf16.gmra.mrb[0].mxu0 %v1814
        %v1901 = vpop.f32.mrb[0].mxu0
        %v1902 = vadd.f32 0.0, %v1901
        %v1903 = vpop.f32.mrb[0].mxu0
        %v1904 = vpop.f32.mrb[0].mxu0
        %v1905 = vadd.f32 0.0, %v1904
        %v1906 = vpop.f32.mrb[0].mxu0
        %1907 = vmatprep.mubr.bf16.mxu0 0
        %1908 = vmatmul.mubr.bf16.gmra.mrb[0].mxu0 %v1817
        %v1909 = vpop.f32.mrb[0].mxu0
        %v1910 = vadd.f32 0.0, %v1909
        %v1911 = vpop.f32.mrb[0].mxu0
        %v1912 = vpop.f32.mrb[0].mxu0
        %v1913 = vadd.f32 0.0, %v1912
        %v1914 = vpop.f32.mrb[0].mxu0
        %1915 = vdwg.mxu0
        %v1924 = vunpack.c.l.b16 %v1730
        %v1925 = vunpack.c.l.b16 %v1731
        %v1926 = vunpack.c.l.b16 %v1732
        %v1927 = vunpack.c.l.b16 %v1733
        %v1928 = vunpack.c.l.b16 %v1734
        %v1929 = vunpack.c.l.b16 %v1735
        %v1930 = vunpack.c.l.b16 %v1736
        %v1931 = vunpack.c.l.b16 %v1737
        %v1932 = vpack.c.b16 %v1925, %v1924
        %v1933 = vpack.c.b16 %v1927, %v1926
        %v1934 = vpack.c.b16 %v1929, %v1928
        %v1935 = vpack.c.b16 %v1931, %v1930
        %v1941 = vsel %vm1688, %v1722, 0
        %v1944 = vsel %vm1688, %v1723, 0
        %v1947 = vsel %vm1688, %v1724, 0
        %v1950 = vsel %vm1688, %v1725, 0
        %v1953 = vsel %vm1688, %v1726, 0
        %v1956 = vsel %vm1688, %v1727, 0
        %v1959 = vsel %vm1688, %v1728, 0
        %v1962 = vsel %vm1688, %v1729, 0
        %1964 = vmatprep.subr.bf16.mxu0 0
        %1965 = vmatpush1.bf16.msra.mxu0 %v1932
        %1966 = vmatprep.subr.bf16.mxu0 0
        %1967 = vmatpush1.bf16.msra.mxu0 %v1933
        %1968 = vmatprep.subr.bf16.mxu0 0
        %1969 = vmatpush1.bf16.msra.mxu0 %v1934
        %1970 = vmatprep.subr.bf16.mxu0 0
        %1971 = vmatpush1.bf16.msra.mxu0 %v1935
        %1972 = vmatprep.subr.bf16.mxu0 0
        %1973 = vmatpush1.bf16.msra.mxu0 0
        %1974 = vmatprep.subr.bf16.mxu0 0
        %1975 = vmatpush1.bf16.msra.mxu0 0
        %1976 = vmatprep.subr.bf16.mxu0 0
        %1977 = vmatpush1.bf16.msra.mxu0 0
        %1978 = vmatprep.subr.bf16.mxu0 0
        %1979 = vmatpush1.bf16.msra.mxu0 0
        %1980 = vmatprep.subr.bf16.mxu0 0
        %1981 = vmatpush1.bf16.msra.mxu0 0
        %1982 = vmatprep.subr.bf16.mxu0 0
        %1983 = vmatpush1.bf16.msra.mxu0 0
        %1984 = vmatprep.subr.bf16.mxu0 0
        %1985 = vmatpush1.bf16.msra.mxu0 0
        %1986 = vmatprep.subr.bf16.mxu0 0
        %1987 = vmatpush1.bf16.msra.mxu0 0
        %1988 = vmatprep.subr.bf16.mxu0 0
        %1989 = vmatpush1.bf16.msra.mxu0 0
        %1990 = vmatprep.subr.bf16.mxu0 0
        %1991 = vmatpush1.bf16.msra.mxu0 0
        %1992 = vmatprep.subr.bf16.mxu0 0
        %1993 = vmatpush1.bf16.msra.mxu0 0
        %1994 = vmatprep.subr.bf16.mxu0 0
        %1995 = vmatpush1.bf16.msra.mxu0 0
        %1996 = vmatprep.mubr.bf16.mxu0 0
        %1997 = vmatmul.mubr.bf16.gmra.mrb[0].mxu0 %v1941
        %v1998 = vpop.f32.mrb[0].mxu0
        %v1999 = vadd.f32 %v1854, %v1998
        %v2000 = vpop.f32.mrb[0].mxu0
        %v2001 = vpop.f32.mrb[0].mxu0
        %v2002 = vadd.f32 %v1857, %v2001
        %v2003 = vpop.f32.mrb[0].mxu0
        %2004 = vmatprep.mubr.bf16.mxu0 0
        %2005 = vmatmul.mubr.bf16.gmra.mrb[0].mxu0 %v1944
        %v2006 = vpop.f32.mrb[0].mxu0
        %v2007 = vadd.f32 %v1862, %v2006
        %v2008 = vpop.f32.mrb[0].mxu0
        %v2009 = vpop.f32.mrb[0].mxu0
        %v2010 = vadd.f32 %v1865, %v2009
        %v2011 = vpop.f32.mrb[0].mxu0
        %2012 = vmatprep.mubr.bf16.mxu0 0
        %2013 = vmatmul.mubr.bf16.gmra.mrb[0].mxu0 %v1947
        %v2014 = vpop.f32.mrb[0].mxu0
        %v2015 = vadd.f32 %v1870, %v2014
        %v2016 = vpop.f32.mrb[0].mxu0
        %v2017 = vpop.f32.mrb[0].mxu0
        %v2018 = vadd.f32 %v1873, %v2017
        %v2019 = vpop.f32.mrb[0].mxu0
        %2020 = vmatprep.mubr.bf16.mxu0 0
        %2021 = vmatmul.mubr.bf16.gmra.mrb[0].mxu0 %v1950
        %v2022 = vpop.f32.mrb[0].mxu0
        %v2023 = vadd.f32 %v1878, %v2022
        %v2024 = vpop.f32.mrb[0].mxu0
        %v2025 = vpop.f32.mrb[0].mxu0
        %v2026 = vadd.f32 %v1881, %v2025
        %v2027 = vpop.f32.mrb[0].mxu0
        %2028 = vmatprep.mubr.bf16.mxu0 0
        %2029 = vmatmul.mubr.bf16.gmra.mrb[0].mxu0 %v1953
        %v2030 = vpop.f32.mrb[0].mxu0
        %v2031 = vadd.f32 %v1886, %v2030
        %v2032 = vpop.f32.mrb[0].mxu0
        %v2033 = vpop.f32.mrb[0].mxu0
        %v2034 = vadd.f32 %v1889, %v2033
        %v2035 = vpop.f32.mrb[0].mxu0
        %2036 = vmatprep.mubr.bf16.mxu0 0
        %2037 = vmatmul.mubr.bf16.gmra.mrb[0].mxu0 %v1956
        %v2038 = vpop.f32.mrb[0].mxu0
        %v2039 = vadd.f32 %v1894, %v2038
        %v2040 = vpop.f32.mrb[0].mxu0
        %v2041 = vpop.f32.mrb[0].mxu0
        %v2042 = vadd.f32 %v1897, %v2041
        %v2043 = vpop.f32.mrb[0].mxu0
        %2044 = vmatprep.mubr.bf16.mxu0 0
        %2045 = vmatmul.mubr.bf16.gmra.mrb[0].mxu0 %v1959
        %v2046 = vpop.f32.mrb[0].mxu0
        %v2047 = vadd.f32 %v1902, %v2046
        %v2048 = vpop.f32.mrb[0].mxu0
        %v2049 = vpop.f32.mrb[0].mxu0
        %v2050 = vadd.f32 %v1905, %v2049
        %v2051 = vpop.f32.mrb[0].mxu0
        %2052 = vmatprep.mubr.bf16.mxu0 0
        %2053 = vmatmul.mubr.bf16.gmra.mrb[0].mxu0 %v1962
        %v2054 = vpop.f32.mrb[0].mxu0
        %v2055 = vadd.f32 %v1910, %v2054
        %v2056 = vpop.f32.mrb[0].mxu0
        %v2057 = vpop.f32.mrb[0].mxu0
        %v2058 = vadd.f32 %v1913, %v2057
        %v2059 = vpop.f32.mrb[0].mxu0
        %2060 = vdwg.mxu0
        %v2061 = vld [vmem:[#allocation3 + $0x2] sm:$0xff]
        %v2062 = vld [vmem:[#allocation3 + $0xa] sm:$0xff]
        %v2063 = vld [vmem:[#allocation3 + $0x12] sm:$0xff]
        %v2064 = vld [vmem:[#allocation3 + $0x1a] sm:$0xff]
        %v2065 = vld [vmem:[#allocation3 + $0x22] sm:$0xff]
        %v2066 = vld [vmem:[#allocation3 + $0x2a] sm:$0xff]
        %v2067 = vld [vmem:[#allocation3 + $0x32] sm:$0xff]
        %v2068 = vld [vmem:[#allocation3 + $0x3a] sm:$0xff]
        %v2069 = vld [vmem:[#allocation3 + $0x42] sm:$0xff]
        %v2070 = vld [vmem:[#allocation3 + $0x4a] sm:$0xff]
        %v2071 = vld [vmem:[#allocation3 + $0x52] sm:$0xff]
        %v2072 = vld [vmem:[#allocation3 + $0x5a] sm:$0xff]
        %v2073 = vld [vmem:[#allocation3 + $0x62] sm:$0xff]
        %v2074 = vld [vmem:[#allocation3 + $0x6a] sm:$0xff]
        %v2075 = vld [vmem:[#allocation3 + $0x72] sm:$0xff]
        %v2076 = vld [vmem:[#allocation3 + $0x7a] sm:$0x3f]
        %v2077 = vpack.c.bf16 %v2062, %v2061
        %v2078 = vpack.c.bf16 %v2064, %v2063
        %v2079 = vpack.c.bf16 %v2066, %v2065
        %v2080 = vpack.c.bf16 %v2068, %v2067
        %v2081 = vpack.c.bf16 %v2070, %v2069
        %v2082 = vpack.c.bf16 %v2072, %v2071
        %v2083 = vpack.c.bf16 %v2074, %v2073
        %v2084 = vpack.c.bf16 %v2076, %v2075
        %s2085 = scalar_lea.vmem %s6, 64
        %v2086 = vld [vmem:[%s2085] sm:$0xf]
        %v2087 = vld [vmem:[%s2085 + $0x4] sm:$0xf]
        %v2088 = vld [vmem:[%s2085 + $0x8] sm:$0xf]
        %v2089 = vld [vmem:[%s2085 + $0xc] sm:$0xf]
        %v2090 = vld [vmem:[%s2085 + $0x10] sm:$0xf]
        %v2091 = vld [vmem:[%s2085 + $0x14] sm:$0xf]
        %v2092 = vld [vmem:[%s2085 + $0x18] sm:$0xf]
        %v2093 = vld [vmem:[%s2085 + $0x1c] sm:$0xf]
        %v2102 = vunpack.c.l.b16 %v2086
        %v2103 = vunpack.c.l.b16 %v2087
        %v2104 = vunpack.c.l.b16 %v2088
        %v2105 = vunpack.c.l.b16 %v2089
        %v2106 = vunpack.c.l.b16 %v2090
        %v2107 = vunpack.c.l.b16 %v2091
        %v2108 = vunpack.c.l.b16 %v2092
        %v2109 = vunpack.c.l.b16 %v2093
        %v2110 = vpack.c.b16 %v2103, %v2102
        %v2111 = vpack.c.b16 %v2105, %v2104
        %v2112 = vpack.c.b16 %v2107, %v2106
        %v2113 = vpack.c.b16 %v2109, %v2108
        %v2119 = vsel %vm1688, %v2077, 0
        %v2122 = vsel %vm1688, %v2078, 0
        %v2125 = vsel %vm1688, %v2079, 0
        %v2128 = vsel %vm1688, %v2080, 0
        %v2131 = vsel %vm1688, %v2081, 0
        %v2134 = vsel %vm1688, %v2082, 0
        %v2137 = vsel %vm1688, %v2083, 0
        %v2140 = vsel %vm1688, %v2084, 0
        %2142 = vmatprep.subr.bf16.mxu0 0
        %2143 = vmatpush1.bf16.msra.mxu0 %v2110
        %2144 = vmatprep.subr.bf16.mxu0 0
        %2145 = vmatpush1.bf16.msra.mxu0 %v2111
        %2146 = vmatprep.subr.bf16.mxu0 0
        %2147 = vmatpush1.bf16.msra.mxu0 %v2112
        %2148 = vmatprep.subr.bf16.mxu0 0
        %2149 = vmatpush1.bf16.msra.mxu0 %v2113
        %2150 = vmatprep.subr.bf16.mxu0 0
        %2151 = vmatpush1.bf16.msra.mxu0 0
        %2152 = vmatprep.subr.bf16.mxu0 0
        %2153 = vmatpush1.bf16.msra.mxu0 0
        %2154 = vmatprep.subr.bf16.mxu0 0
        %2155 = vmatpush1.bf16.msra.mxu0 0
        %2156 = vmatprep.subr.bf16.mxu0 0
        %2157 = vmatpush1.bf16.msra.mxu0 0
        %2158 = vmatprep.subr.bf16.mxu0 0
        %2159 = vmatpush1.bf16.msra.mxu0 0
        %2160 = vmatprep.subr.bf16.mxu0 0
        %2161 = vmatpush1.bf16.msra.mxu0 0
        %2162 = vmatprep.subr.bf16.mxu0 0
        %2163 = vmatpush1.bf16.msra.mxu0 0
        %2164 = vmatprep.subr.bf16.mxu0 0
        %2165 = vmatpush1.bf16.msra.mxu0 0
        %2166 = vmatprep.subr.bf16.mxu0 0
        %2167 = vmatpush1.bf16.msra.mxu0 0
        %2168 = vmatprep.subr.bf16.mxu0 0
        %2169 = vmatpush1.bf16.msra.mxu0 0
        %2170 = vmatprep.subr.bf16.mxu0 0
        %2171 = vmatpush1.bf16.msra.mxu0 0
        %2172 = vmatprep.subr.bf16.mxu0 0
        %2173 = vmatpush1.bf16.msra.mxu0 0
        %2174 = vmatprep.mubr.bf16.mxu0 0
        %2175 = vmatmul.mubr.bf16.gmra.mrb[0].mxu0 %v2119
        %v2176 = vpop.f32.mrb[0].mxu0
        %v2177 = vadd.f32 0.0, %v2176
        %v2178 = vpop.f32.mrb[0].mxu0
        %v2179 = vpop.f32.mrb[0].mxu0
        %v2180 = vadd.f32 0.0, %v2179
        %v2181 = vpop.f32.mrb[0].mxu0
        %2182 = vmatprep.mubr.bf16.mxu0 0
        %2183 = vmatmul.mubr.bf16.gmra.mrb[0].mxu0 %v2122
        %v2184 = vpop.f32.mrb[0].mxu0
        %v2185 = vadd.f32 0.0, %v2184
        %v2186 = vpop.f32.mrb[0].mxu0
        %v2187 = vpop.f32.mrb[0].mxu0
        %v2188 = vadd.f32 0.0, %v2187
        %v2189 = vpop.f32.mrb[0].mxu0
        %2190 = vmatprep.mubr.bf16.mxu0 0
        %2191 = vmatmul.mubr.bf16.gmra.mrb[0].mxu0 %v2125
        %v2192 = vpop.f32.mrb[0].mxu0
        %v2193 = vadd.f32 0.0, %v2192
        %v2194 = vpop.f32.mrb[0].mxu0
        %v2195 = vpop.f32.mrb[0].mxu0
        %v2196 = vadd.f32 0.0, %v2195
        %v2197 = vpop.f32.mrb[0].mxu0
        %2198 = vmatprep.mubr.bf16.mxu0 0
        %2199 = vmatmul.mubr.bf16.gmra.mrb[0].mxu0 %v2128
        %v2200 = vpop.f32.mrb[0].mxu0
        %v2201 = vadd.f32 0.0, %v2200
        %v2202 = vpop.f32.mrb[0].mxu0
        %v2203 = vpop.f32.mrb[0].mxu0
        %v2204 = vadd.f32 0.0, %v2203
        %v2205 = vpop.f32.mrb[0].mxu0
        %2206 = vmatprep.mubr.bf16.mxu0 0
        %2207 = vmatmul.mubr.bf16.gmra.mrb[0].mxu0 %v2131
        %v2208 = vpop.f32.mrb[0].mxu0
        %v2209 = vadd.f32 0.0, %v2208
        %v2210 = vpop.f32.mrb[0].mxu0
        %v2211 = vpop.f32.mrb[0].mxu0
        %v2212 = vadd.f32 0.0, %v2211
        %v2213 = vpop.f32.mrb[0].mxu0
        %2214 = vmatprep.mubr.bf16.mxu0 0
        %2215 = vmatmul.mubr.bf16.gmra.mrb[0].mxu0 %v2134
        %v2216 = vpop.f32.mrb[0].mxu0
        %v2217 = vadd.f32 0.0, %v2216
        %v2218 = vpop.f32.mrb[0].mxu0
        %v2219 = vpop.f32.mrb[0].mxu0
        %v2220 = vadd.f32 0.0, %v2219
        %v2221 = vpop.f32.mrb[0].mxu0
        %2222 = vmatprep.mubr.bf16.mxu0 0
        %2223 = vmatmul.mubr.bf16.gmra.mrb[0].mxu0 %v2137
        %v2224 = vpop.f32.mrb[0].mxu0
        %v2225 = vadd.f32 0.0, %v2224
        %v2226 = vpop.f32.mrb[0].mxu0
        %v2227 = vpop.f32.mrb[0].mxu0
        %v2228 = vadd.f32 0.0, %v2227
        %v2229 = vpop.f32.mrb[0].mxu0
        %2230 = vmatprep.mubr.bf16.mxu0 0
        %2231 = vmatmul.mubr.bf16.gmra.mrb[0].mxu0 %v2140
        %v2232 = vpop.f32.mrb[0].mxu0
        %v2233 = vadd.f32 0.0, %v2232
        %v2234 = vpop.f32.mrb[0].mxu0
        %v2235 = vpop.f32.mrb[0].mxu0
        %v2236 = vadd.f32 0.0, %v2235
        %v2237 = vpop.f32.mrb[0].mxu0
        %2238 = vdwg.mxu0
        %v2239 = vadd.f32 %v1999, %v2177
        %v2240 = vadd.f32 %v2002, %v2180
        %v2241 = vadd.f32 %v2007, %v2185
        %v2242 = vadd.f32 %v2010, %v2188
        %v2243 = vadd.f32 %v2015, %v2193
        %v2244 = vadd.f32 %v2018, %v2196
        %v2245 = vadd.f32 %v2023, %v2201
        %v2246 = vadd.f32 %v2026, %v2204
        %v2247 = vadd.f32 %v2031, %v2209
        %v2248 = vadd.f32 %v2034, %v2212
        %v2249 = vadd.f32 %v2039, %v2217
        %v2250 = vadd.f32 %v2042, %v2220
        %v2251 = vadd.f32 %v2047, %v2225
        %v2252 = vadd.f32 %v2050, %v2228
        %v2253 = vadd.f32 %v2055, %v2233
        %v2254 = vadd.f32 %v2058, %v2236
        %v2255 = vld [vmem:[%s7] sm:$0x1]
        %v2257 = vlaneseq
        %v2258 = vshrl.u32 %v2257, 7
        %v2259 = vsub.s32 0, %v2258
        %v2260 = vrot.slane %v2255, %v2259
        %v2262 = vadd.f32 %v2239, %v2260
        %v2263 = vadd.f32 %v2240, %v2260
        %v2264 = vadd.f32 %v2241, %v2260
        %v2265 = vadd.f32 %v2242, %v2260
        %v2266 = vadd.f32 %v2243, %v2260
        %v2267 = vadd.f32 %v2244, %v2260
        %v2268 = vadd.f32 %v2245, %v2260
        %v2269 = vadd.f32 %v2246, %v2260
        %v2270 = vadd.f32 %v2247, %v2260
        %v2271 = vadd.f32 %v2248, %v2260
        %v2272 = vadd.f32 %v2249, %v2260
        %v2273 = vadd.f32 %v2250, %v2260
        %v2274 = vadd.f32 %v2251, %v2260
        %v2275 = vadd.f32 %v2252, %v2260
        %v2276 = vadd.f32 %v2253, %v2260
        %v2277 = vadd.f32 %v2254, %v2260
        %s2278 = scalar_lea.vmem %s1, 256
        %v2279 = vld [vmem:[%s2278] sm:$0xff]
        %v2280 = vld [vmem:[%s2278 + $0x8] sm:$0xff]
        %v2281 = vld [vmem:[%s2278 + $0x10] sm:$0xff]
        %v2282 = vld [vmem:[%s2278 + $0x18] sm:$0xff]
        %v2283 = vld [vmem:[%s2278 + $0x20] sm:$0xff]
        %v2284 = vld [vmem:[%s2278 + $0x28] sm:$0xff]
        %v2285 = vld [vmem:[%s2278 + $0x30] sm:$0xff]
        %v2286 = vld [vmem:[%s2278 + $0x38] sm:$0xff]
        %v2287 = vld [vmem:[%s2278 + $0x40] sm:$0xff]
        %v2288 = vld [vmem:[%s2278 + $0x48] sm:$0xff]
        %v2289 = vld [vmem:[%s2278 + $0x50] sm:$0xff]
        %v2290 = vld [vmem:[%s2278 + $0x58] sm:$0xff]
        %v2291 = vld [vmem:[%s2278 + $0x60] sm:$0xff]
        %v2292 = vld [vmem:[%s2278 + $0x68] sm:$0xff]
        %v2293 = vld [vmem:[%s2278 + $0x70] sm:$0xff]
        %v2294 = vld [vmem:[%s2278 + $0x78] sm:$0x3f]
        %2296 = vset.pattern.permute.xlu0 0
        %2297 = vperm.xlu0 %2296, %v2279
        %v2298 = vpop.permute.xlu0 %2297
        %2301 = vset.pattern.permute.xlu0 0
        %2302 = vperm.xlu0 %2301, %v2280
        %v2303 = vpop.permute.xlu0 %2302
        %2306 = vset.pattern.permute.xlu0 0
        %2307 = vperm.xlu0 %2306, %v2281
        %v2308 = vpop.permute.xlu0 %2307
        %2311 = vset.pattern.permute.xlu0 0
        %2312 = vperm.xlu0 %2311, %v2282
        %v2313 = vpop.permute.xlu0 %2312
        %2316 = vset.pattern.permute.xlu0 0
        %2317 = vperm.xlu0 %2316, %v2283
        %v2318 = vpop.permute.xlu0 %2317
        %2321 = vset.pattern.permute.xlu0 0
        %2322 = vperm.xlu0 %2321, %v2284
        %v2323 = vpop.permute.xlu0 %2322
        %2326 = vset.pattern.permute.xlu0 0
        %2327 = vperm.xlu0 %2326, %v2285
        %v2328 = vpop.permute.xlu0 %2327
        %2331 = vset.pattern.permute.xlu0 0
        %2332 = vperm.xlu0 %2331, %v2286
        %v2333 = vpop.permute.xlu0 %2332
        %2336 = vset.pattern.permute.xlu0 0
        %2337 = vperm.xlu0 %2336, %v2287
        %v2338 = vpop.permute.xlu0 %2337
        %2341 = vset.pattern.permute.xlu0 0
        %2342 = vperm.xlu0 %2341, %v2288
        %v2343 = vpop.permute.xlu0 %2342
        %2346 = vset.pattern.permute.xlu0 0
        %2347 = vperm.xlu0 %2346, %v2289
        %v2348 = vpop.permute.xlu0 %2347
        %2351 = vset.pattern.permute.xlu0 0
        %2352 = vperm.xlu0 %2351, %v2290
        %v2353 = vpop.permute.xlu0 %2352
        %2356 = vset.pattern.permute.xlu0 0
        %2357 = vperm.xlu0 %2356, %v2291
        %v2358 = vpop.permute.xlu0 %2357
        %2361 = vset.pattern.permute.xlu0 0
        %2362 = vperm.xlu0 %2361, %v2292
        %v2363 = vpop.permute.xlu0 %2362
        %2366 = vset.pattern.permute.xlu0 0
        %2367 = vperm.xlu0 %2366, %v2293
        %v2368 = vpop.permute.xlu0 %2367
        %2371 = vset.pattern.permute.xlu0 0
        %2372 = vperm.xlu0 %2371, %v2294
        %v2373 = vpop.permute.xlu0 %2372
        %v2375 = vmul.f32 %v2262, %v2298
        %v2376 = vmul.f32 %v2263, %v2303
        %v2377 = vmul.f32 %v2264, %v2308
        %v2378 = vmul.f32 %v2265, %v2313
        %v2379 = vmul.f32 %v2266, %v2318
        %v2380 = vmul.f32 %v2267, %v2323
        %v2381 = vmul.f32 %v2268, %v2328
        %v2382 = vmul.f32 %v2269, %v2333
        %v2383 = vmul.f32 %v2270, %v2338
        %v2384 = vmul.f32 %v2271, %v2343
        %v2385 = vmul.f32 %v2272, %v2348
        %v2386 = vmul.f32 %v2273, %v2353
        %v2387 = vmul.f32 %v2274, %v2358
        %v2388 = vmul.f32 %v2275, %v2363
        %v2389 = vmul.f32 %v2276, %v2368
        %v2390 = vmul.f32 %v2277, %v2373
        %2391 = vst [vmem:[#allocation4] sm:$0x3] 0.0
        %2392 = vst [vmem:[#allocation4 + $0x2] sm:$0xff] %v2375
        %2393 = vst [vmem:[#allocation4 + $0xa] sm:$0xff] %v2376
        %2394 = vst [vmem:[#allocation4 + $0x12] sm:$0xff] %v2377
        %2395 = vst [vmem:[#allocation4 + $0x1a] sm:$0xff] %v2378
        %2396 = vst [vmem:[#allocation4 + $0x22] sm:$0xff] %v2379
        %2397 = vst [vmem:[#allocation4 + $0x2a] sm:$0xff] %v2380
        %2398 = vst [vmem:[#allocation4 + $0x32] sm:$0xff] %v2381
        %2399 = vst [vmem:[#allocation4 + $0x3a] sm:$0xff] %v2382
        %2400 = vst [vmem:[#allocation4 + $0x42] sm:$0xff] %v2383
        %2401 = vst [vmem:[#allocation4 + $0x4a] sm:$0xff] %v2384
        %2402 = vst [vmem:[#allocation4 + $0x52] sm:$0xff] %v2385
        %2403 = vst [vmem:[#allocation4 + $0x5a] sm:$0xff] %v2386
        %2404 = vst [vmem:[#allocation4 + $0x62] sm:$0xff] %v2387
        %2405 = vst [vmem:[#allocation4 + $0x6a] sm:$0xff] %v2388
        %2406 = vst [vmem:[#allocation4 + $0x72] sm:$0xff] %v2389
        %2407 = vst [vmem:[#allocation4 + $0x7a] sm:$0x3f] %v2390
        %v2408 = vld [vmem:[#allocation4] sm:$0xff]
        %v2409 = vld [vmem:[#allocation4 + $0x8] sm:$0xff]
        %v2410 = vld [vmem:[#allocation4 + $0x10] sm:$0xff]
        %v2411 = vld [vmem:[#allocation4 + $0x18] sm:$0xff]
        %v2412 = vld [vmem:[#allocation4 + $0x20] sm:$0xff]
        %v2413 = vld [vmem:[#allocation4 + $0x28] sm:$0xff]
        %v2414 = vld [vmem:[#allocation4 + $0x30] sm:$0xff]
        %v2415 = vld [vmem:[#allocation4 + $0x38] sm:$0xff]
        %v2416 = vld [vmem:[#allocation4 + $0x40] sm:$0xff]
        %v2417 = vld [vmem:[#allocation4 + $0x48] sm:$0xff]
        %v2418 = vld [vmem:[#allocation4 + $0x50] sm:$0xff]
        %v2419 = vld [vmem:[#allocation4 + $0x58] sm:$0xff]
        %v2420 = vld [vmem:[#allocation4 + $0x60] sm:$0xff]
        %v2421 = vld [vmem:[#allocation4 + $0x68] sm:$0xff]
        %v2422 = vld [vmem:[#allocation4 + $0x70] sm:$0xff]
        %v2423 = vld [vmem:[#allocation4 + $0x78] sm:$0x3f]
        %v2424 = vpack.c.bf16 %v2409, %v2408
        %v2425 = vpack.c.bf16 %v2411, %v2410
        %v2426 = vpack.c.bf16 %v2413, %v2412
        %v2427 = vpack.c.bf16 %v2415, %v2414
        %v2428 = vpack.c.bf16 %v2417, %v2416
        %v2429 = vpack.c.bf16 %v2419, %v2418
        %v2430 = vpack.c.bf16 %v2421, %v2420
        %v2431 = vpack.c.bf16 %v2423, %v2422
        %v2432 = vld [vmem:[%s8] sm:$0xff]
        %v2433 = vld [vmem:[%s8 + $0x8] sm:$0xff]
        %v2434 = vld [vmem:[%s8 + $0x10] sm:$0xff]
        %v2435 = vld [vmem:[%s8 + $0x18] sm:$0xff]
        %v2436 = vld [vmem:[%s8 + $0x20] sm:$0xff]
        %v2437 = vld [vmem:[%s8 + $0x28] sm:$0xff]
        %v2438 = vld [vmem:[%s8 + $0x30] sm:$0xff]
        %v2439 = vld [vmem:[%s8 + $0x38] sm:$0xff]
        %v2440 = vld [vmem:[%s8 + $0x40] sm:$0xff]
        %v2441 = vld [vmem:[%s8 + $0x48] sm:$0xff]
        %v2442 = vld [vmem:[%s8 + $0x50] sm:$0xff]
        %v2443 = vld [vmem:[%s8 + $0x58] sm:$0xff]
        %v2444 = vld [vmem:[%s8 + $0x60] sm:$0xff]
        %v2445 = vld [vmem:[%s8 + $0x68] sm:$0xff]
        %v2446 = vld [vmem:[%s8 + $0x70] sm:$0xff]
        %v2447 = vld [vmem:[%s8 + $0x78] sm:$0xff]
        %v2448 = vld [vmem:[#allocation4 + $0x1] sm:$0xff]
        %v2449 = vld [vmem:[#allocation4 + $0x9] sm:$0xff]
        %v2450 = vld [vmem:[#allocation4 + $0x11] sm:$0xff]
        %v2451 = vld [vmem:[#allocation4 + $0x19] sm:$0xff]
        %v2452 = vld [vmem:[#allocation4 + $0x21] sm:$0xff]
        %v2453 = vld [vmem:[#allocation4 + $0x29] sm:$0xff]
        %v2454 = vld [vmem:[#allocation4 + $0x31] sm:$0xff]
        %v2455 = vld [vmem:[#allocation4 + $0x39] sm:$0xff]
        %v2456 = vld [vmem:[#allocation4 + $0x41] sm:$0xff]
        %v2457 = vld [vmem:[#allocation4 + $0x49] sm:$0xff]
        %v2458 = vld [vmem:[#allocation4 + $0x51] sm:$0xff]
        %v2459 = vld [vmem:[#allocation4 + $0x59] sm:$0xff]
        %v2460 = vld [vmem:[#allocation4 + $0x61] sm:$0xff]
        %v2461 = vld [vmem:[#allocation4 + $0x69] sm:$0xff]
        %v2462 = vld [vmem:[#allocation4 + $0x71] sm:$0xff]
        %v2463 = vld [vmem:[#allocation4 + $0x79] sm:$0x3f]
        %v2464 = vpack.c.bf16 %v2449, %v2448
        %v2465 = vpack.c.bf16 %v2451, %v2450
        %v2466 = vpack.c.bf16 %v2453, %v2452
        %v2467 = vpack.c.bf16 %v2455, %v2454
        %v2468 = vpack.c.bf16 %v2457, %v2456
        %v2469 = vpack.c.bf16 %v2459, %v2458
        %v2470 = vpack.c.bf16 %v2461, %v2460
        %v2471 = vpack.c.bf16 %v2463, %v2462
        %s2472 = scalar_lea.vmem %s8, 128
        %v2473 = vld [vmem:[%s2472] sm:$0xff]
        %v2474 = vld [vmem:[%s2472 + $0x8] sm:$0xff]
        %v2475 = vld [vmem:[%s2472 + $0x10] sm:$0xff]
        %v2476 = vld [vmem:[%s2472 + $0x18] sm:$0xff]
        %v2477 = vld [vmem:[%s2472 + $0x20] sm:$0xff]
        %v2478 = vld [vmem:[%s2472 + $0x28] sm:$0xff]
        %v2479 = vld [vmem:[%s2472 + $0x30] sm:$0xff]
        %v2480 = vld [vmem:[%s2472 + $0x38] sm:$0xff]
        %v2481 = vld [vmem:[%s2472 + $0x40] sm:$0xff]
        %v2482 = vld [vmem:[%s2472 + $0x48] sm:$0xff]
        %v2483 = vld [vmem:[%s2472 + $0x50] sm:$0xff]
        %v2484 = vld [vmem:[%s2472 + $0x58] sm:$0xff]
        %v2485 = vld [vmem:[%s2472 + $0x60] sm:$0xff]
        %v2486 = vld [vmem:[%s2472 + $0x68] sm:$0xff]
        %v2487 = vld [vmem:[%s2472 + $0x70] sm:$0xff]
        %v2488 = vld [vmem:[%s2472 + $0x78] sm:$0xff]
        %v2505 = vunpack.c.l.b16 %v2473
        %v2506 = vunpack.c.h.b16 %v2473
        %v2507 = vunpack.c.l.b16 %v2474
        %v2508 = vunpack.c.h.b16 %v2474
        %v2509 = vunpack.c.l.b16 %v2475
        %v2510 = vunpack.c.h.b16 %v2475
        %v2511 = vunpack.c.l.b16 %v2476
        %v2512 = vunpack.c.h.b16 %v2476
        %v2513 = vunpack.c.l.b16 %v2477
        %v2514 = vunpack.c.h.b16 %v2477
        %v2515 = vunpack.c.l.b16 %v2478
        %v2516 = vunpack.c.h.b16 %v2478
        %v2517 = vunpack.c.l.b16 %v2479
        %v2518 = vunpack.c.h.b16 %v2479
        %v2519 = vunpack.c.l.b16 %v2480
        %v2520 = vunpack.c.h.b16 %v2480
        %v2521 = vunpack.c.l.b16 %v2481
        %v2522 = vunpack.c.h.b16 %v2481
        %v2523 = vunpack.c.l.b16 %v2482
        %v2524 = vunpack.c.h.b16 %v2482
        %v2525 = vunpack.c.l.b16 %v2483
        %v2526 = vunpack.c.h.b16 %v2483
        %v2527 = vunpack.c.l.b16 %v2484
        %v2528 = vunpack.c.h.b16 %v2484
        %v2529 = vunpack.c.l.b16 %v2485
        %v2530 = vunpack.c.h.b16 %v2485
        %v2531 = vunpack.c.l.b16 %v2486
        %v2532 = vunpack.c.h.b16 %v2486
        %v2533 = vunpack.c.l.b16 %v2487
        %v2534 = vunpack.c.h.b16 %v2487
        %v2535 = vunpack.c.l.b16 %v2488
        %v2536 = vunpack.c.h.b16 %v2488
        %v2537 = vpack.c.b16 %v2507, %v2505
        %v2538 = vpack.c.b16 %v2508, %v2506
        %v2539 = vpack.c.b16 %v2511, %v2509
        %v2540 = vpack.c.b16 %v2512, %v2510
        %v2541 = vpack.c.b16 %v2515, %v2513
        %v2542 = vpack.c.b16 %v2516, %v2514
        %v2543 = vpack.c.b16 %v2519, %v2517
        %v2544 = vpack.c.b16 %v2520, %v2518
        %v2545 = vpack.c.b16 %v2523, %v2521
        %v2546 = vpack.c.b16 %v2524, %v2522
        %v2547 = vpack.c.b16 %v2527, %v2525
        %v2548 = vpack.c.b16 %v2528, %v2526
        %v2549 = vpack.c.b16 %v2531, %v2529
        %v2550 = vpack.c.b16 %v2532, %v2530
        %v2551 = vpack.c.b16 %v2535, %v2533
        %v2552 = vpack.c.b16 %v2536, %v2534
        %2569 = vmatprep.subr.bf16.mxu0 %v2538
        %2570 = vmatpush1.bf16.msra.mxu0 %v2537
        %2571 = vmatprep.subr.bf16.mxu0 %v2540
        %2572 = vmatpush1.bf16.msra.mxu0 %v2539
        %2573 = vmatprep.subr.bf16.mxu0 %v2542
        %2574 = vmatpush1.bf16.msra.mxu0 %v2541
        %2575 = vmatprep.subr.bf16.mxu0 %v2544
        %2576 = vmatpush1.bf16.msra.mxu0 %v2543
        %2577 = vmatprep.subr.bf16.mxu0 %v2546
        %2578 = vmatpush1.bf16.msra.mxu0 %v2545
        %2579 = vmatprep.subr.bf16.mxu0 %v2548
        %2580 = vmatpush1.bf16.msra.mxu0 %v2547
        %2581 = vmatprep.subr.bf16.mxu0 %v2550
        %2582 = vmatpush1.bf16.msra.mxu0 %v2549
        %2583 = vmatprep.subr.bf16.mxu0 %v2552
        %2584 = vmatpush1.bf16.msra.mxu0 %v2551
        %2585 = vmatprep.subr.bf16.mxu0 0
        %2586 = vmatpush1.bf16.msra.mxu0 0
        %2587 = vmatprep.subr.bf16.mxu0 0
        %2588 = vmatpush1.bf16.msra.mxu0 0
        %2589 = vmatprep.subr.bf16.mxu0 0
        %2590 = vmatpush1.bf16.msra.mxu0 0
        %2591 = vmatprep.subr.bf16.mxu0 0
        %2592 = vmatpush1.bf16.msra.mxu0 0
        %2593 = vmatprep.subr.bf16.mxu0 0
        %2594 = vmatpush1.bf16.msra.mxu0 0
        %2595 = vmatprep.subr.bf16.mxu0 0
        %2596 = vmatpush1.bf16.msra.mxu0 0
        %2597 = vmatprep.subr.bf16.mxu0 0
        %2598 = vmatpush1.bf16.msra.mxu0 0
        %2599 = vmatprep.subr.bf16.mxu0 0
        %2600 = vmatpush1.bf16.msra.mxu0 0
        %2601 = vmatprep.mubr.bf16.mxu0 0
        %2602 = vmatmul.mubr.bf16.gmra.mrb[0].mxu0 %v2464
        %v2603 = vpop.f32.mrb[0].mxu0
        %v2604 = vadd.f32 0.0, %v2603
        %v2605 = vpop.f32.mrb[0].mxu0
        %v2606 = vadd.f32 0.0, %v2605
        %v2607 = vpop.f32.mrb[0].mxu0
        %v2608 = vadd.f32 0.0, %v2607
        %v2609 = vpop.f32.mrb[0].mxu0
        %v2610 = vadd.f32 0.0, %v2609
        %2611 = vmatprep.mubr.bf16.mxu0 0
        %2612 = vmatmul.mubr.bf16.gmra.mrb[0].mxu0 %v2465
        %v2613 = vpop.f32.mrb[0].mxu0
        %v2614 = vadd.f32 0.0, %v2613
        %v2615 = vpop.f32.mrb[0].mxu0
        %v2616 = vadd.f32 0.0, %v2615
        %v2617 = vpop.f32.mrb[0].mxu0
        %v2618 = vadd.f32 0.0, %v2617
        %v2619 = vpop.f32.mrb[0].mxu0
        %v2620 = vadd.f32 0.0, %v2619
        %2621 = vmatprep.mubr.bf16.mxu0 0
        %2622 = vmatmul.mubr.bf16.gmra.mrb[0].mxu0 %v2466
        %v2623 = vpop.f32.mrb[0].mxu0
        %v2624 = vadd.f32 0.0, %v2623
        %v2625 = vpop.f32.mrb[0].mxu0
        %v2626 = vadd.f32 0.0, %v2625
        %v2627 = vpop.f32.mrb[0].mxu0
        %v2628 = vadd.f32 0.0, %v2627
        %v2629 = vpop.f32.mrb[0].mxu0
        %v2630 = vadd.f32 0.0, %v2629
        %2631 = vmatprep.mubr.bf16.mxu0 0
        %2632 = vmatmul.mubr.bf16.gmra.mrb[0].mxu0 %v2467
        %v2633 = vpop.f32.mrb[0].mxu0
        %v2634 = vadd.f32 0.0, %v2633
        %v2635 = vpop.f32.mrb[0].mxu0
        %v2636 = vadd.f32 0.0, %v2635
        %v2637 = vpop.f32.mrb[0].mxu0
        %v2638 = vadd.f32 0.0, %v2637
        %v2639 = vpop.f32.mrb[0].mxu0
        %v2640 = vadd.f32 0.0, %v2639
        %2641 = vmatprep.mubr.bf16.mxu0 0
        %2642 = vmatmul.mubr.bf16.gmra.mrb[0].mxu0 %v2468
        %v2643 = vpop.f32.mrb[0].mxu0
        %v2644 = vadd.f32 0.0, %v2643
        %v2645 = vpop.f32.mrb[0].mxu0
        %v2646 = vadd.f32 0.0, %v2645
        %v2647 = vpop.f32.mrb[0].mxu0
        %v2648 = vadd.f32 0.0, %v2647
        %v2649 = vpop.f32.mrb[0].mxu0
        %v2650 = vadd.f32 0.0, %v2649
        %2651 = vmatprep.mubr.bf16.mxu0 0
        %2652 = vmatmul.mubr.bf16.gmra.mrb[0].mxu0 %v2469
        %v2653 = vpop.f32.mrb[0].mxu0
        %v2654 = vadd.f32 0.0, %v2653
        %v2655 = vpop.f32.mrb[0].mxu0
        %v2656 = vadd.f32 0.0, %v2655
        %v2657 = vpop.f32.mrb[0].mxu0
        %v2658 = vadd.f32 0.0, %v2657
        %v2659 = vpop.f32.mrb[0].mxu0
        %v2660 = vadd.f32 0.0, %v2659
        %2661 = vmatprep.mubr.bf16.mxu0 0
        %2662 = vmatmul.mubr.bf16.gmra.mrb[0].mxu0 %v2470
        %v2663 = vpop.f32.mrb[0].mxu0
        %v2664 = vadd.f32 0.0, %v2663
        %v2665 = vpop.f32.mrb[0].mxu0
        %v2666 = vadd.f32 0.0, %v2665
        %v2667 = vpop.f32.mrb[0].mxu0
        %v2668 = vadd.f32 0.0, %v2667
        %v2669 = vpop.f32.mrb[0].mxu0
        %v2670 = vadd.f32 0.0, %v2669
        %2671 = vmatprep.mubr.bf16.mxu0 0
        %2672 = vmatmul.mubr.bf16.gmra.mrb[0].mxu0 %v2471
        %v2673 = vpop.f32.mrb[0].mxu0
        %v2674 = vadd.f32 0.0, %v2673
        %v2675 = vpop.f32.mrb[0].mxu0
        %v2676 = vadd.f32 0.0, %v2675
        %v2677 = vpop.f32.mrb[0].mxu0
        %v2678 = vadd.f32 0.0, %v2677
        %v2679 = vpop.f32.mrb[0].mxu0
        %v2680 = vadd.f32 0.0, %v2679
        %2681 = vdwg.mxu0
        %v2698 = vunpack.c.l.b16 %v2432
        %v2699 = vunpack.c.h.b16 %v2432
        %v2700 = vunpack.c.l.b16 %v2433
        %v2701 = vunpack.c.h.b16 %v2433
        %v2702 = vunpack.c.l.b16 %v2434
        %v2703 = vunpack.c.h.b16 %v2434
        %v2704 = vunpack.c.l.b16 %v2435
        %v2705 = vunpack.c.h.b16 %v2435
        %v2706 = vunpack.c.l.b16 %v2436
        %v2707 = vunpack.c.h.b16 %v2436
        %v2708 = vunpack.c.l.b16 %v2437
        %v2709 = vunpack.c.h.b16 %v2437
        %v2710 = vunpack.c.l.b16 %v2438
        %v2711 = vunpack.c.h.b16 %v2438
        %v2712 = vunpack.c.l.b16 %v2439
        %v2713 = vunpack.c.h.b16 %v2439
        %v2714 = vunpack.c.l.b16 %v2440
        %v2715 = vunpack.c.h.b16 %v2440
        %v2716 = vunpack.c.l.b16 %v2441
        %v2717 = vunpack.c.h.b16 %v2441
        %v2718 = vunpack.c.l.b16 %v2442
        %v2719 = vunpack.c.h.b16 %v2442
        %v2720 = vunpack.c.l.b16 %v2443
        %v2721 = vunpack.c.h.b16 %v2443
        %v2722 = vunpack.c.l.b16 %v2444
        %v2723 = vunpack.c.h.b16 %v2444
        %v2724 = vunpack.c.l.b16 %v2445
        %v2725 = vunpack.c.h.b16 %v2445
        %v2726 = vunpack.c.l.b16 %v2446
        %v2727 = vunpack.c.h.b16 %v2446
        %v2728 = vunpack.c.l.b16 %v2447
        %v2729 = vunpack.c.h.b16 %v2447
        %v2730 = vpack.c.b16 %v2700, %v2698
        %v2731 = vpack.c.b16 %v2701, %v2699
        %v2732 = vpack.c.b16 %v2704, %v2702
        %v2733 = vpack.c.b16 %v2705, %v2703
        %v2734 = vpack.c.b16 %v2708, %v2706
        %v2735 = vpack.c.b16 %v2709, %v2707
        %v2736 = vpack.c.b16 %v2712, %v2710
        %v2737 = vpack.c.b16 %v2713, %v2711
        %v2738 = vpack.c.b16 %v2716, %v2714
        %v2739 = vpack.c.b16 %v2717, %v2715
        %v2740 = vpack.c.b16 %v2720, %v2718
        %v2741 = vpack.c.b16 %v2721, %v2719
        %v2742 = vpack.c.b16 %v2724, %v2722
        %v2743 = vpack.c.b16 %v2725, %v2723
        %v2744 = vpack.c.b16 %v2728, %v2726
        %v2745 = vpack.c.b16 %v2729, %v2727
        %2762 = vmatprep.subr.bf16.mxu0 %v2731
        %2763 = vmatpush1.bf16.msra.mxu0 %v2730
        %2764 = vmatprep.subr.bf16.mxu0 %v2733
        %2765 = vmatpush1.bf16.msra.mxu0 %v2732
        %2766 = vmatprep.subr.bf16.mxu0 %v2735
        %2767 = vmatpush1.bf16.msra.mxu0 %v2734
        %2768 = vmatprep.subr.bf16.mxu0 %v2737
        %2769 = vmatpush1.bf16.msra.mxu0 %v2736
        %2770 = vmatprep.subr.bf16.mxu0 %v2739
        %2771 = vmatpush1.bf16.msra.mxu0 %v2738
        %2772 = vmatprep.subr.bf16.mxu0 %v2741
        %2773 = vmatpush1.bf16.msra.mxu0 %v2740
        %2774 = vmatprep.subr.bf16.mxu0 %v2743
        %2775 = vmatpush1.bf16.msra.mxu0 %v2742
        %2776 = vmatprep.subr.bf16.mxu0 %v2745
        %2777 = vmatpush1.bf16.msra.mxu0 %v2744
        %2778 = vmatprep.subr.bf16.mxu0 0
        %2779 = vmatpush1.bf16.msra.mxu0 0
        %2780 = vmatprep.subr.bf16.mxu0 0
        %2781 = vmatpush1.bf16.msra.mxu0 0
        %2782 = vmatprep.subr.bf16.mxu0 0
        %2783 = vmatpush1.bf16.msra.mxu0 0
        %2784 = vmatprep.subr.bf16.mxu0 0
        %2785 = vmatpush1.bf16.msra.mxu0 0
        %2786 = vmatprep.subr.bf16.mxu0 0
        %2787 = vmatpush1.bf16.msra.mxu0 0
        %2788 = vmatprep.subr.bf16.mxu0 0
        %2789 = vmatpush1.bf16.msra.mxu0 0
        %2790 = vmatprep.subr.bf16.mxu0 0
        %2791 = vmatpush1.bf16.msra.mxu0 0
        %2792 = vmatprep.subr.bf16.mxu0 0
        %2793 = vmatpush1.bf16.msra.mxu0 0
        %2794 = vmatprep.mubr.bf16.mxu0 0
        %2795 = vmatmul.mubr.bf16.gmra.mrb[0].mxu0 %v2424
        %v2796 = vpop.f32.mrb[0].mxu0
        %v2797 = vadd.f32 %v2604, %v2796
        %v2798 = vpop.f32.mrb[0].mxu0
        %v2799 = vadd.f32 %v2606, %v2798
        %v2800 = vpop.f32.mrb[0].mxu0
        %v2801 = vadd.f32 %v2608, %v2800
        %v2802 = vpop.f32.mrb[0].mxu0
        %v2803 = vadd.f32 %v2610, %v2802
        %2804 = vmatprep.mubr.bf16.mxu0 0
        %2805 = vmatmul.mubr.bf16.gmra.mrb[0].mxu0 %v2425
        %v2806 = vpop.f32.mrb[0].mxu0
        %v2807 = vadd.f32 %v2614, %v2806
        %v2808 = vpop.f32.mrb[0].mxu0
        %v2809 = vadd.f32 %v2616, %v2808
        %v2810 = vpop.f32.mrb[0].mxu0
        %v2811 = vadd.f32 %v2618, %v2810
        %v2812 = vpop.f32.mrb[0].mxu0
        %v2813 = vadd.f32 %v2620, %v2812
        %2814 = vmatprep.mubr.bf16.mxu0 0
        %2815 = vmatmul.mubr.bf16.gmra.mrb[0].mxu0 %v2426
        %v2816 = vpop.f32.mrb[0].mxu0
        %v2817 = vadd.f32 %v2624, %v2816
        %v2818 = vpop.f32.mrb[0].mxu0
        %v2819 = vadd.f32 %v2626, %v2818
        %v2820 = vpop.f32.mrb[0].mxu0
        %v2821 = vadd.f32 %v2628, %v2820
        %v2822 = vpop.f32.mrb[0].mxu0
        %v2823 = vadd.f32 %v2630, %v2822
        %2824 = vmatprep.mubr.bf16.mxu0 0
        %2825 = vmatmul.mubr.bf16.gmra.mrb[0].mxu0 %v2427
        %v2826 = vpop.f32.mrb[0].mxu0
        %v2827 = vadd.f32 %v2634, %v2826
        %v2828 = vpop.f32.mrb[0].mxu0
        %v2829 = vadd.f32 %v2636, %v2828
        %v2830 = vpop.f32.mrb[0].mxu0
        %v2831 = vadd.f32 %v2638, %v2830
        %v2832 = vpop.f32.mrb[0].mxu0
        %v2833 = vadd.f32 %v2640, %v2832
        %2834 = vmatprep.mubr.bf16.mxu0 0
        %2835 = vmatmul.mubr.bf16.gmra.mrb[0].mxu0 %v2428
        %v2836 = vpop.f32.mrb[0].mxu0
        %v2837 = vadd.f32 %v2644, %v2836
        %v2838 = vpop.f32.mrb[0].mxu0
        %v2839 = vadd.f32 %v2646, %v2838
        %v2840 = vpop.f32.mrb[0].mxu0
        %v2841 = vadd.f32 %v2648, %v2840
        %v2842 = vpop.f32.mrb[0].mxu0
        %v2843 = vadd.f32 %v2650, %v2842
        %2844 = vmatprep.mubr.bf16.mxu0 0
        %2845 = vmatmul.mubr.bf16.gmra.mrb[0].mxu0 %v2429
        %v2846 = vpop.f32.mrb[0].mxu0
        %v2847 = vadd.f32 %v2654, %v2846
        %v2848 = vpop.f32.mrb[0].mxu0
        %v2849 = vadd.f32 %v2656, %v2848
        %v2850 = vpop.f32.mrb[0].mxu0
        %v2851 = vadd.f32 %v2658, %v2850
        %v2852 = vpop.f32.mrb[0].mxu0
        %v2853 = vadd.f32 %v2660, %v2852
        %2854 = vmatprep.mubr.bf16.mxu0 0
        %2855 = vmatmul.mubr.bf16.gmra.mrb[0].mxu0 %v2430
        %v2856 = vpop.f32.mrb[0].mxu0
        %v2857 = vadd.f32 %v2664, %v2856
        %v2858 = vpop.f32.mrb[0].mxu0
        %v2859 = vadd.f32 %v2666, %v2858
        %v2860 = vpop.f32.mrb[0].mxu0
        %v2861 = vadd.f32 %v2668, %v2860
        %v2862 = vpop.f32.mrb[0].mxu0
        %v2863 = vadd.f32 %v2670, %v2862
        %2864 = vmatprep.mubr.bf16.mxu0 0
        %2865 = vmatmul.mubr.bf16.gmra.mrb[0].mxu0 %v2431
        %v2866 = vpop.f32.mrb[0].mxu0
        %v2867 = vadd.f32 %v2674, %v2866
        %v2868 = vpop.f32.mrb[0].mxu0
        %v2869 = vadd.f32 %v2676, %v2868
        %v2870 = vpop.f32.mrb[0].mxu0
        %v2871 = vadd.f32 %v2678, %v2870
        %v2872 = vpop.f32.mrb[0].mxu0
        %v2873 = vadd.f32 %v2680, %v2872
        %2874 = vdwg.mxu0
        %v2875 = vld [vmem:[#allocation4 + $0x2] sm:$0xff]
        %v2876 = vld [vmem:[#allocation4 + $0xa] sm:$0xff]
        %v2877 = vld [vmem:[#allocation4 + $0x12] sm:$0xff]
        %v2878 = vld [vmem:[#allocation4 + $0x1a] sm:$0xff]
        %v2879 = vld [vmem:[#allocation4 + $0x22] sm:$0xff]
        %v2880 = vld [vmem:[#allocation4 + $0x2a] sm:$0xff]
        %v2881 = vld [vmem:[#allocation4 + $0x32] sm:$0xff]
        %v2882 = vld [vmem:[#allocation4 + $0x3a] sm:$0xff]
        %v2883 = vld [vmem:[#allocation4 + $0x42] sm:$0xff]
        %v2884 = vld [vmem:[#allocation4 + $0x4a] sm:$0xff]
        %v2885 = vld [vmem:[#allocation4 + $0x52] sm:$0xff]
        %v2886 = vld [vmem:[#allocation4 + $0x5a] sm:$0xff]
        %v2887 = vld [vmem:[#allocation4 + $0x62] sm:$0xff]
        %v2888 = vld [vmem:[#allocation4 + $0x6a] sm:$0xff]
        %v2889 = vld [vmem:[#allocation4 + $0x72] sm:$0xff]
        %v2890 = vld [vmem:[#allocation4 + $0x7a] sm:$0x3f]
        %v2891 = vpack.c.bf16 %v2876, %v2875
        %v2892 = vpack.c.bf16 %v2878, %v2877
        %v2893 = vpack.c.bf16 %v2880, %v2879
        %v2894 = vpack.c.bf16 %v2882, %v2881
        %v2895 = vpack.c.bf16 %v2884, %v2883
        %v2896 = vpack.c.bf16 %v2886, %v2885
        %v2897 = vpack.c.bf16 %v2888, %v2887
        %v2898 = vpack.c.bf16 %v2890, %v2889
        %s2899 = scalar_lea.vmem %s8, 256
        %v2900 = vld [vmem:[%s2899] sm:$0xff]
        %v2901 = vld [vmem:[%s2899 + $0x8] sm:$0xff]
        %v2902 = vld [vmem:[%s2899 + $0x10] sm:$0xff]
        %v2903 = vld [vmem:[%s2899 + $0x18] sm:$0xff]
        %v2904 = vld [vmem:[%s2899 + $0x20] sm:$0xff]
        %v2905 = vld [vmem:[%s2899 + $0x28] sm:$0xff]
        %v2906 = vld [vmem:[%s2899 + $0x30] sm:$0xff]
        %v2907 = vld [vmem:[%s2899 + $0x38] sm:$0xff]
        %v2908 = vld [vmem:[%s2899 + $0x40] sm:$0xff]
        %v2909 = vld [vmem:[%s2899 + $0x48] sm:$0xff]
        %v2910 = vld [vmem:[%s2899 + $0x50] sm:$0xff]
        %v2911 = vld [vmem:[%s2899 + $0x58] sm:$0xff]
        %v2912 = vld [vmem:[%s2899 + $0x60] sm:$0xff]
        %v2913 = vld [vmem:[%s2899 + $0x68] sm:$0xff]
        %v2914 = vld [vmem:[%s2899 + $0x70] sm:$0xff]
        %v2915 = vld [vmem:[%s2899 + $0x78] sm:$0xff]
        %v2932 = vunpack.c.l.b16 %v2900
        %v2933 = vunpack.c.h.b16 %v2900
        %v2934 = vunpack.c.l.b16 %v2901
        %v2935 = vunpack.c.h.b16 %v2901
        %v2936 = vunpack.c.l.b16 %v2902
        %v2937 = vunpack.c.h.b16 %v2902
        %v2938 = vunpack.c.l.b16 %v2903
        %v2939 = vunpack.c.h.b16 %v2903
        %v2940 = vunpack.c.l.b16 %v2904
        %v2941 = vunpack.c.h.b16 %v2904
        %v2942 = vunpack.c.l.b16 %v2905
        %v2943 = vunpack.c.h.b16 %v2905
        %v2944 = vunpack.c.l.b16 %v2906
        %v2945 = vunpack.c.h.b16 %v2906
        %v2946 = vunpack.c.l.b16 %v2907
        %v2947 = vunpack.c.h.b16 %v2907
        %v2948 = vunpack.c.l.b16 %v2908
        %v2949 = vunpack.c.h.b16 %v2908
        %v2950 = vunpack.c.l.b16 %v2909
        %v2951 = vunpack.c.h.b16 %v2909
        %v2952 = vunpack.c.l.b16 %v2910
        %v2953 = vunpack.c.h.b16 %v2910
        %v2954 = vunpack.c.l.b16 %v2911
        %v2955 = vunpack.c.h.b16 %v2911
        %v2956 = vunpack.c.l.b16 %v2912
        %v2957 = vunpack.c.h.b16 %v2912
        %v2958 = vunpack.c.l.b16 %v2913
        %v2959 = vunpack.c.h.b16 %v2913
        %v2960 = vunpack.c.l.b16 %v2914
        %v2961 = vunpack.c.h.b16 %v2914
        %v2962 = vunpack.c.l.b16 %v2915
        %v2963 = vunpack.c.h.b16 %v2915
        %v2964 = vpack.c.b16 %v2934, %v2932
        %v2965 = vpack.c.b16 %v2935, %v2933
        %v2966 = vpack.c.b16 %v2938, %v2936
        %v2967 = vpack.c.b16 %v2939, %v2937
        %v2968 = vpack.c.b16 %v2942, %v2940
        %v2969 = vpack.c.b16 %v2943, %v2941
        %v2970 = vpack.c.b16 %v2946, %v2944
        %v2971 = vpack.c.b16 %v2947, %v2945
        %v2972 = vpack.c.b16 %v2950, %v2948
        %v2973 = vpack.c.b16 %v2951, %v2949
        %v2974 = vpack.c.b16 %v2954, %v2952
        %v2975 = vpack.c.b16 %v2955, %v2953
        %v2976 = vpack.c.b16 %v2958, %v2956
        %v2977 = vpack.c.b16 %v2959, %v2957
        %v2978 = vpack.c.b16 %v2962, %v2960
        %v2979 = vpack.c.b16 %v2963, %v2961
        %2996 = vmatprep.subr.bf16.mxu0 %v2965
        %2997 = vmatpush1.bf16.msra.mxu0 %v2964
        %2998 = vmatprep.subr.bf16.mxu0 %v2967
        %2999 = vmatpush1.bf16.msra.mxu0 %v2966
        %3000 = vmatprep.subr.bf16.mxu0 %v2969
        %3001 = vmatpush1.bf16.msra.mxu0 %v2968
        %3002 = vmatprep.subr.bf16.mxu0 %v2971
        %3003 = vmatpush1.bf16.msra.mxu0 %v2970
        %3004 = vmatprep.subr.bf16.mxu0 %v2973
        %3005 = vmatpush1.bf16.msra.mxu0 %v2972
        %3006 = vmatprep.subr.bf16.mxu0 %v2975
        %3007 = vmatpush1.bf16.msra.mxu0 %v2974
        %3008 = vmatprep.subr.bf16.mxu0 %v2977
        %3009 = vmatpush1.bf16.msra.mxu0 %v2976
        %3010 = vmatprep.subr.bf16.mxu0 %v2979
        %3011 = vmatpush1.bf16.msra.mxu0 %v2978
        %3012 = vmatprep.subr.bf16.mxu0 0
        %3013 = vmatpush1.bf16.msra.mxu0 0
        %3014 = vmatprep.subr.bf16.mxu0 0
        %3015 = vmatpush1.bf16.msra.mxu0 0
        %3016 = vmatprep.subr.bf16.mxu0 0
        %3017 = vmatpush1.bf16.msra.mxu0 0
        %3018 = vmatprep.subr.bf16.mxu0 0
        %3019 = vmatpush1.bf16.msra.mxu0 0
        %3020 = vmatprep.subr.bf16.mxu0 0
        %3021 = vmatpush1.bf16.msra.mxu0 0
        %3022 = vmatprep.subr.bf16.mxu0 0
        %3023 = vmatpush1.bf16.msra.mxu0 0
        %3024 = vmatprep.subr.bf16.mxu0 0
        %3025 = vmatpush1.bf16.msra.mxu0 0
        %3026 = vmatprep.subr.bf16.mxu0 0
        %3027 = vmatpush1.bf16.msra.mxu0 0
        %3028 = vmatprep.mubr.bf16.mxu0 0
        %3029 = vmatmul.mubr.bf16.gmra.mrb[0].mxu0 %v2891
        %v3030 = vpop.f32.mrb[0].mxu0
        %v3031 = vadd.f32 0.0, %v3030
        %v3032 = vpop.f32.mrb[0].mxu0
        %v3033 = vadd.f32 0.0, %v3032
        %v3034 = vpop.f32.mrb[0].mxu0
        %v3035 = vadd.f32 0.0, %v3034
        %v3036 = vpop.f32.mrb[0].mxu0
        %v3037 = vadd.f32 0.0, %v3036
        %3038 = vmatprep.mubr.bf16.mxu0 0
        %3039 = vmatmul.mubr.bf16.gmra.mrb[0].mxu0 %v2892
        %v3040 = vpop.f32.mrb[0].mxu0
        %v3041 = vadd.f32 0.0, %v3040
        %v3042 = vpop.f32.mrb[0].mxu0
        %v3043 = vadd.f32 0.0, %v3042
        %v3044 = vpop.f32.mrb[0].mxu0
        %v3045 = vadd.f32 0.0, %v3044
        %v3046 = vpop.f32.mrb[0].mxu0
        %v3047 = vadd.f32 0.0, %v3046
        %3048 = vmatprep.mubr.bf16.mxu0 0
        %3049 = vmatmul.mubr.bf16.gmra.mrb[0].mxu0 %v2893
        %v3050 = vpop.f32.mrb[0].mxu0
        %v3051 = vadd.f32 0.0, %v3050
        %v3052 = vpop.f32.mrb[0].mxu0
        %v3053 = vadd.f32 0.0, %v3052
        %v3054 = vpop.f32.mrb[0].mxu0
        %v3055 = vadd.f32 0.0, %v3054
        %v3056 = vpop.f32.mrb[0].mxu0
        %v3057 = vadd.f32 0.0, %v3056
        %3058 = vmatprep.mubr.bf16.mxu0 0
        %3059 = vmatmul.mubr.bf16.gmra.mrb[0].mxu0 %v2894
        %v3060 = vpop.f32.mrb[0].mxu0
        %v3061 = vadd.f32 0.0, %v3060
        %v3062 = vpop.f32.mrb[0].mxu0
        %v3063 = vadd.f32 0.0, %v3062
        %v3064 = vpop.f32.mrb[0].mxu0
        %v3065 = vadd.f32 0.0, %v3064
        %v3066 = vpop.f32.mrb[0].mxu0
        %v3067 = vadd.f32 0.0, %v3066
        %3068 = vmatprep.mubr.bf16.mxu0 0
        %3069 = vmatmul.mubr.bf16.gmra.mrb[0].mxu0 %v2895
        %v3070 = vpop.f32.mrb[0].mxu0
        %v3071 = vadd.f32 0.0, %v3070
        %v3072 = vpop.f32.mrb[0].mxu0
        %v3073 = vadd.f32 0.0, %v3072
        %v3074 = vpop.f32.mrb[0].mxu0
        %v3075 = vadd.f32 0.0, %v3074
        %v3076 = vpop.f32.mrb[0].mxu0
        %v3077 = vadd.f32 0.0, %v3076
        %3078 = vmatprep.mubr.bf16.mxu0 0
        %3079 = vmatmul.mubr.bf16.gmra.mrb[0].mxu0 %v2896
        %v3080 = vpop.f32.mrb[0].mxu0
        %v3081 = vadd.f32 0.0, %v3080
        %v3082 = vpop.f32.mrb[0].mxu0
        %v3083 = vadd.f32 0.0, %v3082
        %v3084 = vpop.f32.mrb[0].mxu0
        %v3085 = vadd.f32 0.0, %v3084
        %v3086 = vpop.f32.mrb[0].mxu0
        %v3087 = vadd.f32 0.0, %v3086
        %3088 = vmatprep.mubr.bf16.mxu0 0
        %3089 = vmatmul.mubr.bf16.gmra.mrb[0].mxu0 %v2897
        %v3090 = vpop.f32.mrb[0].mxu0
        %v3091 = vadd.f32 0.0, %v3090
        %v3092 = vpop.f32.mrb[0].mxu0
        %v3093 = vadd.f32 0.0, %v3092
        %v3094 = vpop.f32.mrb[0].mxu0
        %v3095 = vadd.f32 0.0, %v3094
        %v3096 = vpop.f32.mrb[0].mxu0
        %v3097 = vadd.f32 0.0, %v3096
        %3098 = vmatprep.mubr.bf16.mxu0 0
        %3099 = vmatmul.mubr.bf16.gmra.mrb[0].mxu0 %v2898
        %v3100 = vpop.f32.mrb[0].mxu0
        %v3101 = vadd.f32 0.0, %v3100
        %v3102 = vpop.f32.mrb[0].mxu0
        %v3103 = vadd.f32 0.0, %v3102
        %v3104 = vpop.f32.mrb[0].mxu0
        %v3105 = vadd.f32 0.0, %v3104
        %v3106 = vpop.f32.mrb[0].mxu0
        %v3107 = vadd.f32 0.0, %v3106
        %3108 = vdwg.mxu0
        %v3109 = vadd.f32 %v2797, %v3031
        %v3110 = vadd.f32 %v2799, %v3033
        %v3111 = vadd.f32 %v2801, %v3035
        %v3112 = vadd.f32 %v2803, %v3037
        %v3113 = vadd.f32 %v2807, %v3041
        %v3114 = vadd.f32 %v2809, %v3043
        %v3115 = vadd.f32 %v2811, %v3045
        %v3116 = vadd.f32 %v2813, %v3047
        %v3117 = vadd.f32 %v2817, %v3051
        %v3118 = vadd.f32 %v2819, %v3053
        %v3119 = vadd.f32 %v2821, %v3055
        %v3120 = vadd.f32 %v2823, %v3057
        %v3121 = vadd.f32 %v2827, %v3061
        %v3122 = vadd.f32 %v2829, %v3063
        %v3123 = vadd.f32 %v2831, %v3065
        %v3124 = vadd.f32 %v2833, %v3067
        %v3125 = vadd.f32 %v2837, %v3071
        %v3126 = vadd.f32 %v2839, %v3073
        %v3127 = vadd.f32 %v2841, %v3075
        %v3128 = vadd.f32 %v2843, %v3077
        %v3129 = vadd.f32 %v2847, %v3081
        %v3130 = vadd.f32 %v2849, %v3083
        %v3131 = vadd.f32 %v2851, %v3085
        %v3132 = vadd.f32 %v2853, %v3087
        %v3133 = vadd.f32 %v2857, %v3091
        %v3134 = vadd.f32 %v2859, %v3093
        %v3135 = vadd.f32 %v2861, %v3095
        %v3136 = vadd.f32 %v2863, %v3097
        %v3137 = vadd.f32 %v2867, %v3101
        %v3138 = vadd.f32 %v2869, %v3103
        %v3139 = vadd.f32 %v2871, %v3105
        %v3140 = vadd.f32 %v2873, %v3107
        %v3141 = vld [vmem:[%s9] sm:$0x3]
        %v3143 = vlaneseq
        %v3144 = vshrl.u32 %v3143, 7
        %v3145 = vsub.s32 0, %v3144
        %v3146 = vrot.slane %v3141, %v3145
        %v3147 = vlaneseq
        %v3148 = vshrl.u32 %v3147, 7
        %v3149 = vsub.s32 1, %v3148
        %v3150 = vrot.slane %v3141, %v3149
        %v3153 = vadd.f32 %v3109, %v3146
        %v3154 = vadd.f32 %v3110, %v3150
        %v3155 = vadd.f32 %v3111, %v3146
        %v3156 = vadd.f32 %v3112, %v3150
        %v3157 = vadd.f32 %v3113, %v3146
        %v3158 = vadd.f32 %v3114, %v3150
        %v3159 = vadd.f32 %v3115, %v3146
        %v3160 = vadd.f32 %v3116, %v3150
        %v3161 = vadd.f32 %v3117, %v3146
        %v3162 = vadd.f32 %v3118, %v3150
        %v3163 = vadd.f32 %v3119, %v3146
        %v3164 = vadd.f32 %v3120, %v3150
        %v3165 = vadd.f32 %v3121, %v3146
        %v3166 = vadd.f32 %v3122, %v3150
        %v3167 = vadd.f32 %v3123, %v3146
        %v3168 = vadd.f32 %v3124, %v3150
        %v3169 = vadd.f32 %v3125, %v3146
        %v3170 = vadd.f32 %v3126, %v3150
        %v3171 = vadd.f32 %v3127, %v3146
        %v3172 = vadd.f32 %v3128, %v3150
        %v3173 = vadd.f32 %v3129, %v3146
        %v3174 = vadd.f32 %v3130, %v3150
        %v3175 = vadd.f32 %v3131, %v3146
        %v3176 = vadd.f32 %v3132, %v3150
        %v3177 = vadd.f32 %v3133, %v3146
        %v3178 = vadd.f32 %v3134, %v3150
        %v3179 = vadd.f32 %v3135, %v3146
        %v3180 = vadd.f32 %v3136, %v3150
        %v3181 = vadd.f32 %v3137, %v3146
        %v3182 = vadd.f32 %v3138, %v3150
        %v3183 = vadd.f32 %v3139, %v3146
        %v3184 = vadd.f32 %v3140, %v3150
        %v3185 = vpack.c.bf16 %v3155, %v3153
        %v3186 = vpack.c.bf16 %v3156, %v3154
        %v3187 = vpack.c.bf16 %v3159, %v3157
        %v3188 = vpack.c.bf16 %v3160, %v3158
        %v3189 = vpack.c.bf16 %v3163, %v3161
        %v3190 = vpack.c.bf16 %v3164, %v3162
        %v3191 = vpack.c.bf16 %v3167, %v3165
        %v3192 = vpack.c.bf16 %v3168, %v3166
        %v3193 = vpack.c.bf16 %v3171, %v3169
        %v3194 = vpack.c.bf16 %v3172, %v3170
        %v3195 = vpack.c.bf16 %v3175, %v3173
        %v3196 = vpack.c.bf16 %v3176, %v3174
        %v3197 = vpack.c.bf16 %v3179, %v3177
        %v3198 = vpack.c.bf16 %v3180, %v3178
        %v3199 = vpack.c.bf16 %v3183, %v3181
        %v3200 = vpack.c.bf16 %v3184, %v3182
        %v3201 = vld [vmem:[%s10] sm:$0xf]
        %v3202 = vld [vmem:[%s11] sm:$0xff]
        %3204 = vset.pattern.permute.xlu0 0
        %3205 = vperm.xlu0 %3204, %v3202
        %v3206 = vpop.permute.xlu0 %3205
        %vm3208 = vcmask 195584
        %v3210 = vsel %vm3208, %v3201, 0
        %vm3212 = vcmask 1043456
        %v3214 = vsel %vm3212, %v3187, 0
        %v3217 = vsel %vm3212, %v3188, 0
        %3219 = vmatprep.subr.bf16.mxu0 %v3186
        %3220 = vmatpush1.bf16.msra.mxu0 %v3185
        %3221 = vmatprep.subr.bf16.mxu0 %v3217
        %3222 = vmatpush1.bf16.msra.mxu0 %v3214
        %3223 = vmatprep.subr.bf16.mxu0 0
        %3224 = vmatpush1.bf16.msra.mxu0 0
        %3225 = vmatprep.subr.bf16.mxu0 0
        %3226 = vmatpush1.bf16.msra.mxu0 0
        %3227 = vmatprep.subr.bf16.mxu0 0
        %3228 = vmatpush1.bf16.msra.mxu0 0
        %3229 = vmatprep.subr.bf16.mxu0 0
        %3230 = vmatpush1.bf16.msra.mxu0 0
        %3231 = vmatprep.subr.bf16.mxu0 0
        %3232 = vmatpush1.bf16.msra.mxu0 0
        %3233 = vmatprep.subr.bf16.mxu0 0
        %3234 = vmatpush1.bf16.msra.mxu0 0
        %3235 = vmatprep.subr.bf16.mxu0 0
        %3236 = vmatpush1.bf16.msra.mxu0 0
        %3237 = vmatprep.subr.bf16.mxu0 0
        %3238 = vmatpush1.bf16.msra.mxu0 0
        %3239 = vmatprep.subr.bf16.mxu0 0
        %3240 = vmatpush1.bf16.msra.mxu0 0
        %3241 = vmatprep.subr.bf16.mxu0 0
        %3242 = vmatpush1.bf16.msra.mxu0 0
        %3243 = vmatprep.subr.bf16.mxu0 0
        %3244 = vmatpush1.bf16.msra.mxu0 0
        %3245 = vmatprep.subr.bf16.mxu0 0
        %3246 = vmatpush1.bf16.msra.mxu0 0
        %3247 = vmatprep.subr.bf16.mxu0 0
        %3248 = vmatpush1.bf16.msra.mxu0 0
        %3249 = vmatprep.subr.bf16.mxu0 0
        %3250 = vmatpush1.bf16.msra.mxu0 0
        %3251 = vmatprep.mubr.bf16.mxu0 0
        %3252 = vmatmul.mubr.bf16.gmra.mrb[0].mxu0 %v3210
        %v3253 = vpop.f32.mrb[0].mxu0
        %v3254 = vadd.f32 %v3206, %v3253
        %v3255 = vpop.f32.mrb[0].mxu0
        %v3256 = vadd.f32 %v3206, %v3255
        %v3257 = vpop.f32.mrb[0].mxu0
        %v3258 = vpop.f32.mrb[0].mxu0
        %3259 = vdwg.mxu0
        %vm3260 = vcmp.gt.f32.partialorder %v3254, 0.0
        %vm3261 = vcmp.gt.f32.partialorder %v3256, 0.0
        %v3262 = vmul.f32 %v3254, 0.01
        %v3263 = vmul.f32 %v3256, 0.01
        %v3264 = vsel %vm3260, %v3254, %v3262
        %v3265 = vsel %vm3261, %v3256, %v3263
        %3266 = vst [vmem:[%s407] sm:$0xff] %v3264
        %3267 = vst [vmem:[%s407 + $0x8] sm:$0xff] %v3265
        %v3268 = vld [vmem:[%s10] sm:$0xf]
        %v3269 = vld [vmem:[%s11] sm:$0xff]
        %3271 = vset.pattern.permute.xlu0 0
        %3272 = vperm.xlu0 %3271, %v3269
        %v3273 = vpop.permute.xlu0 %3272
        %v3276 = vsel %vm3208, %v3268, 0
        %v3279 = vsel %vm3212, %v3191, 0
        %v3282 = vsel %vm3212, %v3192, 0
        %3284 = vmatprep.subr.bf16.mxu0 %v3190
        %3285 = vmatpush1.bf16.msra.mxu0 %v3189
        %3286 = vmatprep.subr.bf16.mxu0 %v3282
        %3287 = vmatpush1.bf16.msra.mxu0 %v3279
        %3288 = vmatprep.subr.bf16.mxu0 0
        %3289 = vmatpush1.bf16.msra.mxu0 0
        %3290 = vmatprep.subr.bf16.mxu0 0
        %3291 = vmatpush1.bf16.msra.mxu0 0
        %3292 = vmatprep.subr.bf16.mxu0 0
        %3293 = vmatpush1.bf16.msra.mxu0 0
        %3294 = vmatprep.subr.bf16.mxu0 0
        %3295 = vmatpush1.bf16.msra.mxu0 0
        %3296 = vmatprep.subr.bf16.mxu0 0
        %3297 = vmatpush1.bf16.msra.mxu0 0
        %3298 = vmatprep.subr.bf16.mxu0 0
        %3299 = vmatpush1.bf16.msra.mxu0 0
        %3300 = vmatprep.subr.bf16.mxu0 0
        %3301 = vmatpush1.bf16.msra.mxu0 0
        %3302 = vmatprep.subr.bf16.mxu0 0
        %3303 = vmatpush1.bf16.msra.mxu0 0
        %3304 = vmatprep.subr.bf16.mxu0 0
        %3305 = vmatpush1.bf16.msra.mxu0 0
        %3306 = vmatprep.subr.bf16.mxu0 0
        %3307 = vmatpush1.bf16.msra.mxu0 0
        %3308 = vmatprep.subr.bf16.mxu0 0
        %3309 = vmatpush1.bf16.msra.mxu0 0
        %3310 = vmatprep.subr.bf16.mxu0 0
        %3311 = vmatpush1.bf16.msra.mxu0 0
        %3312 = vmatprep.subr.bf16.mxu0 0
        %3313 = vmatpush1.bf16.msra.mxu0 0
        %3314 = vmatprep.subr.bf16.mxu0 0
        %3315 = vmatpush1.bf16.msra.mxu0 0
        %3316 = vmatprep.mubr.bf16.mxu0 0
        %3317 = vmatmul.mubr.bf16.gmra.mrb[0].mxu0 %v3276
        %v3318 = vpop.f32.mrb[0].mxu0
        %v3319 = vadd.f32 %v3273, %v3318
        %v3320 = vpop.f32.mrb[0].mxu0
        %v3321 = vadd.f32 %v3273, %v3320
        %v3322 = vpop.f32.mrb[0].mxu0
        %v3323 = vpop.f32.mrb[0].mxu0
        %3324 = vdwg.mxu0
        %vm3325 = vcmp.gt.f32.partialorder %v3319, 0.0
        %vm3326 = vcmp.gt.f32.partialorder %v3321, 0.0
        %v3327 = vmul.f32 %v3319, 0.01
        %v3328 = vmul.f32 %v3321, 0.01
        %v3329 = vsel %vm3325, %v3319, %v3327
        %v3330 = vsel %vm3326, %v3321, %v3328
        %s3331 = scalar_lea.vmem %s407, 16 [#allocation5]
        %3332 = vst [vmem:[%s3331] sm:$0xff] %v3329
        %3333 = vst [vmem:[%s3331 + $0x8] sm:$0xff] %v3330
        %v3334 = vld [vmem:[%s10] sm:$0xf]
        %v3335 = vld [vmem:[%s11] sm:$0xff]
        %3337 = vset.pattern.permute.xlu0 0
        %3338 = vperm.xlu0 %3337, %v3335
        %v3339 = vpop.permute.xlu0 %3338
        %v3342 = vsel %vm3208, %v3334, 0
        %v3345 = vsel %vm3212, %v3195, 0
        %v3348 = vsel %vm3212, %v3196, 0
        %3350 = vmatprep.subr.bf16.mxu0 %v3194
        %3351 = vmatpush1.bf16.msra.mxu0 %v3193
        %3352 = vmatprep.subr.bf16.mxu0 %v3348
        %3353 = vmatpush1.bf16.msra.mxu0 %v3345
        %3354 = vmatprep.subr.bf16.mxu0 0
        %3355 = vmatpush1.bf16.msra.mxu0 0
        %3356 = vmatprep.subr.bf16.mxu0 0
        %3357 = vmatpush1.bf16.msra.mxu0 0
        %3358 = vmatprep.subr.bf16.mxu0 0
        %3359 = vmatpush1.bf16.msra.mxu0 0
        %3360 = vmatprep.subr.bf16.mxu0 0
        %3361 = vmatpush1.bf16.msra.mxu0 0
        %3362 = vmatprep.subr.bf16.mxu0 0
        %3363 = vmatpush1.bf16.msra.mxu0 0
        %3364 = vmatprep.subr.bf16.mxu0 0
        %3365 = vmatpush1.bf16.msra.mxu0 0
        %3366 = vmatprep.subr.bf16.mxu0 0
        %3367 = vmatpush1.bf16.msra.mxu0 0
        %3368 = vmatprep.subr.bf16.mxu0 0
        %3369 = vmatpush1.bf16.msra.mxu0 0
        %3370 = vmatprep.subr.bf16.mxu0 0
        %3371 = vmatpush1.bf16.msra.mxu0 0
        %3372 = vmatprep.subr.bf16.mxu0 0
        %3373 = vmatpush1.bf16.msra.mxu0 0
        %3374 = vmatprep.subr.bf16.mxu0 0
        %3375 = vmatpush1.bf16.msra.mxu0 0
        %3376 = vmatprep.subr.bf16.mxu0 0
        %3377 = vmatpush1.bf16.msra.mxu0 0
        %3378 = vmatprep.subr.bf16.mxu0 0
        %3379 = vmatpush1.bf16.msra.mxu0 0
        %3380 = vmatprep.subr.bf16.mxu0 0
        %3381 = vmatpush1.bf16.msra.mxu0 0
        %3382 = vmatprep.mubr.bf16.mxu0 0
        %3383 = vmatmul.mubr.bf16.gmra.mrb[0].mxu0 %v3342
        %v3384 = vpop.f32.mrb[0].mxu0
        %v3385 = vadd.f32 %v3339, %v3384
        %v3386 = vpop.f32.mrb[0].mxu0
        %v3387 = vadd.f32 %v3339, %v3386
        %v3388 = vpop.f32.mrb[0].mxu0
        %v3389 = vpop.f32.mrb[0].mxu0
        %3390 = vdwg.mxu0
        %vm3391 = vcmp.gt.f32.partialorder %v3385, 0.0
        %vm3392 = vcmp.gt.f32.partialorder %v3387, 0.0
        %v3393 = vmul.f32 %v3385, 0.01
        %v3394 = vmul.f32 %v3387, 0.01
        %v3395 = vsel %vm3391, %v3385, %v3393
        %v3396 = vsel %vm3392, %v3387, %v3394
        %s3397 = scalar_lea.vmem %s407, 32 [#allocation5]
        %3398 = vst [vmem:[%s3397] sm:$0xff] %v3395
        %3399 = vst [vmem:[%s3397 + $0x8] sm:$0xff] %v3396
        %v3400 = vld [vmem:[%s10] sm:$0xf]
        %v3401 = vld [vmem:[%s11] sm:$0xff]
        %3403 = vset.pattern.permute.xlu0 0
        %3404 = vperm.xlu0 %3403, %v3401
        %v3405 = vpop.permute.xlu0 %3404
        %v3408 = vsel %vm3208, %v3400, 0
        %v3411 = vsel %vm3212, %v3199, 0
        %v3414 = vsel %vm3212, %v3200, 0
        %3416 = vmatprep.subr.bf16.mxu0 %v3198
        %3417 = vmatpush1.bf16.msra.mxu0 %v3197
        %3418 = vmatprep.subr.bf16.mxu0 %v3414
        %3419 = vmatpush1.bf16.msra.mxu0 %v3411
        %3420 = vmatprep.subr.bf16.mxu0 0
        %3421 = vmatpush1.bf16.msra.mxu0 0
        %3422 = vmatprep.subr.bf16.mxu0 0
        %3423 = vmatpush1.bf16.msra.mxu0 0
        %3424 = vmatprep.subr.bf16.mxu0 0
        %3425 = vmatpush1.bf16.msra.mxu0 0
        %3426 = vmatprep.subr.bf16.mxu0 0
        %3427 = vmatpush1.bf16.msra.mxu0 0
        %3428 = vmatprep.subr.bf16.mxu0 0
        %3429 = vmatpush1.bf16.msra.mxu0 0
        %3430 = vmatprep.subr.bf16.mxu0 0
        %3431 = vmatpush1.bf16.msra.mxu0 0
        %3432 = vmatprep.subr.bf16.mxu0 0
        %3433 = vmatpush1.bf16.msra.mxu0 0
        %3434 = vmatprep.subr.bf16.mxu0 0
        %3435 = vmatpush1.bf16.msra.mxu0 0
        %3436 = vmatprep.subr.bf16.mxu0 0
        %3437 = vmatpush1.bf16.msra.mxu0 0
        %3438 = vmatprep.subr.bf16.mxu0 0
        %3439 = vmatpush1.bf16.msra.mxu0 0
        %3440 = vmatprep.subr.bf16.mxu0 0
        %3441 = vmatpush1.bf16.msra.mxu0 0
        %3442 = vmatprep.subr.bf16.mxu0 0
        %3443 = vmatpush1.bf16.msra.mxu0 0
        %3444 = vmatprep.subr.bf16.mxu0 0
        %3445 = vmatpush1.bf16.msra.mxu0 0
        %3446 = vmatprep.subr.bf16.mxu0 0
        %3447 = vmatpush1.bf16.msra.mxu0 0
        %3448 = vmatprep.mubr.bf16.mxu0 0
        %3449 = vmatmul.mubr.bf16.gmra.mrb[0].mxu0 %v3408
        %v3450 = vpop.f32.mrb[0].mxu0
        %v3451 = vadd.f32 %v3405, %v3450
        %v3452 = vpop.f32.mrb[0].mxu0
        %v3453 = vadd.f32 %v3405, %v3452
        %v3454 = vpop.f32.mrb[0].mxu0
        %v3455 = vpop.f32.mrb[0].mxu0
        %3456 = vdwg.mxu0
        %vm3457 = vcmp.gt.f32.partialorder %v3451, 0.0
        %vm3458 = vcmp.gt.f32.partialorder %v3453, 0.0
        %v3459 = vmul.f32 %v3451, 0.01
        %v3460 = vmul.f32 %v3453, 0.01
        %v3461 = vsel %vm3457, %v3451, %v3459
        %v3462 = vsel %vm3458, %v3453, %v3460
        %s3463 = scalar_lea.vmem %s407, 48 [#allocation5]
        %3464 = vst [vmem:[%s3463] sm:$0xff] %v3461
        %3465 = vst [vmem:[%s3463 + $0x8] sm:$0xff] %v3462
        %s3466 = sand.u32 %s291, 1
        %s3467 = scalar_lea.sflag [#allocation6], %s3466
        %s3468 = sand.u32 %s291, 1
        %s3469 = smul.addr %s3468, 64
        %s3470 = scalar_lea.vmem [#allocation5], %s3469
        // Predicated region
        $region69: #{decoder_up_forward.1} parent=67 // pred_check
          %p3471 = pneg %p301
        $region70: #{decoder_up_forward.1} parent=67 // pred_check_branch
          %3473 = sbr.rel (%p3471) target = $region72
        $region71: #{decoder_up_forward.1} parent=67 // pred_region
          %s3474 = smul.u32 4, %s26
          %s3476 = ssub.s32 1024, 1024
          %3477 = vsyncadd %s3467, %s3476
          %s3478 = smul.addr %s3474, 2
          %s3479 = smul.addr %s3478, 128
          %s3480 = scalar_lea.hbm %s12, %s3479
          %s3481 = sshll.u32 %s3470, 4
          %s3482 = int_to_ptr.vmem [resolvable:$true] %s3481
          %3487 = dma.vmem_to_hbm [thread:$0]  %s3482, 1024, %s3480, %s3467, 256, 256, 16
        $region72: #{decoder_up_forward.1} parent=67 // pred_fallthru
          _
      $region68: #{decoder_up_forward.1} parent=5 // pred_fallthru
        _
      %p3488 = scmp.le.s32.totalorder 2, %s21
      // Predicated region
      $region73: #{decoder_up_forward.1} parent=5 // pred_check
        %p3489 = pneg %p3488
      $region74: #{decoder_up_forward.1} parent=5 // pred_check_branch
        %3491 = sbr.rel (%p3489) target = $region76
      $region75: #{decoder_up_forward.1} parent=5 // pred_region
        %s3492 = ssub.s32 %s21, 2
        // Predicated region
        $region77: #{decoder_up_forward.1} parent=75 // pred_check
          %p3493 = pneg %p307
        $region78: #{decoder_up_forward.1} parent=75 // pred_check_branch
          %3495 = sbr.rel (%p3493) target = $region80
        $region79: #{decoder_up_forward.1} parent=75 // pred_region
          %s3496 = sand.u32 %s292, 1
          %s3497 = scalar_lea.sflag [#allocation6], %s3496
          %s3498 = sand.u32 %s292, 1
          %s3499 = smul.addr %s3498, 64
          %s3500 = scalar_lea.vmem [#allocation5], %s3499
          %3501 = dma.done %s3497, 1024
        $region80: #{decoder_up_forward.1} parent=75 // pred_fallthru
          _
      $region76: #{decoder_up_forward.1} parent=5 // pred_fallthru
        _
    $region6: #{decoder_up_forward.1} parent=1 // loop_footer
      %s25 = sadd.s32 1, %s21
    $region7: #{decoder_up_forward.1} parent=1 // loop_footer_branch
      %20 = sbr.rel target = $region3
    $region8: #{decoder_up_forward.1} parent=1 // loop_exit
      _
    %3502 = vsyncpa [#allocation6], 1
    %s3503 = scalar_lea.sflag [#allocation6], 1
    %3504 = vsyncpa %s3503, 1

</llo_original>
